<compile_context>
chip_gen: v7x
topology: tpu7x:2x2x1
jax: 0.10.0
libtpu: 0.0.40
codegen_flags: <defaults>
</compile_context>

<pallas_src>
import math

import jax
import jax.numpy as jnp
import numpy as np
from jax.experimental import pallas as pl
from jax.experimental.pallas import tpu as pltpu

VOCAB = 64
D_MODEL = 32
HEADS = 4
D_K = D_MODEL // HEADS
D_FF = 2048              # FeedForward default d_ff in the PyTorch module
FF_CHUNK = 512           # FFN processed in 4 chunks to bound hidden live range
N_LAYERS = 2
EPS = 1e-6
MAX_LEN = 64
NEG_INF = -1e9


def _norm(x, alpha, bias):
    """PyTorch Norm: alpha*(x-mean)/(std+eps)+bias (torch.std is unbiased, ddof=1)."""
    mu = jnp.mean(x, axis=-1, keepdims=True)
    xc = x - mu
    var = jnp.sum(xc * xc, axis=-1, keepdims=True) * (1.0 / (D_MODEL - 1))
    return alpha * xc / (jnp.sqrt(var) + EPS) + bias


def decoder_kernel(ids_ref,                        # SMEM (T,) int32   [scalar prefetch]
                   embed_ref, pe_ref, mask_ref,    # resident VMEM blocks (const index)
                   wqkv_ref, bqkv_ref, wo_ref, bo_ref,
                   n1a_ref, n1b_ref, n2a_ref, n2b_ref,
                   w1_ref, b1_ref, w2_ref, b2_ref,
                   fna_ref, fnb_ref,
                   out_ref,                        # (T, D_MODEL)
                   x_scr, neg_scr):                # VMEM scratch: act carry / mask bias
    B, S, _ = mask_ref.shape
    T = B * S
    l = pl.program_id(0)

    # ---- prologue (first grid step only): embedding + PE, additive mask bias ----
    @pl.when(l == 0)
    def _prologue():
        neg3 = jnp.where(mask_ref[...] == 0.0, NEG_INF, 0.0)              # (B,S,S)
        neg_scr[...] = jnp.broadcast_to(
            neg3[None], (HEADS, B, S, S)).reshape(HEADS * B, S, S)
        # embed table pre-scaled by sqrt(d_model) at pack time -> x = embed[tok] + pe[s]
        for t in range(T):                                                # T=16 static unroll
            tok = ids_ref[t]
            x_scr[pl.ds(t, 1), :] = (embed_ref[pl.ds(tok, 1), :]
                                     + pe_ref[pl.ds(t % S, 1), :])

    x = x_scr[...]                                                        # (T, D)
    neg = neg_scr[...]                                                    # (H*B, S, S)

    # ------------------ self-attention sub-layer ------------------
    x2 = _norm(x, n1a_ref[...], n1b_ref[...])
    # Fused QKV: one (T,32)@(32,96) matmul; 1/sqrt(d_k) already folded into Wq/bq.
    qkv = jnp.dot(x2, wqkv_ref[...], preferred_element_type=jnp.float32) + bqkv_ref[...]

    def split_heads(m):
        # (T, D_MODEL) -> (HEADS*B, S, D_K), head-major batch; only lane slices +
        # layout-free reshapes + a major-axis concat (no sublane transposes).
        parts = [m[:, h * D_K:(h + 1) * D_K].reshape(1, B, S, D_K) for h in range(HEADS)]
        return jnp.concatenate(parts, axis=0).reshape(HEADS * B, S, D_K)

    qh = split_heads(qkv[:, 0:D_MODEL])
    kh = split_heads(qkv[:, D_MODEL:2 * D_MODEL])
    vh = split_heads(qkv[:, 2 * D_MODEL:3 * D_MODEL])

    s = jnp.einsum("nqd,nkd->nqk", qh, kh, preferred_element_type=jnp.float32) + neg
    m = jnp.max(s, axis=-1, keepdims=True)
    e = jnp.exp(s - m)
    p = e * pl.reciprocal(jnp.sum(e, axis=-1, keepdims=True), approx=False)
    o = jnp.einsum("nqk,nkd->nqd", p, vh, preferred_element_type=jnp.float32)

    # concat heads along lanes, then a single (T,32)@(32,32) output projection.
    o4 = o.reshape(HEADS, B, S, D_K)
    concat = jnp.concatenate([o4[h].reshape(T, D_K) for h in range(HEADS)], axis=-1)
    x = x + jnp.dot(concat, wo_ref[...], preferred_element_type=jnp.float32) + bo_ref[...]

    # ------------------ feed-forward sub-layer ------------------
    x2 = _norm(x, n2a_ref[...], n2b_ref[...])
    ffo = jnp.zeros((T, D_MODEL), jnp.float32)
    for c in range(D_FF // FF_CHUNK):                 # 4 chunks of 512 (aligned lane slices)
        lo = c * FF_CHUNK
        hid = jnp.maximum(
            jnp.dot(x2, w1_ref[:, lo:lo + FF_CHUNK], preferred_element_type=jnp.float32)
            + b1_ref[:, lo:lo + FF_CHUNK], 0.0)
        ffo = ffo + jnp.dot(hid, w2_ref[lo:lo + FF_CHUNK, :],
                            preferred_element_type=jnp.float32)
    x = x + ffo + b2_ref[...]

    x_scr[...] = x                                    # carry activation to next layer step

    # ---- epilogue (last grid step): final Norm + store ----
    @pl.when(l == pl.num_programs(0) - 1)
    def _epilogue():
        out_ref[...] = _norm(x, fna_ref[...], fnb_ref[...])


def decoder_forward(token_ids, trg_mask, kp):
    """Wrapper: single pallas_call with a 2-step layer grid (double-buffered weights)."""
    B, S = token_ids.shape
    T = B * S
    ids = token_ids.reshape(T).astype(jnp.int32)

    c2 = lambda l, ids_ref: (0, 0)                    # constant (resident) blocks
    c3 = lambda l, ids_ref: (0, 0, 0)
    lyr = lambda l, ids_ref: (l, 0, 0)                # layer-indexed blocks

    grid_spec = pltpu.PrefetchScalarGridSpec(
        num_scalar_prefetch=1,
        grid=(N_LAYERS,),
        in_specs=[
            pl.BlockSpec((VOCAB, D_MODEL), c2),               # embed (pre-scaled)
            pl.BlockSpec((MAX_LEN, D_MODEL), c2),             # pe table
            pl.BlockSpec((B, S, S), c3),                      # mask
            pl.BlockSpec((None, D_MODEL, 3 * D_MODEL), lyr),  # Wqkv
            pl.BlockSpec((None, 1, 3 * D_MODEL), lyr),        # bqkv
            pl.BlockSpec((None, D_MODEL, D_MODEL), lyr),      # Wo
            pl.BlockSpec((None, 1, D_MODEL), lyr),            # bo
            pl.BlockSpec((None, 1, D_MODEL), lyr),            # norm1 alpha
            pl.BlockSpec((None, 1, D_MODEL), lyr),            # norm1 bias
            pl.BlockSpec((None, 1, D_MODEL), lyr),            # norm2 alpha
            pl.BlockSpec((None, 1, D_MODEL), lyr),            # norm2 bias
            pl.BlockSpec((None, D_MODEL, D_FF), lyr),         # W1
            pl.BlockSpec((None, 1, D_FF), lyr),               # b1
            pl.BlockSpec((None, D_FF, D_MODEL), lyr),         # W2
            pl.BlockSpec((None, 1, D_MODEL), lyr),            # b2
            pl.BlockSpec((1, D_MODEL), c2),                   # final norm alpha
            pl.BlockSpec((1, D_MODEL), c2),                   # final norm bias
        ],
        out_specs=pl.BlockSpec((T, D_MODEL), c2),
        scratch_shapes=[pltpu.VMEM((T, D_MODEL), jnp.float32),
                        pltpu.VMEM((HEADS * B, S, S), jnp.float32)],
    )
    out = pl.pallas_call(
        decoder_kernel,
        out_shape=jax.ShapeDtypeStruct((T, D_MODEL), jnp.float32),
        grid_spec=grid_spec,
        compiler_params=pltpu.CompilerParams(dimension_semantics=("arbitrary",)),
    )(ids, kp["embed"], kp["pe"], trg_mask.astype(jnp.float32),
      kp["wqkv"], kp["bqkv"], kp["wo"], kp["bo"],
      kp["n1a"], kp["n1b"], kp["n2a"], kp["n2b"],
      kp["w1"], kp["b1"], kp["w2"], kp["b2"],
      kp["fna"], kp["fnb"])
    return out.reshape(B, S, D_MODEL)


def reference_decoder(token_ids, trg_mask, rp):
    """Pure-JAX mirror of the PyTorch Decoder forward (eval mode)."""
    B, S = token_ids.shape
    x = rp["embed"][token_ids]                                  # (B, S, D)
    x = x * math.sqrt(D_MODEL) + rp["pe"][:S][None]
    mask4 = trg_mask[:, None]                                   # (B, 1, S, S)

    def lin(t, w, b):
        return t @ w + b

    for lp in rp["layers"]:
        x2 = _norm(x, lp["n1a"], lp["n1b"])
        q = lin(x2, lp["wq"], lp["bq"]).reshape(B, S, HEADS, D_K).transpose(0, 2, 1, 3)
        k = lin(x2, lp["wk"], lp["bk"]).reshape(B, S, HEADS, D_K).transpose(0, 2, 1, 3)
        v = lin(x2, lp["wv"], lp["bv"]).reshape(B, S, HEADS, D_K).transpose(0, 2, 1, 3)
        s = jnp.einsum("bhqd,bhkd->bhqk", q, k) / math.sqrt(D_K)
        s = jnp.where(mask4 == 0, NEG_INF, s)
        p = jax.nn.softmax(s, axis=-1)
        o = jnp.einsum("bhqk,bhkd->bhqd", p, v)
        concat = o.transpose(0, 2, 1, 3).reshape(B, S, D_MODEL)
        x = x + lin(concat, lp["wo"], lp["bo"])

        x2 = _norm(x, lp["n2a"], lp["n2b"])
        x = x + lin(jax.nn.relu(lin(x2, lp["w1"], lp["b1"])), lp["w2"], lp["b2"])
    return _norm(x, rp["fna"], rp["fnb"])


def build_pe_table(max_len, d_model):
    """Exact replica of the PyTorch PositionalEncoder buffer construction."""
    pe = np.zeros((max_len, d_model), dtype=np.float32)
    for pos in range(max_len):
        for i in range(0, d_model, 2):
            pe[pos, i] = math.sin(pos / 10000 ** (2 * i / d_model))
            pe[pos, i + 1] = math.cos(pos / 10000 ** (2 * (i + 1) / d_model))
    return jnp.asarray(pe)


if __name__ == "__main__":
    B, S = 2, 8
    root = jax.random.PRNGKey(0)
    k_embed, k_ids, k_layers, k_final = jax.random.split(root, 4)

    def init_linear(key, fan_in, fan_out):
        kw, kb = jax.random.split(key)
        bound = 1.0 / math.sqrt(fan_in)
        w = jax.random.uniform(kw, (fan_in, fan_out), jnp.float32, -bound, bound)
        b = jax.random.uniform(kb, (fan_out,), jnp.float32, -bound, bound)
        return w, b

    def init_norm(key):
        ka, kb = jax.random.split(key)
        alpha = 1.0 + 0.1 * jax.random.uniform(ka, (D_MODEL,), jnp.float32, -1.0, 1.0)
        bias = 0.1 * jax.random.uniform(kb, (D_MODEL,), jnp.float32, -1.0, 1.0)
        return alpha, bias

    embed = jax.random.normal(k_embed, (VOCAB, D_MODEL), jnp.float32)
    pe = build_pe_table(MAX_LEN, D_MODEL)

    layers = []
    for lkey in jax.random.split(k_layers, N_LAYERS):
        ks = jax.random.split(lkey, 8)
        wq, bq = init_linear(ks[0], D_MODEL, D_MODEL)
        wk, bk = init_linear(ks[1], D_MODEL, D_MODEL)
        wv, bv = init_linear(ks[2], D_MODEL, D_MODEL)
        wo, bo = init_linear(ks[3], D_MODEL, D_MODEL)
        w1, b1 = init_linear(ks[4], D_MODEL, D_FF)
        w2, b2 = init_linear(ks[5], D_FF, D_MODEL)
        n1a, n1b = init_norm(ks[6])
        n2a, n2b = init_norm(ks[7])
        layers.append(dict(wq=wq, bq=bq, wk=wk, bk=bk, wv=wv, bv=bv, wo=wo, bo=bo,
                           w1=w1, b1=b1, w2=w2, b2=b2,
                           n1a=n1a, n1b=n1b, n2a=n2a, n2b=n2b))
    fna, fnb = init_norm(k_final)

    raw_params = dict(embed=embed, pe=pe, layers=layers, fna=fna, fnb=fnb)

    # --- pack for the kernel: offline constant folds + fused/stacked weights ---
    scale = 1.0 / math.sqrt(D_K)

    def stack(fn):
        return jnp.stack([fn(lp) for lp in layers])

    kernel_params = dict(
        embed=embed * math.sqrt(D_MODEL),              # sqrt(d_model) folded into table
        pe=pe,
        wqkv=stack(lambda lp: jnp.concatenate(
            [lp["wq"] * scale, lp["wk"], lp["wv"]], axis=1)),   # 1/sqrt(d_k) folded into Q
        bqkv=stack(lambda lp: jnp.concatenate(
            [lp["bq"] * scale, lp["bk"], lp["bv"]]).reshape(1, 3 * D_MODEL)),
        wo=stack(lambda lp: lp["wo"]),
        bo=stack(lambda lp: lp["bo"].reshape(1, D_MODEL)),
        n1a=stack(lambda lp: lp["n1a"].reshape(1, D_MODEL)),
        n1b=stack(lambda lp: lp["n1b"].reshape(1, D_MODEL)),
        n2a=stack(lambda lp: lp["n2a"].reshape(1, D_MODEL)),
        n2b=stack(lambda lp: lp["n2b"].reshape(1, D_MODEL)),
        w1=stack(lambda lp: lp["w1"]),
        b1=stack(lambda lp: lp["b1"].reshape(1, D_FF)),
        w2=stack(lambda lp: lp["w2"]),
        b2=stack(lambda lp: lp["b2"].reshape(1, D_MODEL)),
        fna=fna.reshape(1, D_MODEL),
        fnb=fnb.reshape(1, D_MODEL),
    )

    token_ids = jax.random.randint(k_ids, (B, S), 0, VOCAB, dtype=jnp.int32)
    causal = jnp.tril(jnp.ones((S, S), jnp.float32))
    trg_mask = jnp.broadcast_to(causal, (B, S, S))

    out = decoder_forward(token_ids, trg_mask, kernel_params)
    out = jax.block_until_ready(out)

    with jax.default_matmul_precision("highest"):
        ref = reference_decoder(token_ids, trg_mask, raw_params)
        ref = jax.block_until_ready(ref)

    np.testing.assert_allclose(np.asarray(out), np.asarray(ref), rtol=2e-3, atol=2e-3)

    print("KERNEL_OK")
</pallas_src>

<mosaic_0001>
module attributes {stable_mosaic.version = 11 : i64} {
  func.func @decoder_kernel(%arg0: i32, %arg1: memref<16xi32, #tpu.memory_space<smem>>, %arg2: memref<64x32xf32, #tpu.memory_space<vmem>>, %arg3: memref<64x32xf32, #tpu.memory_space<vmem>>, %arg4: memref<2x8x8xf32, #tpu.memory_space<vmem>>, %arg5: memref<1x32x96xf32, #tpu.memory_space<vmem>>, %arg6: memref<1x1x96xf32, #tpu.memory_space<vmem>>, %arg7: memref<1x32x32xf32, #tpu.memory_space<vmem>>, %arg8: memref<1x1x32xf32, #tpu.memory_space<vmem>>, %arg9: memref<1x1x32xf32, #tpu.memory_space<vmem>>, %arg10: memref<1x1x32xf32, #tpu.memory_space<vmem>>, %arg11: memref<1x1x32xf32, #tpu.memory_space<vmem>>, %arg12: memref<1x1x32xf32, #tpu.memory_space<vmem>>, %arg13: memref<1x32x2048xf32, #tpu.memory_space<vmem>>, %arg14: memref<1x1x2048xf32, #tpu.memory_space<vmem>>, %arg15: memref<1x2048x32xf32, #tpu.memory_space<vmem>>, %arg16: memref<1x1x32xf32, #tpu.memory_space<vmem>>, %arg17: memref<1x32xf32, #tpu.memory_space<vmem>>, %arg18: memref<1x32xf32, #tpu.memory_space<vmem>>, %arg19: memref<16x32xf32, #tpu.memory_space<vmem>>, %arg20: memref<16x32xf32, #tpu.memory_space<vmem>>, %arg21: memref<8x8x8xf32, #tpu.memory_space<vmem>>) attributes {dimension_semantics = [#tpu.dimension_semantics<arbitrary>], iteration_bounds = array<i64: 2>, scalar_prefetch = 1 : i64, scratch_operands = 2 : i64, tpu.core_type = #tpu.core_type<tc>, window_params = [{pipeline_mode = #tpu.pipeline_mode<synchronous>, transform_indices = @transform_0, window_bounds = array<i64: 64, 32>}, {pipeline_mode = #tpu.pipeline_mode<synchronous>, transform_indices = @transform_1, window_bounds = array<i64: 64, 32>}, {pipeline_mode = #tpu.pipeline_mode<synchronous>, transform_indices = @transform_2, window_bounds = array<i64: 2, 8, 8>}, {transform_indices = @transform_3, window_bounds = array<i64: 1, 32, 96>}, {transform_indices = @transform_4, window_bounds = array<i64: 1, 1, 96>}, {transform_indices = @transform_5, window_bounds = array<i64: 1, 32, 32>}, {transform_indices = @transform_6, window_bounds = array<i64: 1, 1, 32>}, {transform_indices = @transform_7, window_bounds = array<i64: 1, 1, 32>}, {transform_indices = @transform_8, window_bounds = array<i64: 1, 1, 32>}, {transform_indices = @transform_9, window_bounds = array<i64: 1, 1, 32>}, {transform_indices = @transform_10, window_bounds = array<i64: 1, 1, 32>}, {transform_indices = @transform_11, window_bounds = array<i64: 1, 32, 2048>}, {transform_indices = @transform_12, window_bounds = array<i64: 1, 1, 2048>}, {transform_indices = @transform_13, window_bounds = array<i64: 1, 2048, 32>}, {transform_indices = @transform_14, window_bounds = array<i64: 1, 1, 32>}, {pipeline_mode = #tpu.pipeline_mode<synchronous>, transform_indices = @transform_15, window_bounds = array<i64: 1, 32>}, {pipeline_mode = #tpu.pipeline_mode<synchronous>, transform_indices = @transform_16, window_bounds = array<i64: 1, 32>}, {pipeline_mode = #tpu.pipeline_mode<synchronous>, transform_indices = @transform_17, window_bounds = array<i64: 16, 32>}]} {
    %c0_i32 = arith.constant 0 : i32
    %0 = arith.cmpi eq, %arg0, %c0_i32 : i32
    %1 = arith.extui %0 : i1 to i32
    %c0_i32_0 = arith.constant 0 : i32
    %2 = arith.cmpi ne, %1, %c0_i32_0 : i32
    scf.if %2 {
      %c0_96 = arith.constant 0 : index
      %c0_97 = arith.constant 0 : index
      %c0_98 = arith.constant 0 : index
      %190 = vector.load %arg4[%c0_96, %c0_97, %c0_98] : memref<2x8x8xf32, #tpu.memory_space<vmem>>, vector<2x8x8xf32>
      %cst_99 = arith.constant 0.000000e+00 : f32
      %191 = vector.broadcast %cst_99 : f32 to vector<2x8x8xf32>
      %192 = arith.cmpf oeq, %190, %191 : vector<2x8x8xf32>
      %cst_100 = arith.constant -1.000000e+09 : f32
      %cst_101 = arith.constant 0.000000e+00 : f32
      %193 = vector.broadcast %cst_100 : f32 to vector<2x8x8xf32>
      %194 = vector.broadcast %cst_101 : f32 to vector<2x8x8xf32>
      %195 = arith.select %192, %193, %194 : vector<2x8x8xi1>, vector<2x8x8xf32>
      %196 = vector.shape_cast %195 : vector<2x8x8xf32> to vector<1x2x8x8xf32>
      %197 = vector.shape_cast %196 : vector<1x2x8x8xf32> to vector<1x2x8x8xf32>
      %198 = vector.broadcast %197 : vector<1x2x8x8xf32> to vector<4x2x8x8xf32>
      %199 = vector.shape_cast %198 : vector<4x2x8x8xf32> to vector<8x8x8xf32>
      %c0_102 = arith.constant 0 : index
      %c0_103 = arith.constant 0 : index
      %c0_104 = arith.constant 0 : index
      %200 = vector.load %arg21[%c0_102, %c0_103, %c0_104] : memref<8x8x8xf32, #tpu.memory_space<vmem>>, vector<8x8x8xf32>
      tpu.vector_store %arg21[%c0_102, %c0_103, %c0_104], %199 {strides = array<i32>} : memref<8x8x8xf32, #tpu.memory_space<vmem>>, vector<8x8x8xf32>,
      %c0_105 = arith.constant 0 : index
      %201 = memref.load %arg1[%c0_105] : memref<16xi32, #tpu.memory_space<smem>>
      %202 = arith.index_cast %201 : i32 to index
      %c0_106 = arith.constant 0 : index
      %203 = vector.load %arg2[%202, %c0_106] : memref<64x32xf32, #tpu.memory_space<vmem>>, vector<1x32xf32>
      %c0_107 = arith.constant 0 : index
      %c0_108 = arith.constant 0 : index
      %204 = vector.load %arg3[%c0_107, %c0_108] : memref<64x32xf32, #tpu.memory_space<vmem>>, vector<1x32xf32>
      %205 = arith.addf %203, %204 : vector<1x32xf32>
      %c0_109 = arith.constant 0 : index
      %c0_110 = arith.constant 0 : index
      %206 = vector.load %arg20[%c0_109, %c0_110] : memref<16x32xf32, #tpu.memory_space<vmem>>, vector<1x32xf32>
      tpu.vector_store %arg20[%c0_109, %c0_110], %205 {strides = array<i32>} : memref<16x32xf32, #tpu.memory_space<vmem>>, vector<1x32xf32>,
      %c1 = arith.constant 1 : index
      %207 = memref.load %arg1[%c1] : memref<16xi32, #tpu.memory_space<smem>>
      %208 = arith.index_cast %207 : i32 to index
      %c0_111 = arith.constant 0 : index
      %209 = vector.load %arg2[%208, %c0_111] : memref<64x32xf32, #tpu.memory_space<vmem>>, vector<1x32xf32>
      %c1_112 = arith.constant 1 : index
      %c0_113 = arith.constant 0 : index
      %210 = vector.load %arg3[%c1_112, %c0_113] : memref<64x32xf32, #tpu.memory_space<vmem>>, vector<1x32xf32>
      %211 = arith.addf %209, %210 : vector<1x32xf32>
      %c1_114 = arith.constant 1 : index
      %c0_115 = arith.constant 0 : index
      %212 = vector.load %arg20[%c1_114, %c0_115] : memref<16x32xf32, #tpu.memory_space<vmem>>, vector<1x32xf32>
      tpu.vector_store %arg20[%c1_114, %c0_115], %211 {strides = array<i32>} : memref<16x32xf32, #tpu.memory_space<vmem>>, vector<1x32xf32>,
      %c2 = arith.constant 2 : index
      %213 = memref.load %arg1[%c2] : memref<16xi32, #tpu.memory_space<smem>>
      %214 = arith.index_cast %213 : i32 to index
      %c0_116 = arith.constant 0 : index
      %215 = vector.load %arg2[%214, %c0_116] : memref<64x32xf32, #tpu.memory_space<vmem>>, vector<1x32xf32>
      %c2_117 = arith.constant 2 : index
      %c0_118 = arith.constant 0 : index
      %216 = vector.load %arg3[%c2_117, %c0_118] : memref<64x32xf32, #tpu.memory_space<vmem>>, vector<1x32xf32>
      %217 = arith.addf %215, %216 : vector<1x32xf32>
      %c2_119 = arith.constant 2 : index
      %c0_120 = arith.constant 0 : index
      %218 = vector.load %arg20[%c2_119, %c0_120] : memref<16x32xf32, #tpu.memory_space<vmem>>, vector<1x32xf32>
      tpu.vector_store %arg20[%c2_119, %c0_120], %217 {strides = array<i32>} : memref<16x32xf32, #tpu.memory_space<vmem>>, vector<1x32xf32>,
      %c3 = arith.constant 3 : index
      %219 = memref.load %arg1[%c3] : memref<16xi32, #tpu.memory_space<smem>>
      %220 = arith.index_cast %219 : i32 to index
      %c0_121 = arith.constant 0 : index
      %221 = vector.load %arg2[%220, %c0_121] : memref<64x32xf32, #tpu.memory_space<vmem>>, vector<1x32xf32>
      %c3_122 = arith.constant 3 : index
      %c0_123 = arith.constant 0 : index
      %222 = vector.load %arg3[%c3_122, %c0_123] : memref<64x32xf32, #tpu.memory_space<vmem>>, vector<1x32xf32>
      %223 = arith.addf %221, %222 : vector<1x32xf32>
      %c3_124 = arith.constant 3 : index
      %c0_125 = arith.constant 0 : index
      %224 = vector.load %arg20[%c3_124, %c0_125] : memref<16x32xf32, #tpu.memory_space<vmem>>, vector<1x32xf32>
      tpu.vector_store %arg20[%c3_124, %c0_125], %223 {strides = array<i32>} : memref<16x32xf32, #tpu.memory_space<vmem>>, vector<1x32xf32>,
      %c4 = arith.constant 4 : index
      %225 = memref.load %arg1[%c4] : memref<16xi32, #tpu.memory_space<smem>>
      %226 = arith.index_cast %225 : i32 to index
      %c0_126 = arith.constant 0 : index
      %227 = vector.load %arg2[%226, %c0_126] : memref<64x32xf32, #tpu.memory_space<vmem>>, vector<1x32xf32>
      %c4_127 = arith.constant 4 : index
      %c0_128 = arith.constant 0 : index
      %228 = vector.load %arg3[%c4_127, %c0_128] : memref<64x32xf32, #tpu.memory_space<vmem>>, vector<1x32xf32>
      %229 = arith.addf %227, %228 : vector<1x32xf32>
      %c4_129 = arith.constant 4 : index
      %c0_130 = arith.constant 0 : index
      %230 = vector.load %arg20[%c4_129, %c0_130] : memref<16x32xf32, #tpu.memory_space<vmem>>, vector<1x32xf32>
      tpu.vector_store %arg20[%c4_129, %c0_130], %229 {strides = array<i32>} : memref<16x32xf32, #tpu.memory_space<vmem>>, vector<1x32xf32>,
      %c5 = arith.constant 5 : index
      %231 = memref.load %arg1[%c5] : memref<16xi32, #tpu.memory_space<smem>>
      %232 = arith.index_cast %231 : i32 to index
      %c0_131 = arith.constant 0 : index
      %233 = vector.load %arg2[%232, %c0_131] : memref<64x32xf32, #tpu.memory_space<vmem>>, vector<1x32xf32>
      %c5_132 = arith.constant 5 : index
      %c0_133 = arith.constant 0 : index
      %234 = vector.load %arg3[%c5_132, %c0_133] : memref<64x32xf32, #tpu.memory_space<vmem>>, vector<1x32xf32>
      %235 = arith.addf %233, %234 : vector<1x32xf32>
      %c5_134 = arith.constant 5 : index
      %c0_135 = arith.constant 0 : index
      %236 = vector.load %arg20[%c5_134, %c0_135] : memref<16x32xf32, #tpu.memory_space<vmem>>, vector<1x32xf32>
      tpu.vector_store %arg20[%c5_134, %c0_135], %235 {strides = array<i32>} : memref<16x32xf32, #tpu.memory_space<vmem>>, vector<1x32xf32>,
      %c6 = arith.constant 6 : index
      %237 = memref.load %arg1[%c6] : memref<16xi32, #tpu.memory_space<smem>>
      %238 = arith.index_cast %237 : i32 to index
      %c0_136 = arith.constant 0 : index
      %239 = vector.load %arg2[%238, %c0_136] : memref<64x32xf32, #tpu.memory_space<vmem>>, vector<1x32xf32>
      %c6_137 = arith.constant 6 : index
      %c0_138 = arith.constant 0 : index
      %240 = vector.load %arg3[%c6_137, %c0_138] : memref<64x32xf32, #tpu.memory_space<vmem>>, vector<1x32xf32>
      %241 = arith.addf %239, %240 : vector<1x32xf32>
      %c6_139 = arith.constant 6 : index
      %c0_140 = arith.constant 0 : index
      %242 = vector.load %arg20[%c6_139, %c0_140] : memref<16x32xf32, #tpu.memory_space<vmem>>, vector<1x32xf32>
      tpu.vector_store %arg20[%c6_139, %c0_140], %241 {strides = array<i32>} : memref<16x32xf32, #tpu.memory_space<vmem>>, vector<1x32xf32>,
      %c7 = arith.constant 7 : index
      %243 = memref.load %arg1[%c7] : memref<16xi32, #tpu.memory_space<smem>>
      %244 = arith.index_cast %243 : i32 to index
      %c0_141 = arith.constant 0 : index
      %245 = vector.load %arg2[%244, %c0_141] : memref<64x32xf32, #tpu.memory_space<vmem>>, vector<1x32xf32>
      %c7_142 = arith.constant 7 : index
      %c0_143 = arith.constant 0 : index
      %246 = vector.load %arg3[%c7_142, %c0_143] : memref<64x32xf32, #tpu.memory_space<vmem>>, vector<1x32xf32>
      %247 = arith.addf %245, %246 : vector<1x32xf32>
      %c7_144 = arith.constant 7 : index
      %c0_145 = arith.constant 0 : index
      %248 = vector.load %arg20[%c7_144, %c0_145] : memref<16x32xf32, #tpu.memory_space<vmem>>, vector<1x32xf32>
      tpu.vector_store %arg20[%c7_144, %c0_145], %247 {strides = array<i32>} : memref<16x32xf32, #tpu.memory_space<vmem>>, vector<1x32xf32>,
      %c8 = arith.constant 8 : index
      %249 = memref.load %arg1[%c8] : memref<16xi32, #tpu.memory_space<smem>>
      %250 = arith.index_cast %249 : i32 to index
      %c0_146 = arith.constant 0 : index
      %251 = vector.load %arg2[%250, %c0_146] : memref<64x32xf32, #tpu.memory_space<vmem>>, vector<1x32xf32>
      %c0_147 = arith.constant 0 : index
      %c0_148 = arith.constant 0 : index
      %252 = vector.load %arg3[%c0_147, %c0_148] : memref<64x32xf32, #tpu.memory_space<vmem>>, vector<1x32xf32>
      %253 = arith.addf %251, %252 : vector<1x32xf32>
      %c8_149 = arith.constant 8 : index
      %c0_150 = arith.constant 0 : index
      %254 = vector.load %arg20[%c8_149, %c0_150] : memref<16x32xf32, #tpu.memory_space<vmem>>, vector<1x32xf32>
      tpu.vector_store %arg20[%c8_149, %c0_150], %253 {strides = array<i32>} : memref<16x32xf32, #tpu.memory_space<vmem>>, vector<1x32xf32>,
      %c9 = arith.constant 9 : index
      %255 = memref.load %arg1[%c9] : memref<16xi32, #tpu.memory_space<smem>>
      %256 = arith.index_cast %255 : i32 to index
      %c0_151 = arith.constant 0 : index
      %257 = vector.load %arg2[%256, %c0_151] : memref<64x32xf32, #tpu.memory_space<vmem>>, vector<1x32xf32>
      %c1_152 = arith.constant 1 : index
      %c0_153 = arith.constant 0 : index
      %258 = vector.load %arg3[%c1_152, %c0_153] : memref<64x32xf32, #tpu.memory_space<vmem>>, vector<1x32xf32>
      %259 = arith.addf %257, %258 : vector<1x32xf32>
      %c9_154 = arith.constant 9 : index
      %c0_155 = arith.constant 0 : index
      %260 = vector.load %arg20[%c9_154, %c0_155] : memref<16x32xf32, #tpu.memory_space<vmem>>, vector<1x32xf32>
      tpu.vector_store %arg20[%c9_154, %c0_155], %259 {strides = array<i32>} : memref<16x32xf32, #tpu.memory_space<vmem>>, vector<1x32xf32>,
      %c10 = arith.constant 10 : index
      %261 = memref.load %arg1[%c10] : memref<16xi32, #tpu.memory_space<smem>>
      %262 = arith.index_cast %261 : i32 to index
      %c0_156 = arith.constant 0 : index
      %263 = vector.load %arg2[%262, %c0_156] : memref<64x32xf32, #tpu.memory_space<vmem>>, vector<1x32xf32>
      %c2_157 = arith.constant 2 : index
      %c0_158 = arith.constant 0 : index
      %264 = vector.load %arg3[%c2_157, %c0_158] : memref<64x32xf32, #tpu.memory_space<vmem>>, vector<1x32xf32>
      %265 = arith.addf %263, %264 : vector<1x32xf32>
      %c10_159 = arith.constant 10 : index
      %c0_160 = arith.constant 0 : index
      %266 = vector.load %arg20[%c10_159, %c0_160] : memref<16x32xf32, #tpu.memory_space<vmem>>, vector<1x32xf32>
      tpu.vector_store %arg20[%c10_159, %c0_160], %265 {strides = array<i32>} : memref<16x32xf32, #tpu.memory_space<vmem>>, vector<1x32xf32>,
      %c11 = arith.constant 11 : index
      %267 = memref.load %arg1[%c11] : memref<16xi32, #tpu.memory_space<smem>>
      %268 = arith.index_cast %267 : i32 to index
      %c0_161 = arith.constant 0 : index
      %269 = vector.load %arg2[%268, %c0_161] : memref<64x32xf32, #tpu.memory_space<vmem>>, vector<1x32xf32>
      %c3_162 = arith.constant 3 : index
      %c0_163 = arith.constant 0 : index
      %270 = vector.load %arg3[%c3_162, %c0_163] : memref<64x32xf32, #tpu.memory_space<vmem>>, vector<1x32xf32>
      %271 = arith.addf %269, %270 : vector<1x32xf32>
      %c11_164 = arith.constant 11 : index
      %c0_165 = arith.constant 0 : index
      %272 = vector.load %arg20[%c11_164, %c0_165] : memref<16x32xf32, #tpu.memory_space<vmem>>, vector<1x32xf32>
      tpu.vector_store %arg20[%c11_164, %c0_165], %271 {strides = array<i32>} : memref<16x32xf32, #tpu.memory_space<vmem>>, vector<1x32xf32>,
      %c12 = arith.constant 12 : index
      %273 = memref.load %arg1[%c12] : memref<16xi32, #tpu.memory_space<smem>>
      %274 = arith.index_cast %273 : i32 to index
      %c0_166 = arith.constant 0 : index
      %275 = vector.load %arg2[%274, %c0_166] : memref<64x32xf32, #tpu.memory_space<vmem>>, vector<1x32xf32>
      %c4_167 = arith.constant 4 : index
      %c0_168 = arith.constant 0 : index
      %276 = vector.load %arg3[%c4_167, %c0_168] : memref<64x32xf32, #tpu.memory_space<vmem>>, vector<1x32xf32>
      %277 = arith.addf %275, %276 : vector<1x32xf32>
      %c12_169 = arith.constant 12 : index
      %c0_170 = arith.constant 0 : index
      %278 = vector.load %arg20[%c12_169, %c0_170] : memref<16x32xf32, #tpu.memory_space<vmem>>, vector<1x32xf32>
      tpu.vector_store %arg20[%c12_169, %c0_170], %277 {strides = array<i32>} : memref<16x32xf32, #tpu.memory_space<vmem>>, vector<1x32xf32>,
      %c13 = arith.constant 13 : index
      %279 = memref.load %arg1[%c13] : memref<16xi32, #tpu.memory_space<smem>>
      %280 = arith.index_cast %279 : i32 to index
      %c0_171 = arith.constant 0 : index
      %281 = vector.load %arg2[%280, %c0_171] : memref<64x32xf32, #tpu.memory_space<vmem>>, vector<1x32xf32>
      %c5_172 = arith.constant 5 : index
      %c0_173 = arith.constant 0 : index
      %282 = vector.load %arg3[%c5_172, %c0_173] : memref<64x32xf32, #tpu.memory_space<vmem>>, vector<1x32xf32>
      %283 = arith.addf %281, %282 : vector<1x32xf32>
      %c13_174 = arith.constant 13 : index
      %c0_175 = arith.constant 0 : index
      %284 = vector.load %arg20[%c13_174, %c0_175] : memref<16x32xf32, #tpu.memory_space<vmem>>, vector<1x32xf32>
      tpu.vector_store %arg20[%c13_174, %c0_175], %283 {strides = array<i32>} : memref<16x32xf32, #tpu.memory_space<vmem>>, vector<1x32xf32>,
      %c14 = arith.constant 14 : index
      %285 = memref.load %arg1[%c14] : memref<16xi32, #tpu.memory_space<smem>>
      %286 = arith.index_cast %285 : i32 to index
      %c0_176 = arith.constant 0 : index
      %287 = vector.load %arg2[%286, %c0_176] : memref<64x32xf32, #tpu.memory_space<vmem>>, vector<1x32xf32>
      %c6_177 = arith.constant 6 : index
      %c0_178 = arith.constant 0 : index
      %288 = vector.load %arg3[%c6_177, %c0_178] : memref<64x32xf32, #tpu.memory_space<vmem>>, vector<1x32xf32>
      %289 = arith.addf %287, %288 : vector<1x32xf32>
      %c14_179 = arith.constant 14 : index
      %c0_180 = arith.constant 0 : index
      %290 = vector.load %arg20[%c14_179, %c0_180] : memref<16x32xf32, #tpu.memory_space<vmem>>, vector<1x32xf32>
      tpu.vector_store %arg20[%c14_179, %c0_180], %289 {strides = array<i32>} : memref<16x32xf32, #tpu.memory_space<vmem>>, vector<1x32xf32>,
      %c15 = arith.constant 15 : index
      %291 = memref.load %arg1[%c15] : memref<16xi32, #tpu.memory_space<smem>>
      %292 = arith.index_cast %291 : i32 to index
      %c0_181 = arith.constant 0 : index
      %293 = vector.load %arg2[%292, %c0_181] : memref<64x32xf32, #tpu.memory_space<vmem>>, vector<1x32xf32>
      %c7_182 = arith.constant 7 : index
      %c0_183 = arith.constant 0 : index
      %294 = vector.load %arg3[%c7_182, %c0_183] : memref<64x32xf32, #tpu.memory_space<vmem>>, vector<1x32xf32>
      %295 = arith.addf %293, %294 : vector<1x32xf32>
      %c15_184 = arith.constant 15 : index
      %c0_185 = arith.constant 0 : index
      %296 = vector.load %arg20[%c15_184, %c0_185] : memref<16x32xf32, #tpu.memory_space<vmem>>, vector<1x32xf32>
      tpu.vector_store %arg20[%c15_184, %c0_185], %295 {strides = array<i32>} : memref<16x32xf32, #tpu.memory_space<vmem>>, vector<1x32xf32>,
    } else {
    }
    %c0 = arith.constant 0 : index
    %c0_1 = arith.constant 0 : index
    %3 = vector.load %arg20[%c0, %c0_1] : memref<16x32xf32, #tpu.memory_space<vmem>>, vector<16x32xf32>
    %c0_2 = arith.constant 0 : index
    %c0_3 = arith.constant 0 : index
    %c0_4 = arith.constant 0 : index
    %4 = vector.load %arg21[%c0_2, %c0_3, %c0_4] : memref<8x8x8xf32, #tpu.memory_space<vmem>>, vector<8x8x8xf32>
    %c0_5 = arith.constant 0 : index
    %c0_6 = arith.constant 0 : index
    %c0_7 = arith.constant 0 : index
    %5 = vector.load %arg9[%c0_5, %c0_6, %c0_7] : memref<1x1x32xf32, #tpu.memory_space<vmem>>, vector<1x1x32xf32>
    %6 = vector.shape_cast %5 : vector<1x1x32xf32> to vector<1x32xf32>
    %c0_8 = arith.constant 0 : index
    %c0_9 = arith.constant 0 : index
    %c0_10 = arith.constant 0 : index
    %7 = vector.load %arg10[%c0_8, %c0_9, %c0_10] : memref<1x1x32xf32, #tpu.memory_space<vmem>>, vector<1x1x32xf32>
    %8 = vector.shape_cast %7 : vector<1x1x32xf32> to vector<1x32xf32>
    %cst = arith.constant dense<0.000000e+00> : vector<16xf32>
    %9 = vector.multi_reduction <add>, %3, %cst [1] : vector<16x32xf32> to vector<16xf32>
    %10 = vector.shape_cast %9 : vector<16xf32> to vector<16x1xf32>
    %cst_11 = arith.constant 3.200000e+01 : f32
    %11 = vector.broadcast %cst_11 : f32 to vector<16x1xf32>
    %12 = arith.divf %10, %11 : vector<16x1xf32>
    %13 = vector.broadcast %12 : vector<16x1xf32> to vector<16x32xf32>
    %14 = arith.subf %3, %13 : vector<16x32xf32>
    %15 = arith.mulf %14, %14 : vector<16x32xf32>
    %cst_12 = arith.constant dense<0.000000e+00> : vector<16xf32>
    %16 = vector.multi_reduction <add>, %15, %cst_12 [1] : vector<16x32xf32> to vector<16xf32>
    %17 = vector.shape_cast %16 : vector<16xf32> to vector<16x1xf32>
    %cst_13 = arith.constant 0.0322580636 : f32
    %18 = vector.broadcast %cst_13 : f32 to vector<16x1xf32>
    %19 = arith.mulf %17, %18 : vector<16x1xf32>
    %20 = vector.broadcast %6 : vector<1x32xf32> to vector<16x32xf32>
    %21 = arith.mulf %20, %14 : vector<16x32xf32>
    %22 = math.sqrt %19 : vector<16x1xf32>
    %cst_14 = arith.constant 9.99999997E-7 : f32
    %23 = vector.broadcast %cst_14 : f32 to vector<16x1xf32>
    %24 = arith.addf %22, %23 : vector<16x1xf32>
    %25 = vector.broadcast %24 : vector<16x1xf32> to vector<16x32xf32>
    %26 = arith.divf %21, %25 : vector<16x32xf32>
    %27 = vector.broadcast %8 : vector<1x32xf32> to vector<16x32xf32>
    %28 = arith.addf %26, %27 : vector<16x32xf32>
    %c0_15 = arith.constant 0 : index
    %c0_16 = arith.constant 0 : index
    %c0_17 = arith.constant 0 : index
    %29 = vector.load %arg5[%c0_15, %c0_16, %c0_17] : memref<1x32x96xf32, #tpu.memory_space<vmem>>, vector<1x32x96xf32>
    %30 = vector.shape_cast %29 : vector<1x32x96xf32> to vector<32x96xf32>
    %cst_18 = arith.constant dense<0.000000e+00> : vector<16x96xf32>
    %31 = tpu.matmul %28, %30, %cst_18 {dimension_numbers = #tpu.dot_dimension_numbers<[1], [0], [0], [1], [0, 0, 1, 1], [], []>} : vector<16x32xf32>, vector<32x96xf32>, vector<16x96xf32> -> vector<16x96xf32>
    %c0_19 = arith.constant 0 : index
    %c0_20 = arith.constant 0 : index
    %c0_21 = arith.constant 0 : index
    %32 = vector.load %arg6[%c0_19, %c0_20, %c0_21] : memref<1x1x96xf32, #tpu.memory_space<vmem>>, vector<1x1x96xf32>
    %33 = vector.shape_cast %32 : vector<1x1x96xf32> to vector<1x96xf32>
    %34 = vector.broadcast %33 : vector<1x96xf32> to vector<16x96xf32>
    %35 = arith.addf %31, %34 : vector<16x96xf32>
    %36 = vector.extract_strided_slice %35 {offsets = [0, 0], sizes = [16, 32], strides = [1, 1]} : vector<16x96xf32> to vector<16x32xf32>
    %37 = vector.extract_strided_slice %36 {offsets = [0, 0], sizes = [16, 8], strides = [1, 1]} : vector<16x32xf32> to vector<16x8xf32>
    %38 = vector.shape_cast %37 : vector<16x8xf32> to vector<1x2x8x8xf32>
    %39 = vector.extract_strided_slice %36 {offsets = [0, 8], sizes = [16, 8], strides = [1, 1]} : vector<16x32xf32> to vector<16x8xf32>
    %40 = vector.shape_cast %39 : vector<16x8xf32> to vector<1x2x8x8xf32>
    %41 = vector.extract_strided_slice %36 {offsets = [0, 16], sizes = [16, 8], strides = [1, 1]} : vector<16x32xf32> to vector<16x8xf32>
    %42 = vector.shape_cast %41 : vector<16x8xf32> to vector<1x2x8x8xf32>
    %43 = vector.extract_strided_slice %36 {offsets = [0, 24], sizes = [16, 8], strides = [1, 1]} : vector<16x32xf32> to vector<16x8xf32>
    %44 = vector.shape_cast %43 : vector<16x8xf32> to vector<1x2x8x8xf32>
    %45 = tpu.concatenate %38, %40, %42, %44 in 0 : vector<1x2x8x8xf32>, vector<1x2x8x8xf32>, vector<1x2x8x8xf32>, vector<1x2x8x8xf32> -> vector<4x2x8x8xf32>
    %46 = vector.shape_cast %45 : vector<4x2x8x8xf32> to vector<8x8x8xf32>
    %47 = vector.extract_strided_slice %35 {offsets = [0, 32], sizes = [16, 32], strides = [1, 1]} : vector<16x96xf32> to vector<16x32xf32>
    %48 = vector.extract_strided_slice %47 {offsets = [0, 0], sizes = [16, 8], strides = [1, 1]} : vector<16x32xf32> to vector<16x8xf32>
    %49 = vector.shape_cast %48 : vector<16x8xf32> to vector<1x2x8x8xf32>
    %50 = vector.extract_strided_slice %47 {offsets = [0, 8], sizes = [16, 8], strides = [1, 1]} : vector<16x32xf32> to vector<16x8xf32>
    %51 = vector.shape_cast %50 : vector<16x8xf32> to vector<1x2x8x8xf32>
    %52 = vector.extract_strided_slice %47 {offsets = [0, 16], sizes = [16, 8], strides = [1, 1]} : vector<16x32xf32> to vector<16x8xf32>
    %53 = vector.shape_cast %52 : vector<16x8xf32> to vector<1x2x8x8xf32>
    %54 = vector.extract_strided_slice %47 {offsets = [0, 24], sizes = [16, 8], strides = [1, 1]} : vector<16x32xf32> to vector<16x8xf32>
    %55 = vector.shape_cast %54 : vector<16x8xf32> to vector<1x2x8x8xf32>
    %56 = tpu.concatenate %49, %51, %53, %55 in 0 : vector<1x2x8x8xf32>, vector<1x2x8x8xf32>, vector<1x2x8x8xf32>, vector<1x2x8x8xf32> -> vector<4x2x8x8xf32>
    %57 = vector.shape_cast %56 : vector<4x2x8x8xf32> to vector<8x8x8xf32>
    %58 = vector.extract_strided_slice %35 {offsets = [0, 64], sizes = [16, 32], strides = [1, 1]} : vector<16x96xf32> to vector<16x32xf32>
    %59 = vector.extract_strided_slice %58 {offsets = [0, 0], sizes = [16, 8], strides = [1, 1]} : vector<16x32xf32> to vector<16x8xf32>
    %60 = vector.shape_cast %59 : vector<16x8xf32> to vector<1x2x8x8xf32>
    %61 = vector.extract_strided_slice %58 {offsets = [0, 8], sizes = [16, 8], strides = [1, 1]} : vector<16x32xf32> to vector<16x8xf32>
    %62 = vector.shape_cast %61 : vector<16x8xf32> to vector<1x2x8x8xf32>
    %63 = vector.extract_strided_slice %58 {offsets = [0, 16], sizes = [16, 8], strides = [1, 1]} : vector<16x32xf32> to vector<16x8xf32>
    %64 = vector.shape_cast %63 : vector<16x8xf32> to vector<1x2x8x8xf32>
    %65 = vector.extract_strided_slice %58 {offsets = [0, 24], sizes = [16, 8], strides = [1, 1]} : vector<16x32xf32> to vector<16x8xf32>
    %66 = vector.shape_cast %65 : vector<16x8xf32> to vector<1x2x8x8xf32>
    %67 = tpu.concatenate %60, %62, %64, %66 in 0 : vector<1x2x8x8xf32>, vector<1x2x8x8xf32>, vector<1x2x8x8xf32>, vector<1x2x8x8xf32> -> vector<4x2x8x8xf32>
    %68 = vector.shape_cast %67 : vector<4x2x8x8xf32> to vector<8x8x8xf32>
    "tpu.trace_start"() <{level = 10 : i32, message = "nqd,nkd->nqk"}> : () -> ()
    %cst_22 = arith.constant dense<0.000000e+00> : vector<8x8x8xf32>
    %69 = tpu.matmul %46, %57, %cst_22 {dimension_numbers = #tpu.dot_dimension_numbers<[2], [2], [1], [1], [0, 0, 0, 1, 1, 1], [0], [0]>} : vector<8x8x8xf32>, vector<8x8x8xf32>, vector<8x8x8xf32> -> vector<8x8x8xf32>
    "tpu.trace_stop"() : () -> ()
    %70 = arith.addf %69, %4 : vector<8x8x8xf32>
    %cst_23 = arith.constant dense<0xFF800000> : vector<8x8xf32>
    %71 = vector.multi_reduction <maximumf>, %70, %cst_23 [2] : vector<8x8x8xf32> to vector<8x8xf32>
    %72 = vector.shape_cast %71 : vector<8x8xf32> to vector<8x8x1xf32>
    %73 = vector.broadcast %72 : vector<8x8x1xf32> to vector<8x8x8xf32>
    %74 = arith.subf %70, %73 : vector<8x8x8xf32>
    %75 = math.exp %74 : vector<8x8x8xf32>
    %cst_24 = arith.constant dense<0.000000e+00> : vector<8x8xf32>
    %76 = vector.multi_reduction <add>, %75, %cst_24 [2] : vector<8x8x8xf32> to vector<8x8xf32>
    %77 = vector.shape_cast %76 : vector<8x8xf32> to vector<8x8x1xf32>
    %78 = tpu.reciprocal %77 : vector<8x8x1xf32> -> vector<8x8x1xf32>
    %79 = vector.broadcast %78 : vector<8x8x1xf32> to vector<8x8x8xf32>
    %80 = arith.mulf %75, %79 : vector<8x8x8xf32>
    "tpu.trace_start"() <{level = 10 : i32, message = "nqk,nkd->nqd"}> : () -> ()
    %cst_25 = arith.constant dense<0.000000e+00> : vector<8x8x8xf32>
    %81 = tpu.matmul %80, %68, %cst_25 {dimension_numbers = #tpu.dot_dimension_numbers<[2], [1], [1], [2], [0, 0, 0, 1, 1, 2], [0], [0]>} : vector<8x8x8xf32>, vector<8x8x8xf32>, vector<8x8x8xf32> -> vector<8x8x8xf32>
    "tpu.trace_stop"() : () -> ()
    %82 = vector.shape_cast %81 : vector<8x8x8xf32> to vector<4x2x8x8xf32>
    %83 = vector.extract_strided_slice %82 {offsets = [0, 0, 0, 0], sizes = [1, 2, 8, 8], strides = [1, 1, 1, 1]} : vector<4x2x8x8xf32> to vector<1x2x8x8xf32>
    %84 = vector.shape_cast %83 : vector<1x2x8x8xf32> to vector<2x8x8xf32>
    %85 = vector.shape_cast %84 : vector<2x8x8xf32> to vector<16x8xf32>
    %86 = vector.extract_strided_slice %82 {offsets = [1, 0, 0, 0], sizes = [1, 2, 8, 8], strides = [1, 1, 1, 1]} : vector<4x2x8x8xf32> to vector<1x2x8x8xf32>
    %87 = vector.shape_cast %86 : vector<1x2x8x8xf32> to vector<2x8x8xf32>
    %88 = vector.shape_cast %87 : vector<2x8x8xf32> to vector<16x8xf32>
    %89 = vector.extract_strided_slice %82 {offsets = [2, 0, 0, 0], sizes = [1, 2, 8, 8], strides = [1, 1, 1, 1]} : vector<4x2x8x8xf32> to vector<1x2x8x8xf32>
    %90 = vector.shape_cast %89 : vector<1x2x8x8xf32> to vector<2x8x8xf32>
    %91 = vector.shape_cast %90 : vector<2x8x8xf32> to vector<16x8xf32>
    %92 = vector.extract_strided_slice %82 {offsets = [3, 0, 0, 0], sizes = [1, 2, 8, 8], strides = [1, 1, 1, 1]} : vector<4x2x8x8xf32> to vector<1x2x8x8xf32>
    %93 = vector.shape_cast %92 : vector<1x2x8x8xf32> to vector<2x8x8xf32>
    %94 = vector.shape_cast %93 : vector<2x8x8xf32> to vector<16x8xf32>
    %95 = tpu.concatenate %85, %88, %91, %94 in 1 : vector<16x8xf32>, vector<16x8xf32>, vector<16x8xf32>, vector<16x8xf32> -> vector<16x32xf32>
    %c0_26 = arith.constant 0 : index
    %c0_27 = arith.constant 0 : index
    %c0_28 = arith.constant 0 : index
    %96 = vector.load %arg7[%c0_26, %c0_27, %c0_28] : memref<1x32x32xf32, #tpu.memory_space<vmem>>, vector<1x32x32xf32>
    %97 = vector.shape_cast %96 : vector<1x32x32xf32> to vector<32x32xf32>
    %cst_29 = arith.constant dense<0.000000e+00> : vector<16x32xf32>
    %98 = tpu.matmul %95, %97, %cst_29 {dimension_numbers = #tpu.dot_dimension_numbers<[1], [0], [0], [1], [0, 0, 1, 1], [], []>} : vector<16x32xf32>, vector<32x32xf32>, vector<16x32xf32> -> vector<16x32xf32>
    %99 = arith.addf %3, %98 : vector<16x32xf32>
    %c0_30 = arith.constant 0 : index
    %c0_31 = arith.constant 0 : index
    %c0_32 = arith.constant 0 : index
    %100 = vector.load %arg8[%c0_30, %c0_31, %c0_32] : memref<1x1x32xf32, #tpu.memory_space<vmem>>, vector<1x1x32xf32>
    %101 = vector.shape_cast %100 : vector<1x1x32xf32> to vector<1x32xf32>
    %102 = vector.broadcast %101 : vector<1x32xf32> to vector<16x32xf32>
    %103 = arith.addf %99, %102 : vector<16x32xf32>
    %c0_33 = arith.constant 0 : index
    %c0_34 = arith.constant 0 : index
    %c0_35 = arith.constant 0 : index
    %104 = vector.load %arg11[%c0_33, %c0_34, %c0_35] : memref<1x1x32xf32, #tpu.memory_space<vmem>>, vector<1x1x32xf32>
    %105 = vector.shape_cast %104 : vector<1x1x32xf32> to vector<1x32xf32>
    %c0_36 = arith.constant 0 : index
    %c0_37 = arith.constant 0 : index
    %c0_38 = arith.constant 0 : index
    %106 = vector.load %arg12[%c0_36, %c0_37, %c0_38] : memref<1x1x32xf32, #tpu.memory_space<vmem>>, vector<1x1x32xf32>
    %107 = vector.shape_cast %106 : vector<1x1x32xf32> to vector<1x32xf32>
    %cst_39 = arith.constant dense<0.000000e+00> : vector<16xf32>
    %108 = vector.multi_reduction <add>, %103, %cst_39 [1] : vector<16x32xf32> to vector<16xf32>
    %109 = vector.shape_cast %108 : vector<16xf32> to vector<16x1xf32>
    %cst_40 = arith.constant 3.200000e+01 : f32
    %110 = vector.broadcast %cst_40 : f32 to vector<16x1xf32>
    %111 = arith.divf %109, %110 : vector<16x1xf32>
    %112 = vector.broadcast %111 : vector<16x1xf32> to vector<16x32xf32>
    %113 = arith.subf %103, %112 : vector<16x32xf32>
    %114 = arith.mulf %113, %113 : vector<16x32xf32>
    %cst_41 = arith.constant dense<0.000000e+00> : vector<16xf32>
    %115 = vector.multi_reduction <add>, %114, %cst_41 [1] : vector<16x32xf32> to vector<16xf32>
    %116 = vector.shape_cast %115 : vector<16xf32> to vector<16x1xf32>
    %cst_42 = arith.constant 0.0322580636 : f32
    %117 = vector.broadcast %cst_42 : f32 to vector<16x1xf32>
    %118 = arith.mulf %116, %117 : vector<16x1xf32>
    %119 = vector.broadcast %105 : vector<1x32xf32> to vector<16x32xf32>
    %120 = arith.mulf %119, %113 : vector<16x32xf32>
    %121 = math.sqrt %118 : vector<16x1xf32>
    %cst_43 = arith.constant 9.99999997E-7 : f32
    %122 = vector.broadcast %cst_43 : f32 to vector<16x1xf32>
    %123 = arith.addf %121, %122 : vector<16x1xf32>
    %124 = vector.broadcast %123 : vector<16x1xf32> to vector<16x32xf32>
    %125 = arith.divf %120, %124 : vector<16x32xf32>
    %126 = vector.broadcast %107 : vector<1x32xf32> to vector<16x32xf32>
    %127 = arith.addf %125, %126 : vector<16x32xf32>
    %cst_44 = arith.constant 0.000000e+00 : f32
    %128 = vector.broadcast %cst_44 : f32 to vector<16x32xf32>
    %c0_45 = arith.constant 0 : index
    %c0_46 = arith.constant 0 : index
    %c0_47 = arith.constant 0 : index
    %129 = vector.load %arg13[%c0_45, %c0_46, %c0_47] : memref<1x32x2048xf32, #tpu.memory_space<vmem>>, vector<1x32x512xf32>
    %130 = vector.shape_cast %129 : vector<1x32x512xf32> to vector<32x512xf32>
    %cst_48 = arith.constant dense<0.000000e+00> : vector<16x512xf32>
    %131 = tpu.matmul %127, %130, %cst_48 {dimension_numbers = #tpu.dot_dimension_numbers<[1], [0], [0], [1], [0, 0, 1, 1], [], []>} : vector<16x32xf32>, vector<32x512xf32>, vector<16x512xf32> -> vector<16x512xf32>
    %c0_49 = arith.constant 0 : index
    %c0_50 = arith.constant 0 : index
    %c0_51 = arith.constant 0 : index
    %132 = vector.load %arg14[%c0_49, %c0_50, %c0_51] : memref<1x1x2048xf32, #tpu.memory_space<vmem>>, vector<1x1x512xf32>
    %133 = vector.shape_cast %132 : vector<1x1x512xf32> to vector<1x512xf32>
    %134 = vector.broadcast %133 : vector<1x512xf32> to vector<16x512xf32>
    %135 = arith.addf %131, %134 : vector<16x512xf32>
    %cst_52 = arith.constant 0.000000e+00 : f32
    %136 = vector.broadcast %cst_52 : f32 to vector<16x512xf32>
    %137 = arith.maximumf %135, %136 : vector<16x512xf32>
    %c0_53 = arith.constant 0 : index
    %c0_54 = arith.constant 0 : index
    %c0_55 = arith.constant 0 : index
    %138 = vector.load %arg15[%c0_53, %c0_54, %c0_55] : memref<1x2048x32xf32, #tpu.memory_space<vmem>>, vector<1x512x32xf32>
    %139 = vector.shape_cast %138 : vector<1x512x32xf32> to vector<512x32xf32>
    %cst_56 = arith.constant dense<0.000000e+00> : vector<16x32xf32>
    %140 = tpu.matmul %137, %139, %cst_56 {dimension_numbers = #tpu.dot_dimension_numbers<[1], [0], [0], [1], [0, 0, 1, 1], [], []>} : vector<16x512xf32>, vector<512x32xf32>, vector<16x32xf32> -> vector<16x32xf32>
    %141 = arith.addf %128, %140 : vector<16x32xf32>
    %c0_57 = arith.constant 0 : index
    %c0_58 = arith.constant 0 : index
    %c512 = arith.constant 512 : index
    %142 = vector.load %arg13[%c0_57, %c0_58, %c512] : memref<1x32x2048xf32, #tpu.memory_space<vmem>>, vector<1x32x512xf32>
    %143 = vector.shape_cast %142 : vector<1x32x512xf32> to vector<32x512xf32>
    %cst_59 = arith.constant dense<0.000000e+00> : vector<16x512xf32>
    %144 = tpu.matmul %127, %143, %cst_59 {dimension_numbers = #tpu.dot_dimension_numbers<[1], [0], [0], [1], [0, 0, 1, 1], [], []>} : vector<16x32xf32>, vector<32x512xf32>, vector<16x512xf32> -> vector<16x512xf32>
    %c0_60 = arith.constant 0 : index
    %c0_61 = arith.constant 0 : index
    %c512_62 = arith.constant 512 : index
    %145 = vector.load %arg14[%c0_60, %c0_61, %c512_62] : memref<1x1x2048xf32, #tpu.memory_space<vmem>>, vector<1x1x512xf32>
    %146 = vector.shape_cast %145 : vector<1x1x512xf32> to vector<1x512xf32>
    %147 = vector.broadcast %146 : vector<1x512xf32> to vector<16x512xf32>
    %148 = arith.addf %144, %147 : vector<16x512xf32>
    %cst_63 = arith.constant 0.000000e+00 : f32
    %149 = vector.broadcast %cst_63 : f32 to vector<16x512xf32>
    %150 = arith.maximumf %148, %149 : vector<16x512xf32>
    %c0_64 = arith.constant 0 : index
    %c512_65 = arith.constant 512 : index
    %c0_66 = arith.constant 0 : index
    %151 = vector.load %arg15[%c0_64, %c512_65, %c0_66] : memref<1x2048x32xf32, #tpu.memory_space<vmem>>, vector<1x512x32xf32>
    %152 = vector.shape_cast %151 : vector<1x512x32xf32> to vector<512x32xf32>
    %cst_67 = arith.constant dense<0.000000e+00> : vector<16x32xf32>
    %153 = tpu.matmul %150, %152, %cst_67 {dimension_numbers = #tpu.dot_dimension_numbers<[1], [0], [0], [1], [0, 0, 1, 1], [], []>} : vector<16x512xf32>, vector<512x32xf32>, vector<16x32xf32> -> vector<16x32xf32>
    %154 = arith.addf %141, %153 : vector<16x32xf32>
    %c0_68 = arith.constant 0 : index
    %c0_69 = arith.constant 0 : index
    %c1024 = arith.constant 1024 : index
    %155 = vector.load %arg13[%c0_68, %c0_69, %c1024] : memref<1x32x2048xf32, #tpu.memory_space<vmem>>, vector<1x32x512xf32>
    %156 = vector.shape_cast %155 : vector<1x32x512xf32> to vector<32x512xf32>
    %cst_70 = arith.constant dense<0.000000e+00> : vector<16x512xf32>
    %157 = tpu.matmul %127, %156, %cst_70 {dimension_numbers = #tpu.dot_dimension_numbers<[1], [0], [0], [1], [0, 0, 1, 1], [], []>} : vector<16x32xf32>, vector<32x512xf32>, vector<16x512xf32> -> vector<16x512xf32>
    %c0_71 = arith.constant 0 : index
    %c0_72 = arith.constant 0 : index
    %c1024_73 = arith.constant 1024 : index
    %158 = vector.load %arg14[%c0_71, %c0_72, %c1024_73] : memref<1x1x2048xf32, #tpu.memory_space<vmem>>, vector<1x1x512xf32>
    %159 = vector.shape_cast %158 : vector<1x1x512xf32> to vector<1x512xf32>
    %160 = vector.broadcast %159 : vector<1x512xf32> to vector<16x512xf32>
    %161 = arith.addf %157, %160 : vector<16x512xf32>
    %cst_74 = arith.constant 0.000000e+00 : f32
    %162 = vector.broadcast %cst_74 : f32 to vector<16x512xf32>
    %163 = arith.maximumf %161, %162 : vector<16x512xf32>
    %c0_75 = arith.constant 0 : index
    %c1024_76 = arith.constant 1024 : index
    %c0_77 = arith.constant 0 : index
    %164 = vector.load %arg15[%c0_75, %c1024_76, %c0_77] : memref<1x2048x32xf32, #tpu.memory_space<vmem>>, vector<1x512x32xf32>
    %165 = vector.shape_cast %164 : vector<1x512x32xf32> to vector<512x32xf32>
    %cst_78 = arith.constant dense<0.000000e+00> : vector<16x32xf32>
    %166 = tpu.matmul %163, %165, %cst_78 {dimension_numbers = #tpu.dot_dimension_numbers<[1], [0], [0], [1], [0, 0, 1, 1], [], []>} : vector<16x512xf32>, vector<512x32xf32>, vector<16x32xf32> -> vector<16x32xf32>
    %167 = arith.addf %154, %166 : vector<16x32xf32>
    %c0_79 = arith.constant 0 : index
    %c0_80 = arith.constant 0 : index
    %c1536 = arith.constant 1536 : index
    %168 = vector.load %arg13[%c0_79, %c0_80, %c1536] : memref<1x32x2048xf32, #tpu.memory_space<vmem>>, vector<1x32x512xf32>
    %169 = vector.shape_cast %168 : vector<1x32x512xf32> to vector<32x512xf32>
    %cst_81 = arith.constant dense<0.000000e+00> : vector<16x512xf32>
    %170 = tpu.matmul %127, %169, %cst_81 {dimension_numbers = #tpu.dot_dimension_numbers<[1], [0], [0], [1], [0, 0, 1, 1], [], []>} : vector<16x32xf32>, vector<32x512xf32>, vector<16x512xf32> -> vector<16x512xf32>
    %c0_82 = arith.constant 0 : index
    %c0_83 = arith.constant 0 : index
    %c1536_84 = arith.constant 1536 : index
    %171 = vector.load %arg14[%c0_82, %c0_83, %c1536_84] : memref<1x1x2048xf32, #tpu.memory_space<vmem>>, vector<1x1x512xf32>
    %172 = vector.shape_cast %171 : vector<1x1x512xf32> to vector<1x512xf32>
    %173 = vector.broadcast %172 : vector<1x512xf32> to vector<16x512xf32>
    %174 = arith.addf %170, %173 : vector<16x512xf32>
    %cst_85 = arith.constant 0.000000e+00 : f32
    %175 = vector.broadcast %cst_85 : f32 to vector<16x512xf32>
    %176 = arith.maximumf %174, %175 : vector<16x512xf32>
    %c0_86 = arith.constant 0 : index
    %c1536_87 = arith.constant 1536 : index
    %c0_88 = arith.constant 0 : index
    %177 = vector.load %arg15[%c0_86, %c1536_87, %c0_88] : memref<1x2048x32xf32, #tpu.memory_space<vmem>>, vector<1x512x32xf32>
    %178 = vector.shape_cast %177 : vector<1x512x32xf32> to vector<512x32xf32>
    %cst_89 = arith.constant dense<0.000000e+00> : vector<16x32xf32>
    %179 = tpu.matmul %176, %178, %cst_89 {dimension_numbers = #tpu.dot_dimension_numbers<[1], [0], [0], [1], [0, 0, 1, 1], [], []>} : vector<16x512xf32>, vector<512x32xf32>, vector<16x32xf32> -> vector<16x32xf32>
    %180 = arith.addf %167, %179 : vector<16x32xf32>
    %181 = arith.addf %103, %180 : vector<16x32xf32>
    %c0_90 = arith.constant 0 : index
    %c0_91 = arith.constant 0 : index
    %c0_92 = arith.constant 0 : index
    %182 = vector.load %arg16[%c0_90, %c0_91, %c0_92] : memref<1x1x32xf32, #tpu.memory_space<vmem>>, vector<1x1x32xf32>
    %183 = vector.shape_cast %182 : vector<1x1x32xf32> to vector<1x32xf32>
    %184 = vector.broadcast %183 : vector<1x32xf32> to vector<16x32xf32>
    %185 = arith.addf %181, %184 : vector<16x32xf32>
    %c0_93 = arith.constant 0 : index
    %c0_94 = arith.constant 0 : index
    %186 = vector.load %arg20[%c0_93, %c0_94] : memref<16x32xf32, #tpu.memory_space<vmem>>, vector<16x32xf32>
    tpu.vector_store %arg20[%c0_93, %c0_94], %185 {strides = array<i32>} : memref<16x32xf32, #tpu.memory_space<vmem>>, vector<16x32xf32>,
    %c1_i32 = arith.constant 1 : i32
    %187 = arith.cmpi eq, %arg0, %c1_i32 : i32
    %188 = arith.extui %187 : i1 to i32
    %c0_i32_95 = arith.constant 0 : i32
    %189 = arith.cmpi ne, %188, %c0_i32_95 : i32
    scf.if %189 {
      %c0_96 = arith.constant 0 : index
      %c0_97 = arith.constant 0 : index
      %190 = vector.load %arg17[%c0_96, %c0_97] : memref<1x32xf32, #tpu.memory_space<vmem>>, vector<1x32xf32>
      %c0_98 = arith.constant 0 : index
      %c0_99 = arith.constant 0 : index
      %191 = vector.load %arg18[%c0_98, %c0_99] : memref<1x32xf32, #tpu.memory_space<vmem>>, vector<1x32xf32>
      %cst_100 = arith.constant dense<0.000000e+00> : vector<16xf32>
      %192 = vector.multi_reduction <add>, %185, %cst_100 [1] : vector<16x32xf32> to vector<16xf32>
      %193 = vector.shape_cast %192 : vector<16xf32> to vector<16x1xf32>
      %cst_101 = arith.constant 3.200000e+01 : f32
      %194 = vector.broadcast %cst_101 : f32 to vector<16x1xf32>
      %195 = arith.divf %193, %194 : vector<16x1xf32>
      %196 = vector.broadcast %195 : vector<16x1xf32> to vector<16x32xf32>
      %197 = arith.subf %185, %196 : vector<16x32xf32>
      %198 = arith.mulf %197, %197 : vector<16x32xf32>
      %cst_102 = arith.constant dense<0.000000e+00> : vector<16xf32>
      %199 = vector.multi_reduction <add>, %198, %cst_102 [1] : vector<16x32xf32> to vector<16xf32>
      %200 = vector.shape_cast %199 : vector<16xf32> to vector<16x1xf32>
      %cst_103 = arith.constant 0.0322580636 : f32
      %201 = vector.broadcast %cst_103 : f32 to vector<16x1xf32>
      %202 = arith.mulf %200, %201 : vector<16x1xf32>
      %203 = vector.broadcast %190 : vector<1x32xf32> to vector<16x32xf32>
      %204 = arith.mulf %203, %197 : vector<16x32xf32>
      %205 = math.sqrt %202 : vector<16x1xf32>
      %cst_104 = arith.constant 9.99999997E-7 : f32
      %206 = vector.broadcast %cst_104 : f32 to vector<16x1xf32>
      %207 = arith.addf %205, %206 : vector<16x1xf32>
      %208 = vector.broadcast %207 : vector<16x1xf32> to vector<16x32xf32>
      %209 = arith.divf %204, %208 : vector<16x32xf32>
      %210 = vector.broadcast %191 : vector<1x32xf32> to vector<16x32xf32>
      %211 = arith.addf %209, %210 : vector<16x32xf32>
      %c0_105 = arith.constant 0 : index
      %c0_106 = arith.constant 0 : index
      %212 = vector.load %arg19[%c0_105, %c0_106] : memref<16x32xf32, #tpu.memory_space<vmem>>, vector<16x32xf32>
      tpu.vector_store %arg19[%c0_105, %c0_106], %211 {strides = array<i32>} : memref<16x32xf32, #tpu.memory_space<vmem>>, vector<16x32xf32>,
    } else {
    }
    return
  }
  func.func @transform_0(%arg0: i32, %arg1: memref<16xi32, #tpu.memory_space<smem>>) -> (i32, i32) {
    %c0_i32 = arith.constant 0 : i32
    %c0_i32_0 = arith.constant 0 : i32
    %c0_i32_1 = arith.constant 0 : i32
    return %c0_i32, %c0_i32_0 : i32, i32
  }
  func.func @transform_1(%arg0: i32, %arg1: memref<16xi32, #tpu.memory_space<smem>>) -> (i32, i32) {
    %c0_i32 = arith.constant 0 : i32
    %c0_i32_0 = arith.constant 0 : i32
    %c0_i32_1 = arith.constant 0 : i32
    return %c0_i32, %c0_i32_0 : i32, i32
  }
  func.func @transform_2(%arg0: i32, %arg1: memref<16xi32, #tpu.memory_space<smem>>) -> (i32, i32, i32) {
    %c0_i32 = arith.constant 0 : i32
    %c0_i32_0 = arith.constant 0 : i32
    %c0_i32_1 = arith.constant 0 : i32
    %c0_i32_2 = arith.constant 0 : i32
    return %c0_i32, %c0_i32_0, %c0_i32_1 : i32, i32, i32
  }
  func.func @transform_3(%arg0: i32, %arg1: memref<16xi32, #tpu.memory_space<smem>>) -> (i32, i32, i32) {
    %c0_i32 = arith.constant 0 : i32
    %c0_i32_0 = arith.constant 0 : i32
    %c0_i32_1 = arith.constant 0 : i32
    return %arg0, %c0_i32, %c0_i32_0 : i32, i32, i32
  }
  func.func @transform_4(%arg0: i32, %arg1: memref<16xi32, #tpu.memory_space<smem>>) -> (i32, i32, i32) {
    %c0_i32 = arith.constant 0 : i32
    %c0_i32_0 = arith.constant 0 : i32
    %c0_i32_1 = arith.constant 0 : i32
    return %arg0, %c0_i32, %c0_i32_0 : i32, i32, i32
  }
  func.func @transform_5(%arg0: i32, %arg1: memref<16xi32, #tpu.memory_space<smem>>) -> (i32, i32, i32) {
    %c0_i32 = arith.constant 0 : i32
    %c0_i32_0 = arith.constant 0 : i32
    %c0_i32_1 = arith.constant 0 : i32
    return %arg0, %c0_i32, %c0_i32_0 : i32, i32, i32
  }
  func.func @transform_6(%arg0: i32, %arg1: memref<16xi32, #tpu.memory_space<smem>>) -> (i32, i32, i32) {
    %c0_i32 = arith.constant 0 : i32
    %c0_i32_0 = arith.constant 0 : i32
    %c0_i32_1 = arith.constant 0 : i32
    return %arg0, %c0_i32, %c0_i32_0 : i32, i32, i32
  }
  func.func @transform_7(%arg0: i32, %arg1: memref<16xi32, #tpu.memory_space<smem>>) -> (i32, i32, i32) {
    %c0_i32 = arith.constant 0 : i32
    %c0_i32_0 = arith.constant 0 : i32
    %c0_i32_1 = arith.constant 0 : i32
    return %arg0, %c0_i32, %c0_i32_0 : i32, i32, i32
  }
  func.func @transform_8(%arg0: i32, %arg1: memref<16xi32, #tpu.memory_space<smem>>) -> (i32, i32, i32) {
    %c0_i32 = arith.constant 0 : i32
    %c0_i32_0 = arith.constant 0 : i32
    %c0_i32_1 = arith.constant 0 : i32
    return %arg0, %c0_i32, %c0_i32_0 : i32, i32, i32
  }
  func.func @transform_9(%arg0: i32, %arg1: memref<16xi32, #tpu.memory_space<smem>>) -> (i32, i32, i32) {
    %c0_i32 = arith.constant 0 : i32
    %c0_i32_0 = arith.constant 0 : i32
    %c0_i32_1 = arith.constant 0 : i32
    return %arg0, %c0_i32, %c0_i32_0 : i32, i32, i32
  }
  func.func @transform_10(%arg0: i32, %arg1: memref<16xi32, #tpu.memory_space<smem>>) -> (i32, i32, i32) {
    %c0_i32 = arith.constant 0 : i32
    %c0_i32_0 = arith.constant 0 : i32
    %c0_i32_1 = arith.constant 0 : i32
    return %arg0, %c0_i32, %c0_i32_0 : i32, i32, i32
  }
  func.func @transform_11(%arg0: i32, %arg1: memref<16xi32, #tpu.memory_space<smem>>) -> (i32, i32, i32) {
    %c0_i32 = arith.constant 0 : i32
    %c0_i32_0 = arith.constant 0 : i32
    %c0_i32_1 = arith.constant 0 : i32
    return %arg0, %c0_i32, %c0_i32_0 : i32, i32, i32
  }
  func.func @transform_12(%arg0: i32, %arg1: memref<16xi32, #tpu.memory_space<smem>>) -> (i32, i32, i32) {
    %c0_i32 = arith.constant 0 : i32
    %c0_i32_0 = arith.constant 0 : i32
    %c0_i32_1 = arith.constant 0 : i32
    return %arg0, %c0_i32, %c0_i32_0 : i32, i32, i32
  }
  func.func @transform_13(%arg0: i32, %arg1: memref<16xi32, #tpu.memory_space<smem>>) -> (i32, i32, i32) {
    %c0_i32 = arith.constant 0 : i32
    %c0_i32_0 = arith.constant 0 : i32
    %c0_i32_1 = arith.constant 0 : i32
    return %arg0, %c0_i32, %c0_i32_0 : i32, i32, i32
  }
  func.func @transform_14(%arg0: i32, %arg1: memref<16xi32, #tpu.memory_space<smem>>) -> (i32, i32, i32) {
    %c0_i32 = arith.constant 0 : i32
    %c0_i32_0 = arith.constant 0 : i32
    %c0_i32_1 = arith.constant 0 : i32
    return %arg0, %c0_i32, %c0_i32_0 : i32, i32, i32
  }
  func.func @transform_15(%arg0: i32, %arg1: memref<16xi32, #tpu.memory_space<smem>>) -> (i32, i32) {
    %c0_i32 = arith.constant 0 : i32
    %c0_i32_0 = arith.constant 0 : i32
    %c0_i32_1 = arith.constant 0 : i32
    return %c0_i32, %c0_i32_0 : i32, i32
  }
  func.func @transform_16(%arg0: i32, %arg1: memref<16xi32, #tpu.memory_space<smem>>) -> (i32, i32) {
    %c0_i32 = arith.constant 0 : i32
    %c0_i32_0 = arith.constant 0 : i32
    %c0_i32_1 = arith.constant 0 : i32
    return %c0_i32, %c0_i32_0 : i32, i32
  }
  func.func @transform_17(%arg0: i32, %arg1: memref<16xi32, #tpu.memory_space<smem>>) -> (i32, i32) {
    %c0_i32 = arith.constant 0 : i32
    %c0_i32_0 = arith.constant 0 : i32
    %c0_i32_1 = arith.constant 0 : i32
    return %c0_i32, %c0_i32_0 : i32, i32
  }
}

</mosaic_0001>

<llo_original>
// kernel: tpu_custom_call.1
$region0: #{tpu_custom_call.1}
  #allocation0 [shape = 'u32[]', space=smem, size = 0x4, offset = 0x4, fixed_abs, tag = 'smem constant byte address 0x4 - core index']
  #allocation1 [shape = 'u32[144,128]{1,0:T(1,128)}', space=vmem, size = 0x12000, scoped, tag = 'internal scratch']
  #allocation2 [shape = 'f32[16,32]{1,0:T(8,128)}', space=vmem, size = 0x2000, scoped, tag = 'scratch operand']
  #allocation3 [shape = 'f32[8,8,8]{2,1,0:T(8,128)}', space=vmem, size = 0x8000, scoped, tag = 'scratch operand']
  #allocation4 [shape = 's32[1]{0}', space=sflag, size = 0x4, scoped, tag = 'scoped memory for tpu_custom_call.1']
  #allocation5 [shape = 'u8[512]{0}', space=smem, size = 0x200, scoped, tag = 'prefetched SMEM operand 0']
  %s0 = inlined_call_operand.vmem [shape: s32[16], index: 0, kind: input, shape index: {}]
  %s1 = inlined_call_operand.vmem [shape: f32[64,32], index: 1, kind: input, shape index: {}]
  %s2 = inlined_call_operand.vmem [shape: f32[64,32], index: 2, kind: input, shape index: {}]
  %s3 = inlined_call_operand.vmem [shape: f32[2,8,8], index: 3, kind: input, shape index: {}]
  %s4 = inlined_call_operand.vmem [shape: f32[2,32,96], index: 4, kind: input, shape index: {}]
  %s5 = inlined_call_operand.vmem [shape: f32[2,1,96], index: 5, kind: input, shape index: {}]
  %s6 = inlined_call_operand.vmem [shape: f32[2,32,32], index: 6, kind: input, shape index: {}]
  %s7 = inlined_call_operand.vmem [shape: f32[2,1,32], index: 7, kind: input, shape index: {}]
  %s8 = inlined_call_operand.vmem [shape: f32[2,1,32], index: 8, kind: input, shape index: {}]
  %s9 = inlined_call_operand.vmem [shape: f32[2,1,32], index: 9, kind: input, shape index: {}]
  %s10 = inlined_call_operand.vmem [shape: f32[2,1,32], index: 10, kind: input, shape index: {}]
  %s11 = inlined_call_operand.vmem [shape: f32[2,1,32], index: 11, kind: input, shape index: {}]
  %s12 = inlined_call_operand.vmem [shape: f32[2,32,2048], index: 12, kind: input, shape index: {}]
  %s13 = inlined_call_operand.vmem [shape: f32[2,1,2048], index: 13, kind: input, shape index: {}]
  %s14 = inlined_call_operand.vmem [shape: f32[2,2048,32], index: 14, kind: input, shape index: {}]
  %s15 = inlined_call_operand.vmem [shape: f32[2,1,32], index: 15, kind: input, shape index: {}]
  %s16 = inlined_call_operand.vmem [shape: f32[1,32], index: 16, kind: input, shape index: {}]
  %s17 = inlined_call_operand.vmem [shape: f32[1,32], index: 17, kind: input, shape index: {}]
  %s18 = inlined_call_operand.hbm [shape: f32[16,32], index: 18, kind: output, shape index: {}]
  %s19 = sld [smem:[#allocation0]]
  $region109: #{tpu_custom_call.1} parent=0
    _
  %s21 = ssub.s32 1, %s19
  %s22 = scalar_select 0, %s21, %s19
  %s23 = sshll.u32 %s0, 4
  %s24 = int_to_ptr.vmem [resolvable:$true] %s23
  %26 = dma.vmem_to_smem %s24, 16, [#allocation5], [#allocation4]
  %27 = dma.done [#allocation4], 16
  %28 = sfence
  $region1: #{tpu_custom_call.1} parent=0
    #allocation6 [shape = 'u8[8192]{0}', space=vmem, size = 0x2000, scoped, tag = 'output window, operand 0, single buffered']
    #allocation7 [shape = 's32[2]{0}', space=sflag, size = 0x8, scoped, tag = 'scoped memory for tpu_custom_call.1']
    %29 = vsyncpa [#allocation7], 0
    loop: start=0, step=1, limit=4
    $region2: #{tpu_custom_call.1} parent=1 // loop_pre_header
      _
    $region3: #{tpu_custom_call.1} parent=1 // loop_header
      %s31 = sphi 0, %s35
      %p32 = scmp.ge.s32.totalorder %s31, 4
      %s39 = sphi 0, %s39
      %s41 = sphi 0, %s39
      %s42 = sphi 0, %s41
      %s56 = sphi 0, %s42
      %s60 = sphi 0, %s60
      %s62 = sphi 0, %s60
      %s63 = sphi 0, %s62
      %s77 = sphi 0, %s63
      %s81 = sphi 0, %s81
      %s83 = sphi 0, %s81
      %s84 = sphi 0, %s83
      %s98 = sphi 0, %s84
      %s104 = sphi 0, %s106
      %s107 = sphi 0, %s104
      %s108 = sphi 0, %s107
      %s124 = sphi 0, %s108
      %s130 = sphi 0, %s132
      %s133 = sphi 0, %s130
      %s134 = sphi 0, %s133
      %s150 = sphi 0, %s134
      %s156 = sphi 0, %s158
      %s159 = sphi 0, %s156
      %s160 = sphi 0, %s159
      %s176 = sphi 0, %s160
      %s182 = sphi 0, %s184
      %s185 = sphi 0, %s182
      %s186 = sphi 0, %s185
      %s202 = sphi 0, %s186
      %s208 = sphi 0, %s210
      %s211 = sphi 0, %s208
      %s212 = sphi 0, %s211
      %s228 = sphi 0, %s212
      %s234 = sphi 0, %s236
      %s237 = sphi 0, %s234
      %s238 = sphi 0, %s237
      %s254 = sphi 0, %s238
      %s260 = sphi 0, %s262
      %s263 = sphi 0, %s260
      %s264 = sphi 0, %s263
      %s280 = sphi 0, %s264
      %s286 = sphi 0, %s288
      %s289 = sphi 0, %s286
      %s290 = sphi 0, %s289
      %s306 = sphi 0, %s290
      %s312 = sphi 0, %s314
      %s315 = sphi 0, %s312
      %s316 = sphi 0, %s315
      %s332 = sphi 0, %s316
      %s338 = sphi 0, %s340
      %s341 = sphi 0, %s338
      %s342 = sphi 0, %s341
      %s358 = sphi 0, %s342
      %s364 = sphi 0, %s366
      %s367 = sphi 0, %s364
      %s368 = sphi 0, %s367
      %s384 = sphi 0, %s368
      %s390 = sphi 0, %s392
      %s393 = sphi 0, %s390
      %s394 = sphi 0, %s393
      %s410 = sphi 0, %s394
      %s414 = sphi 0, %s414
      %s416 = sphi 0, %s414
      %s417 = sphi 0, %s416
      %s431 = sphi 0, %s417
      %s435 = sphi 0, %s435
      %s437 = sphi 0, %s435
      %s438 = sphi 0, %s437
      %s452 = sphi 0, %s438
      %s456 = sphi 0, %s456
      %s458 = sphi 0, %s456
      %s459 = sphi 0, %s458
      %s473 = sphi 0, %s459
    $region4: #{tpu_custom_call.1} parent=1 // loop_header_branch
      %34 = sbr.rel (%p32) target = $region8
    $region5: #{tpu_custom_call.1} parent=1 // loop_body
      %s36 = ssub.s32 %s31, 1
      %s37 = ssub.s32 %s31, 2
      %s38 = sadd.s32 %s31, 1
      %s40 = sadd.s32 %s39, 1
      %p43 = scmp.eq.s32.totalorder %s31, 1
      %p44 = scmp.ne.s32.totalorder %s39, %s41
      %p45 = scmp.eq.s32.totalorder %s31, 0
      %p46 = por %p44, %p45
      %p47 = scmp.ne.s32.totalorder %s39, %s41
      %p48 = scmp.eq.s32.totalorder %s36, 1
      %p49 = por %p47, %p48
      %p50 = scmp.ne.s32.totalorder %s41, %s42
      %p51 = scmp.eq.s32.totalorder %s36, 0
      %p52 = por %p50, %p51
      %p53 = scmp.ne.s32.totalorder %s41, %s42
      %p54 = scmp.eq.s32.totalorder %s37, 1
      %p55 = por %p53, %p54
      %p57 = scmp.ne.s32.totalorder %s42, %s56
      %p58 = scmp.eq.s32.totalorder %s37, 0
      %p59 = por %p57, %p58
      %s61 = sadd.s32 %s60, 1
      %p64 = scmp.eq.s32.totalorder %s31, 1
      %p65 = scmp.ne.s32.totalorder %s60, %s62
      %p66 = scmp.eq.s32.totalorder %s31, 0
      %p67 = por %p65, %p66
      %p68 = scmp.ne.s32.totalorder %s60, %s62
      %p69 = scmp.eq.s32.totalorder %s36, 1
      %p70 = por %p68, %p69
      %p71 = scmp.ne.s32.totalorder %s62, %s63
      %p72 = scmp.eq.s32.totalorder %s36, 0
      %p73 = por %p71, %p72
      %p74 = scmp.ne.s32.totalorder %s62, %s63
      %p75 = scmp.eq.s32.totalorder %s37, 1
      %p76 = por %p74, %p75
      %p78 = scmp.ne.s32.totalorder %s63, %s77
      %p79 = scmp.eq.s32.totalorder %s37, 0
      %p80 = por %p78, %p79
      %s82 = sadd.s32 %s81, 1
      %p85 = scmp.eq.s32.totalorder %s31, 1
      %p86 = scmp.ne.s32.totalorder %s81, %s83
      %p87 = scmp.eq.s32.totalorder %s31, 0
      %p88 = por %p86, %p87
      %p89 = scmp.ne.s32.totalorder %s81, %s83
      %p90 = scmp.eq.s32.totalorder %s36, 1
      %p91 = por %p89, %p90
      %p92 = scmp.ne.s32.totalorder %s83, %s84
      %p93 = scmp.eq.s32.totalorder %s36, 0
      %p94 = por %p92, %p93
      %p95 = scmp.ne.s32.totalorder %s83, %s84
      %p96 = scmp.eq.s32.totalorder %s37, 1
      %p97 = por %p95, %p96
      %p99 = scmp.ne.s32.totalorder %s84, %s98
      %p100 = scmp.eq.s32.totalorder %s37, 0
      %p101 = por %p99, %p100
      %s102 = ssub.s32 %s31, %s38
      %p103 = scmp.eq.s32.totalorder %s102, 0
      %s105 = sadd.s32 %s104, 1
      %s106 = scalar_select %p103, %s104, %s105
      %p109 = pneg %p103
      %p110 = scmp.eq.s32.totalorder %s31, 1
      %p111 = por %p109, %p110
      %p112 = scmp.ne.s32.totalorder %s104, %s107
      %p113 = scmp.eq.s32.totalorder %s31, 0
      %p114 = por %p112, %p113
      %p115 = scmp.ne.s32.totalorder %s104, %s107
      %p116 = scmp.eq.s32.totalorder %s36, 1
      %p117 = por %p115, %p116
      %p118 = scmp.ne.s32.totalorder %s107, %s108
      %p119 = scmp.eq.s32.totalorder %s36, 0
      %p120 = por %p118, %p119
      %p121 = scmp.ne.s32.totalorder %s107, %s108
      %p122 = scmp.eq.s32.totalorder %s37, 1
      %p123 = por %p121, %p122
      %p125 = scmp.ne.s32.totalorder %s108, %s124
      %p126 = scmp.eq.s32.totalorder %s37, 0
      %p127 = por %p125, %p126
      %s128 = ssub.s32 %s31, %s38
      %p129 = scmp.eq.s32.totalorder %s128, 0
      %s131 = sadd.s32 %s130, 1
      %s132 = scalar_select %p129, %s130, %s131
      %p135 = pneg %p129
      %p136 = scmp.eq.s32.totalorder %s31, 1
      %p137 = por %p135, %p136
      %p138 = scmp.ne.s32.totalorder %s130, %s133
      %p139 = scmp.eq.s32.totalorder %s31, 0
      %p140 = por %p138, %p139
      %p141 = scmp.ne.s32.totalorder %s130, %s133
      %p142 = scmp.eq.s32.totalorder %s36, 1
      %p143 = por %p141, %p142
      %p144 = scmp.ne.s32.totalorder %s133, %s134
      %p145 = scmp.eq.s32.totalorder %s36, 0
      %p146 = por %p144, %p145
      %p147 = scmp.ne.s32.totalorder %s133, %s134
      %p148 = scmp.eq.s32.totalorder %s37, 1
      %p149 = por %p147, %p148
      %p151 = scmp.ne.s32.totalorder %s134, %s150
      %p152 = scmp.eq.s32.totalorder %s37, 0
      %p153 = por %p151, %p152
      %s154 = ssub.s32 %s31, %s38
      %p155 = scmp.eq.s32.totalorder %s154, 0
      %s157 = sadd.s32 %s156, 1
      %s158 = scalar_select %p155, %s156, %s157
      %p161 = pneg %p155
      %p162 = scmp.eq.s32.totalorder %s31, 1
      %p163 = por %p161, %p162
      %p164 = scmp.ne.s32.totalorder %s156, %s159
      %p165 = scmp.eq.s32.totalorder %s31, 0
      %p166 = por %p164, %p165
      %p167 = scmp.ne.s32.totalorder %s156, %s159
      %p168 = scmp.eq.s32.totalorder %s36, 1
      %p169 = por %p167, %p168
      %p170 = scmp.ne.s32.totalorder %s159, %s160
      %p171 = scmp.eq.s32.totalorder %s36, 0
      %p172 = por %p170, %p171
      %p173 = scmp.ne.s32.totalorder %s159, %s160
      %p174 = scmp.eq.s32.totalorder %s37, 1
      %p175 = por %p173, %p174
      %p177 = scmp.ne.s32.totalorder %s160, %s176
      %p178 = scmp.eq.s32.totalorder %s37, 0
      %p179 = por %p177, %p178
      %s180 = ssub.s32 %s31, %s38
      %p181 = scmp.eq.s32.totalorder %s180, 0
      %s183 = sadd.s32 %s182, 1
      %s184 = scalar_select %p181, %s182, %s183
      %p187 = pneg %p181
      %p188 = scmp.eq.s32.totalorder %s31, 1
      %p189 = por %p187, %p188
      %p190 = scmp.ne.s32.totalorder %s182, %s185
      %p191 = scmp.eq.s32.totalorder %s31, 0
      %p192 = por %p190, %p191
      %p193 = scmp.ne.s32.totalorder %s182, %s185
      %p194 = scmp.eq.s32.totalorder %s36, 1
      %p195 = por %p193, %p194
      %p196 = scmp.ne.s32.totalorder %s185, %s186
      %p197 = scmp.eq.s32.totalorder %s36, 0
      %p198 = por %p196, %p197
      %p199 = scmp.ne.s32.totalorder %s185, %s186
      %p200 = scmp.eq.s32.totalorder %s37, 1
      %p201 = por %p199, %p200
      %p203 = scmp.ne.s32.totalorder %s186, %s202
      %p204 = scmp.eq.s32.totalorder %s37, 0
      %p205 = por %p203, %p204
      %s206 = ssub.s32 %s31, %s38
      %p207 = scmp.eq.s32.totalorder %s206, 0
      %s209 = sadd.s32 %s208, 1
      %s210 = scalar_select %p207, %s208, %s209
      %p213 = pneg %p207
      %p214 = scmp.eq.s32.totalorder %s31, 1
      %p215 = por %p213, %p214
      %p216 = scmp.ne.s32.totalorder %s208, %s211
      %p217 = scmp.eq.s32.totalorder %s31, 0
      %p218 = por %p216, %p217
      %p219 = scmp.ne.s32.totalorder %s208, %s211
      %p220 = scmp.eq.s32.totalorder %s36, 1
      %p221 = por %p219, %p220
      %p222 = scmp.ne.s32.totalorder %s211, %s212
      %p223 = scmp.eq.s32.totalorder %s36, 0
      %p224 = por %p222, %p223
      %p225 = scmp.ne.s32.totalorder %s211, %s212
      %p226 = scmp.eq.s32.totalorder %s37, 1
      %p227 = por %p225, %p226
      %p229 = scmp.ne.s32.totalorder %s212, %s228
      %p230 = scmp.eq.s32.totalorder %s37, 0
      %p231 = por %p229, %p230
      %s232 = ssub.s32 %s31, %s38
      %p233 = scmp.eq.s32.totalorder %s232, 0
      %s235 = sadd.s32 %s234, 1
      %s236 = scalar_select %p233, %s234, %s235
      %p239 = pneg %p233
      %p240 = scmp.eq.s32.totalorder %s31, 1
      %p241 = por %p239, %p240
      %p242 = scmp.ne.s32.totalorder %s234, %s237
      %p243 = scmp.eq.s32.totalorder %s31, 0
      %p244 = por %p242, %p243
      %p245 = scmp.ne.s32.totalorder %s234, %s237
      %p246 = scmp.eq.s32.totalorder %s36, 1
      %p247 = por %p245, %p246
      %p248 = scmp.ne.s32.totalorder %s237, %s238
      %p249 = scmp.eq.s32.totalorder %s36, 0
      %p250 = por %p248, %p249
      %p251 = scmp.ne.s32.totalorder %s237, %s238
      %p252 = scmp.eq.s32.totalorder %s37, 1
      %p253 = por %p251, %p252
      %p255 = scmp.ne.s32.totalorder %s238, %s254
      %p256 = scmp.eq.s32.totalorder %s37, 0
      %p257 = por %p255, %p256
      %s258 = ssub.s32 %s31, %s38
      %p259 = scmp.eq.s32.totalorder %s258, 0
      %s261 = sadd.s32 %s260, 1
      %s262 = scalar_select %p259, %s260, %s261
      %p265 = pneg %p259
      %p266 = scmp.eq.s32.totalorder %s31, 1
      %p267 = por %p265, %p266
      %p268 = scmp.ne.s32.totalorder %s260, %s263
      %p269 = scmp.eq.s32.totalorder %s31, 0
      %p270 = por %p268, %p269
      %p271 = scmp.ne.s32.totalorder %s260, %s263
      %p272 = scmp.eq.s32.totalorder %s36, 1
      %p273 = por %p271, %p272
      %p274 = scmp.ne.s32.totalorder %s263, %s264
      %p275 = scmp.eq.s32.totalorder %s36, 0
      %p276 = por %p274, %p275
      %p277 = scmp.ne.s32.totalorder %s263, %s264
      %p278 = scmp.eq.s32.totalorder %s37, 1
      %p279 = por %p277, %p278
      %p281 = scmp.ne.s32.totalorder %s264, %s280
      %p282 = scmp.eq.s32.totalorder %s37, 0
      %p283 = por %p281, %p282
      %s284 = ssub.s32 %s31, %s38
      %p285 = scmp.eq.s32.totalorder %s284, 0
      %s287 = sadd.s32 %s286, 1
      %s288 = scalar_select %p285, %s286, %s287
      %p291 = pneg %p285
      %p292 = scmp.eq.s32.totalorder %s31, 1
      %p293 = por %p291, %p292
      %p294 = scmp.ne.s32.totalorder %s286, %s289
      %p295 = scmp.eq.s32.totalorder %s31, 0
      %p296 = por %p294, %p295
      %p297 = scmp.ne.s32.totalorder %s286, %s289
      %p298 = scmp.eq.s32.totalorder %s36, 1
      %p299 = por %p297, %p298
      %p300 = scmp.ne.s32.totalorder %s289, %s290
      %p301 = scmp.eq.s32.totalorder %s36, 0
      %p302 = por %p300, %p301
      %p303 = scmp.ne.s32.totalorder %s289, %s290
      %p304 = scmp.eq.s32.totalorder %s37, 1
      %p305 = por %p303, %p304
      %p307 = scmp.ne.s32.totalorder %s290, %s306
      %p308 = scmp.eq.s32.totalorder %s37, 0
      %p309 = por %p307, %p308
      %s310 = ssub.s32 %s31, %s38
      %p311 = scmp.eq.s32.totalorder %s310, 0
      %s313 = sadd.s32 %s312, 1
      %s314 = scalar_select %p311, %s312, %s313
      %p317 = pneg %p311
      %p318 = scmp.eq.s32.totalorder %s31, 1
      %p319 = por %p317, %p318
      %p320 = scmp.ne.s32.totalorder %s312, %s315
      %p321 = scmp.eq.s32.totalorder %s31, 0
      %p322 = por %p320, %p321
      %p323 = scmp.ne.s32.totalorder %s312, %s315
      %p324 = scmp.eq.s32.totalorder %s36, 1
      %p325 = por %p323, %p324
      %p326 = scmp.ne.s32.totalorder %s315, %s316
      %p327 = scmp.eq.s32.totalorder %s36, 0
      %p328 = por %p326, %p327
      %p329 = scmp.ne.s32.totalorder %s315, %s316
      %p330 = scmp.eq.s32.totalorder %s37, 1
      %p331 = por %p329, %p330
      %p333 = scmp.ne.s32.totalorder %s316, %s332
      %p334 = scmp.eq.s32.totalorder %s37, 0
      %p335 = por %p333, %p334
      %s336 = ssub.s32 %s31, %s38
      %p337 = scmp.eq.s32.totalorder %s336, 0
      %s339 = sadd.s32 %s338, 1
      %s340 = scalar_select %p337, %s338, %s339
      %p343 = pneg %p337
      %p344 = scmp.eq.s32.totalorder %s31, 1
      %p345 = por %p343, %p344
      %p346 = scmp.ne.s32.totalorder %s338, %s341
      %p347 = scmp.eq.s32.totalorder %s31, 0
      %p348 = por %p346, %p347
      %p349 = scmp.ne.s32.totalorder %s338, %s341
      %p350 = scmp.eq.s32.totalorder %s36, 1
      %p351 = por %p349, %p350
      %p352 = scmp.ne.s32.totalorder %s341, %s342
      %p353 = scmp.eq.s32.totalorder %s36, 0
      %p354 = por %p352, %p353
      %p355 = scmp.ne.s32.totalorder %s341, %s342
      %p356 = scmp.eq.s32.totalorder %s37, 1
      %p357 = por %p355, %p356
      %p359 = scmp.ne.s32.totalorder %s342, %s358
      %p360 = scmp.eq.s32.totalorder %s37, 0
      %p361 = por %p359, %p360
      %s362 = ssub.s32 %s31, %s38
      %p363 = scmp.eq.s32.totalorder %s362, 0
      %s365 = sadd.s32 %s364, 1
      %s366 = scalar_select %p363, %s364, %s365
      %p369 = pneg %p363
      %p370 = scmp.eq.s32.totalorder %s31, 1
      %p371 = por %p369, %p370
      %p372 = scmp.ne.s32.totalorder %s364, %s367
      %p373 = scmp.eq.s32.totalorder %s31, 0
      %p374 = por %p372, %p373
      %p375 = scmp.ne.s32.totalorder %s364, %s367
      %p376 = scmp.eq.s32.totalorder %s36, 1
      %p377 = por %p375, %p376
      %p378 = scmp.ne.s32.totalorder %s367, %s368
      %p379 = scmp.eq.s32.totalorder %s36, 0
      %p380 = por %p378, %p379
      %p381 = scmp.ne.s32.totalorder %s367, %s368
      %p382 = scmp.eq.s32.totalorder %s37, 1
      %p383 = por %p381, %p382
      %p385 = scmp.ne.s32.totalorder %s368, %s384
      %p386 = scmp.eq.s32.totalorder %s37, 0
      %p387 = por %p385, %p386
      %s388 = ssub.s32 %s31, %s38
      %p389 = scmp.eq.s32.totalorder %s388, 0
      %s391 = sadd.s32 %s390, 1
      %s392 = scalar_select %p389, %s390, %s391
      %p395 = pneg %p389
      %p396 = scmp.eq.s32.totalorder %s31, 1
      %p397 = por %p395, %p396
      %p398 = scmp.ne.s32.totalorder %s390, %s393
      %p399 = scmp.eq.s32.totalorder %s31, 0
      %p400 = por %p398, %p399
      %p401 = scmp.ne.s32.totalorder %s390, %s393
      %p402 = scmp.eq.s32.totalorder %s36, 1
      %p403 = por %p401, %p402
      %p404 = scmp.ne.s32.totalorder %s393, %s394
      %p405 = scmp.eq.s32.totalorder %s36, 0
      %p406 = por %p404, %p405
      %p407 = scmp.ne.s32.totalorder %s393, %s394
      %p408 = scmp.eq.s32.totalorder %s37, 1
      %p409 = por %p407, %p408
      %p411 = scmp.ne.s32.totalorder %s394, %s410
      %p412 = scmp.eq.s32.totalorder %s37, 0
      %p413 = por %p411, %p412
      %s415 = sadd.s32 %s414, 1
      %p418 = scmp.eq.s32.totalorder %s31, 1
      %p419 = scmp.ne.s32.totalorder %s414, %s416
      %p420 = scmp.eq.s32.totalorder %s31, 0
      %p421 = por %p419, %p420
      %p422 = scmp.ne.s32.totalorder %s414, %s416
      %p423 = scmp.eq.s32.totalorder %s36, 1
      %p424 = por %p422, %p423
      %p425 = scmp.ne.s32.totalorder %s416, %s417
      %p426 = scmp.eq.s32.totalorder %s36, 0
      %p427 = por %p425, %p426
      %p428 = scmp.ne.s32.totalorder %s416, %s417
      %p429 = scmp.eq.s32.totalorder %s37, 1
      %p430 = por %p428, %p429
      %p432 = scmp.ne.s32.totalorder %s417, %s431
      %p433 = scmp.eq.s32.totalorder %s37, 0
      %p434 = por %p432, %p433
      %s436 = sadd.s32 %s435, 1
      %p439 = scmp.eq.s32.totalorder %s31, 1
      %p440 = scmp.ne.s32.totalorder %s435, %s437
      %p441 = scmp.eq.s32.totalorder %s31, 0
      %p442 = por %p440, %p441
      %p443 = scmp.ne.s32.totalorder %s435, %s437
      %p444 = scmp.eq.s32.totalorder %s36, 1
      %p445 = por %p443, %p444
      %p446 = scmp.ne.s32.totalorder %s437, %s438
      %p447 = scmp.eq.s32.totalorder %s36, 0
      %p448 = por %p446, %p447
      %p449 = scmp.ne.s32.totalorder %s437, %s438
      %p450 = scmp.eq.s32.totalorder %s37, 1
      %p451 = por %p449, %p450
      %p453 = scmp.ne.s32.totalorder %s438, %s452
      %p454 = scmp.eq.s32.totalorder %s37, 0
      %p455 = por %p453, %p454
      %s457 = sadd.s32 %s456, 1
      %p460 = scmp.eq.s32.totalorder %s31, 1
      %p461 = scmp.ne.s32.totalorder %s456, %s458
      %p462 = scmp.eq.s32.totalorder %s31, 0
      %p463 = por %p461, %p462
      %p464 = scmp.ne.s32.totalorder %s456, %s458
      %p465 = scmp.eq.s32.totalorder %s36, 1
      %p466 = por %p464, %p465
      %p467 = scmp.ne.s32.totalorder %s458, %s459
      %p468 = scmp.eq.s32.totalorder %s36, 0
      %p469 = por %p467, %p468
      %p470 = scmp.ne.s32.totalorder %s458, %s459
      %p471 = scmp.eq.s32.totalorder %s37, 1
      %p472 = por %p470, %p471
      %p474 = scmp.ne.s32.totalorder %s459, %s473
      %p475 = scmp.eq.s32.totalorder %s37, 0
      %p476 = por %p474, %p475
      %p477 = scmp.le.s32.totalorder 1, %s31
      %p478 = scmp.lt.s32.totalorder %s31, 3
      %p479 = pnand %p477, %p478
      %p480 = pneg %p479
      // Predicated region
      $region9: #{tpu_custom_call.1} parent=5 // pred_check
        _
      $region10: #{tpu_custom_call.1} parent=5 // pred_check_branch
        %482 = sbr.rel (%p479) target = $region12
      $region11: #{tpu_custom_call.1} parent=5 // pred_region
        %s483 = ssub.s32 %s31, 1
        // Predicated region
        $region13: #{tpu_custom_call.1} parent=11 // pred_check
          %p484 = pneg %p52
        $region14: #{tpu_custom_call.1} parent=11 // pred_check_branch
          %486 = sbr.rel (%p484) target = $region16
        $region15: #{tpu_custom_call.1} parent=11 // pred_region
          _
        $region16: #{tpu_custom_call.1} parent=11 // pred_fallthru
          _
        // Predicated region
        $region17: #{tpu_custom_call.1} parent=11 // pred_check
          %p487 = pneg %p73
        $region18: #{tpu_custom_call.1} parent=11 // pred_check_branch
          %489 = sbr.rel (%p487) target = $region20
        $region19: #{tpu_custom_call.1} parent=11 // pred_region
          _
        $region20: #{tpu_custom_call.1} parent=11 // pred_fallthru
          _
        // Predicated region
        $region21: #{tpu_custom_call.1} parent=11 // pred_check
          %p490 = pneg %p94
        $region22: #{tpu_custom_call.1} parent=11 // pred_check_branch
          %492 = sbr.rel (%p490) target = $region24
        $region23: #{tpu_custom_call.1} parent=11 // pred_region
          _
        $region24: #{tpu_custom_call.1} parent=11 // pred_fallthru
          _
        // Predicated region
        $region25: #{tpu_custom_call.1} parent=11 // pred_check
          %p493 = pneg %p427
        $region26: #{tpu_custom_call.1} parent=11 // pred_check_branch
          %495 = sbr.rel (%p493) target = $region28
        $region27: #{tpu_custom_call.1} parent=11 // pred_region
          _
        $region28: #{tpu_custom_call.1} parent=11 // pred_fallthru
          _
        // Predicated region
        $region29: #{tpu_custom_call.1} parent=11 // pred_check
          %p496 = pneg %p448
        $region30: #{tpu_custom_call.1} parent=11 // pred_check_branch
          %498 = sbr.rel (%p496) target = $region32
        $region31: #{tpu_custom_call.1} parent=11 // pred_region
          _
        $region32: #{tpu_custom_call.1} parent=11 // pred_fallthru
          _
      $region12: #{tpu_custom_call.1} parent=5 // pred_fallthru
        _
      %p499 = scmp.lt.s32.totalorder %s31, 2
      // Predicated region
      $region33: #{tpu_custom_call.1} parent=5 // pred_check
        %p500 = pneg %p499
      $region34: #{tpu_custom_call.1} parent=5 // pred_check_branch
        %502 = sbr.rel (%p500) target = $region36
      $region35: #{tpu_custom_call.1} parent=5 // pred_region
        // Predicated region
        $region37: #{tpu_custom_call.1} parent=35 // pred_check
          %p503 = pneg %p114
        $region38: #{tpu_custom_call.1} parent=35 // pred_check_branch
          %505 = sbr.rel (%p503) target = $region40
        $region39: #{tpu_custom_call.1} parent=35 // pred_region
          %p506 = scmp.lt.s32.totalorder %s31, 1
          %s507 = scalar_select %p506, %s31, 1
          %s508 = smul.addr %s507, 4
          %s509 = smul.addr %s508, 8
          %s510 = scalar_lea.vmem %s4, %s509
        $region40: #{tpu_custom_call.1} parent=35 // pred_fallthru
          _
        // Predicated region
        $region41: #{tpu_custom_call.1} parent=35 // pred_check
          %p511 = pneg %p140
        $region42: #{tpu_custom_call.1} parent=35 // pred_check_branch
          %513 = sbr.rel (%p511) target = $region44
        $region43: #{tpu_custom_call.1} parent=35 // pred_region
          %p514 = scmp.lt.s32.totalorder %s31, 1
          %s515 = scalar_select %p514, %s31, 1
          %s516 = scalar_lea.vmem %s5, %s515
        $region44: #{tpu_custom_call.1} parent=35 // pred_fallthru
          _
        // Predicated region
        $region45: #{tpu_custom_call.1} parent=35 // pred_check
          %p517 = pneg %p166
        $region46: #{tpu_custom_call.1} parent=35 // pred_check_branch
          %519 = sbr.rel (%p517) target = $region48
        $region47: #{tpu_custom_call.1} parent=35 // pred_region
          %p520 = scmp.lt.s32.totalorder %s31, 1
          %s521 = scalar_select %p520, %s31, 1
          %s522 = smul.addr %s521, 4
          %s523 = smul.addr %s522, 8
          %s524 = scalar_lea.vmem %s6, %s523
        $region48: #{tpu_custom_call.1} parent=35 // pred_fallthru
          _
        // Predicated region
        $region49: #{tpu_custom_call.1} parent=35 // pred_check
          %p525 = pneg %p192
        $region50: #{tpu_custom_call.1} parent=35 // pred_check_branch
          %527 = sbr.rel (%p525) target = $region52
        $region51: #{tpu_custom_call.1} parent=35 // pred_region
          %p528 = scmp.lt.s32.totalorder %s31, 1
          %s529 = scalar_select %p528, %s31, 1
          %s530 = scalar_lea.vmem %s7, %s529
        $region52: #{tpu_custom_call.1} parent=35 // pred_fallthru
          _
        // Predicated region
        $region53: #{tpu_custom_call.1} parent=35 // pred_check
          %p531 = pneg %p218
        $region54: #{tpu_custom_call.1} parent=35 // pred_check_branch
          %533 = sbr.rel (%p531) target = $region56
        $region55: #{tpu_custom_call.1} parent=35 // pred_region
          %p534 = scmp.lt.s32.totalorder %s31, 1
          %s535 = scalar_select %p534, %s31, 1
          %s536 = scalar_lea.vmem %s8, %s535
        $region56: #{tpu_custom_call.1} parent=35 // pred_fallthru
          _
        // Predicated region
        $region57: #{tpu_custom_call.1} parent=35 // pred_check
          %p537 = pneg %p244
        $region58: #{tpu_custom_call.1} parent=35 // pred_check_branch
          %539 = sbr.rel (%p537) target = $region60
        $region59: #{tpu_custom_call.1} parent=35 // pred_region
          %p540 = scmp.lt.s32.totalorder %s31, 1
          %s541 = scalar_select %p540, %s31, 1
          %s542 = scalar_lea.vmem %s9, %s541
        $region60: #{tpu_custom_call.1} parent=35 // pred_fallthru
          _
        // Predicated region
        $region61: #{tpu_custom_call.1} parent=35 // pred_check
          %p543 = pneg %p270
        $region62: #{tpu_custom_call.1} parent=35 // pred_check_branch
          %545 = sbr.rel (%p543) target = $region64
        $region63: #{tpu_custom_call.1} parent=35 // pred_region
          %p546 = scmp.lt.s32.totalorder %s31, 1
          %s547 = scalar_select %p546, %s31, 1
          %s548 = scalar_lea.vmem %s10, %s547
        $region64: #{tpu_custom_call.1} parent=35 // pred_fallthru
          _
        // Predicated region
        $region65: #{tpu_custom_call.1} parent=35 // pred_check
          %p549 = pneg %p296
        $region66: #{tpu_custom_call.1} parent=35 // pred_check_branch
          %551 = sbr.rel (%p549) target = $region68
        $region67: #{tpu_custom_call.1} parent=35 // pred_region
          %p552 = scmp.lt.s32.totalorder %s31, 1
          %s553 = scalar_select %p552, %s31, 1
          %s554 = scalar_lea.vmem %s11, %s553
        $region68: #{tpu_custom_call.1} parent=35 // pred_fallthru
          _
        // Predicated region
        $region69: #{tpu_custom_call.1} parent=35 // pred_check
          %p555 = pneg %p322
        $region70: #{tpu_custom_call.1} parent=35 // pred_check_branch
          %557 = sbr.rel (%p555) target = $region72
        $region71: #{tpu_custom_call.1} parent=35 // pred_region
          %p558 = scmp.lt.s32.totalorder %s31, 1
          %s559 = scalar_select %p558, %s31, 1
          %s560 = smul.addr %s559, 64
          %s561 = smul.addr %s560, 8
          %s562 = scalar_lea.vmem %s12, %s561
        $region72: #{tpu_custom_call.1} parent=35 // pred_fallthru
          _
        // Predicated region
        $region73: #{tpu_custom_call.1} parent=35 // pred_check
          %p563 = pneg %p348
        $region74: #{tpu_custom_call.1} parent=35 // pred_check_branch
          %565 = sbr.rel (%p563) target = $region76
        $region75: #{tpu_custom_call.1} parent=35 // pred_region
          %p566 = scmp.lt.s32.totalorder %s31, 1
          %s567 = scalar_select %p566, %s31, 1
          %s568 = smul.addr %s567, 16
          %s569 = scalar_lea.vmem %s13, %s568
        $region76: #{tpu_custom_call.1} parent=35 // pred_fallthru
          _
        // Predicated region
        $region77: #{tpu_custom_call.1} parent=35 // pred_check
          %p570 = pneg %p374
        $region78: #{tpu_custom_call.1} parent=35 // pred_check_branch
          %572 = sbr.rel (%p570) target = $region80
        $region79: #{tpu_custom_call.1} parent=35 // pred_region
          %p573 = scmp.lt.s32.totalorder %s31, 1
          %s574 = scalar_select %p573, %s31, 1
          %s575 = smul.addr %s574, 256
          %s576 = smul.addr %s575, 8
          %s577 = scalar_lea.vmem %s14, %s576
        $region80: #{tpu_custom_call.1} parent=35 // pred_fallthru
          _
        // Predicated region
        $region81: #{tpu_custom_call.1} parent=35 // pred_check
          %p578 = pneg %p400
        $region82: #{tpu_custom_call.1} parent=35 // pred_check_branch
          %580 = sbr.rel (%p578) target = $region84
        $region83: #{tpu_custom_call.1} parent=35 // pred_region
          %p581 = scmp.lt.s32.totalorder %s31, 1
          %s582 = scalar_select %p581, %s31, 1
          %s583 = scalar_lea.vmem %s15, %s582
        $region84: #{tpu_custom_call.1} parent=35 // pred_fallthru
          _
      $region36: #{tpu_custom_call.1} parent=5 // pred_fallthru
        _
      %p584 = scmp.le.s32.totalorder 1, %s31
      %p585 = scmp.lt.s32.totalorder %s31, 3
      %p586 = pnand %p584, %p585
      %p587 = pneg %p586
      // Predicated region
      $region85: #{tpu_custom_call.1} parent=5 // pred_check
        _
      $region86: #{tpu_custom_call.1} parent=5 // pred_check_branch
        %589 = sbr.rel (%p586) target = $region88
      $region87: #{tpu_custom_call.1} parent=5 // pred_region
        %s590 = ssub.s32 %s31, 1
        %p591 = pneg %p52
        %p592 = pneg %p49
        %p593 = pneg %p73
        %p594 = pneg %p70
        %p595 = pneg %p94
        %p596 = pneg %p91
        %p597 = scmp.lt.s32.totalorder %s36, 1
        %s598 = scalar_select %p597, %s36, 1
        %s599 = smul.addr %s598, 4
        %s600 = smul.addr %s599, 8
        %s601 = scalar_lea.vmem %s4, %s600
        %p602 = pneg %p120
        %p603 = pneg %p117
        %p604 = scmp.lt.s32.totalorder %s36, 1
        %s605 = scalar_select %p604, %s36, 1
        %s606 = scalar_lea.vmem %s5, %s605
        %p607 = pneg %p146
        %p608 = pneg %p143
        %p609 = scmp.lt.s32.totalorder %s36, 1
        %s610 = scalar_select %p609, %s36, 1
        %s611 = smul.addr %s610, 4
        %s612 = smul.addr %s611, 8
        %s613 = scalar_lea.vmem %s6, %s612
        %p614 = pneg %p172
        %p615 = pneg %p169
        %p616 = scmp.lt.s32.totalorder %s36, 1
        %s617 = scalar_select %p616, %s36, 1
        %s618 = scalar_lea.vmem %s7, %s617
        %p619 = pneg %p198
        %p620 = pneg %p195
        %p621 = scmp.lt.s32.totalorder %s36, 1
        %s622 = scalar_select %p621, %s36, 1
        %s623 = scalar_lea.vmem %s8, %s622
        %p624 = pneg %p224
        %p625 = pneg %p221
        %p626 = scmp.lt.s32.totalorder %s36, 1
        %s627 = scalar_select %p626, %s36, 1
        %s628 = scalar_lea.vmem %s9, %s627
        %p629 = pneg %p250
        %p630 = pneg %p247
        %p631 = scmp.lt.s32.totalorder %s36, 1
        %s632 = scalar_select %p631, %s36, 1
        %s633 = scalar_lea.vmem %s10, %s632
        %p634 = pneg %p276
        %p635 = pneg %p273
        %p636 = scmp.lt.s32.totalorder %s36, 1
        %s637 = scalar_select %p636, %s36, 1
        %s638 = scalar_lea.vmem %s11, %s637
        %p639 = pneg %p302
        %p640 = pneg %p299
        %p641 = scmp.lt.s32.totalorder %s36, 1
        %s642 = scalar_select %p641, %s36, 1
        %s643 = smul.addr %s642, 64
        %s644 = smul.addr %s643, 8
        %s645 = scalar_lea.vmem %s12, %s644
        %p646 = pneg %p328
        %p647 = pneg %p325
        %p648 = scmp.lt.s32.totalorder %s36, 1
        %s649 = scalar_select %p648, %s36, 1
        %s650 = smul.addr %s649, 16
        %s651 = scalar_lea.vmem %s13, %s650
        %p652 = pneg %p354
        %p653 = pneg %p351
        %p654 = scmp.lt.s32.totalorder %s36, 1
        %s655 = scalar_select %p654, %s36, 1
        %s656 = smul.addr %s655, 256
        %s657 = smul.addr %s656, 8
        %s658 = scalar_lea.vmem %s14, %s657
        %p659 = pneg %p380
        %p660 = pneg %p377
        %p661 = scmp.lt.s32.totalorder %s36, 1
        %s662 = scalar_select %p661, %s36, 1
        %s663 = scalar_lea.vmem %s15, %s662
        %p664 = pneg %p406
        %p665 = pneg %p403
        %p666 = pneg %p427
        %p667 = pneg %p424
        %p668 = pneg %p448
        %p669 = pneg %p445
        %p670 = pneg %p469
        %p671 = pneg %p466
        %p672 = scmp.lt.s32.totalorder %s36, 1
        %s673 = scalar_select %p672, %s36, 1
        %s674 = smul.addr %s673, 4
        %s675 = smul.addr %s674, 8
        %s676 = scalar_lea.vmem %s4, %s675
        %p677 = scmp.lt.s32.totalorder %s36, 1
        %s678 = scalar_select %p677, %s36, 1
        %s679 = scalar_lea.vmem %s5, %s678
        %p680 = scmp.lt.s32.totalorder %s36, 1
        %s681 = scalar_select %p680, %s36, 1
        %s682 = smul.addr %s681, 4
        %s683 = smul.addr %s682, 8
        %s684 = scalar_lea.vmem %s6, %s683
        %p685 = scmp.lt.s32.totalorder %s36, 1
        %s686 = scalar_select %p685, %s36, 1
        %s687 = scalar_lea.vmem %s7, %s686
        %p688 = scmp.lt.s32.totalorder %s36, 1
        %s689 = scalar_select %p688, %s36, 1
        %s690 = scalar_lea.vmem %s8, %s689
        %p691 = scmp.lt.s32.totalorder %s36, 1
        %s692 = scalar_select %p691, %s36, 1
        %s693 = scalar_lea.vmem %s9, %s692
        %p694 = scmp.lt.s32.totalorder %s36, 1
        %s695 = scalar_select %p694, %s36, 1
        %s696 = scalar_lea.vmem %s10, %s695
        %p697 = scmp.lt.s32.totalorder %s36, 1
        %s698 = scalar_select %p697, %s36, 1
        %s699 = scalar_lea.vmem %s11, %s698
        %p700 = scmp.lt.s32.totalorder %s36, 1
        %s701 = scalar_select %p700, %s36, 1
        %s702 = smul.addr %s701, 64
        %s703 = smul.addr %s702, 8
        %s704 = scalar_lea.vmem %s12, %s703
        %p705 = scmp.lt.s32.totalorder %s36, 1
        %s706 = scalar_select %p705, %s36, 1
        %s707 = smul.addr %s706, 16
        %s708 = scalar_lea.vmem %s13, %s707
        %p709 = scmp.lt.s32.totalorder %s36, 1
        %s710 = scalar_select %p709, %s36, 1
        %s711 = smul.addr %s710, 256
        %s712 = smul.addr %s711, 8
        %s713 = scalar_lea.vmem %s14, %s712
        %p714 = scmp.lt.s32.totalorder %s36, 1
        %s715 = scalar_select %p714, %s36, 1
        %s716 = scalar_lea.vmem %s15, %s715
        %p717 = scmp.eq.s32.totalorder %s36, 0
        // Predicated region
        $region89: #{tpu_custom_call.1} parent=87 // pred_check
          %p718 = pneg %p717
        $region90: #{tpu_custom_call.1} parent=87 // pred_check_branch
          %720 = sbr.rel (%p718) target = $region92
        $region91: #{tpu_custom_call.1} parent=87 // pred_region
          %v721 = vld [vmem:[%s3] sm:$0xff]
          %v722 = vld [vmem:[%s3 + $0x8] sm:$0xff]
          %vm723 = vcmp.eq.f32.partialorder %v721, 0.0
          %vm724 = vcmp.eq.f32.partialorder %v722, 0.0
          %v725 = vsel %vm723, -1e+09, 0.0
          %v726 = vsel %vm724, -1e+09, 0.0
          %vm727 = vcmask 64512
          %728 = vst.msk [vmem:[#allocation3] sm:$0xff] %vm727, %v725
          %729 = vst.msk [vmem:[#allocation3 + $0x8] sm:$0xff] %vm727, %v726
          %730 = vst.msk [vmem:[#allocation3 + $0x10] sm:$0xff] %vm727, %v725
          %731 = vst.msk [vmem:[#allocation3 + $0x18] sm:$0xff] %vm727, %v726
          %732 = vst.msk [vmem:[#allocation3 + $0x20] sm:$0xff] %vm727, %v725
          %733 = vst.msk [vmem:[#allocation3 + $0x28] sm:$0xff] %vm727, %v726
          %734 = vst.msk [vmem:[#allocation3 + $0x30] sm:$0xff] %vm727, %v725
          %735 = vst.msk [vmem:[#allocation3 + $0x38] sm:$0xff] %vm727, %v726
          %s736 = sld [smem:[#allocation5]]
          %s737 = scalar_lea.vmem %s1, %s736
          %v738 = vld [vmem:[%s737] sm:$0x1]
          %v739 = vld [vmem:[%s2] sm:$0x1]
          %v740 = vadd.f32 %v738, %v739
          %vm741 = vcmask 253952
          %742 = vst.msk [vmem:[#allocation2] sm:$0x1] %vm741, %v740
          %s743 = sld [smem:[#allocation5 + $0x1]]
          %s744 = scalar_lea.vmem %s1, %s743
          %v745 = vld [vmem:[%s744] sm:$0x1]
          %v746 = vld [vmem:[%s2 + $0x1] sm:$0x1]
          %v747 = vadd.f32 %v745, %v746
          %748 = vst.msk [vmem:[#allocation2 + $0x1] sm:$0x1] %vm741, %v747
          %s749 = sld [smem:[#allocation5 + $0x2]]
          %s750 = scalar_lea.vmem %s1, %s749
          %v751 = vld [vmem:[%s750] sm:$0x1]
          %v752 = vld [vmem:[%s2 + $0x2] sm:$0x1]
          %v753 = vadd.f32 %v751, %v752
          %754 = vst.msk [vmem:[#allocation2 + $0x2] sm:$0x1] %vm741, %v753
          %s755 = sld [smem:[#allocation5 + $0x3]]
          %s756 = scalar_lea.vmem %s1, %s755
          %v757 = vld [vmem:[%s756] sm:$0x1]
          %v758 = vld [vmem:[%s2 + $0x3] sm:$0x1]
          %v759 = vadd.f32 %v757, %v758
          %760 = vst.msk [vmem:[#allocation2 + $0x3] sm:$0x1] %vm741, %v759
          %s761 = sld [smem:[#allocation5 + $0x4]]
          %s762 = scalar_lea.vmem %s1, %s761
          %v763 = vld [vmem:[%s762] sm:$0x1]
          %v764 = vld [vmem:[%s2 + $0x4] sm:$0x1]
          %v765 = vadd.f32 %v763, %v764
          %766 = vst.msk [vmem:[#allocation2 + $0x4] sm:$0x1] %vm741, %v765
          %s767 = sld [smem:[#allocation5 + $0x5]]
          %s768 = scalar_lea.vmem %s1, %s767
          %v769 = vld [vmem:[%s768] sm:$0x1]
          %v770 = vld [vmem:[%s2 + $0x5] sm:$0x1]
          %v771 = vadd.f32 %v769, %v770
          %772 = vst.msk [vmem:[#allocation2 + $0x5] sm:$0x1] %vm741, %v771
          %s773 = sld [smem:[#allocation5 + $0x6]]
          %s774 = scalar_lea.vmem %s1, %s773
          %v775 = vld [vmem:[%s774] sm:$0x1]
          %v776 = vld [vmem:[%s2 + $0x6] sm:$0x1]
          %v777 = vadd.f32 %v775, %v776
          %778 = vst.msk [vmem:[#allocation2 + $0x6] sm:$0x1] %vm741, %v777
          %s779 = sld [smem:[#allocation5 + $0x7]]
          %s780 = scalar_lea.vmem %s1, %s779
          %v781 = vld [vmem:[%s780] sm:$0x1]
          %v782 = vld [vmem:[%s2 + $0x7] sm:$0x1]
          %v783 = vadd.f32 %v781, %v782
          %784 = vst.msk [vmem:[#allocation2 + $0x7] sm:$0x1] %vm741, %v783
          %s785 = sld [smem:[#allocation5 + $0x8]]
          %s786 = scalar_lea.vmem %s1, %s785
          %v787 = vld [vmem:[%s786] sm:$0x1]
          %v788 = vld [vmem:[%s2] sm:$0x1]
          %v789 = vadd.f32 %v787, %v788
          %790 = vst.msk [vmem:[#allocation2 + $0x8] sm:$0x1] %vm741, %v789
          %s791 = sld [smem:[#allocation5 + $0x9]]
          %s792 = scalar_lea.vmem %s1, %s791
          %v793 = vld [vmem:[%s792] sm:$0x1]
          %v794 = vld [vmem:[%s2 + $0x1] sm:$0x1]
          %v795 = vadd.f32 %v793, %v794
          %796 = vst.msk [vmem:[#allocation2 + $0x9] sm:$0x1] %vm741, %v795
          %s797 = sld [smem:[#allocation5 + $0xa]]
          %s798 = scalar_lea.vmem %s1, %s797
          %v799 = vld [vmem:[%s798] sm:$0x1]
          %v800 = vld [vmem:[%s2 + $0x2] sm:$0x1]
          %v801 = vadd.f32 %v799, %v800
          %802 = vst.msk [vmem:[#allocation2 + $0xa] sm:$0x1] %vm741, %v801
          %s803 = sld [smem:[#allocation5 + $0xb]]
          %s804 = scalar_lea.vmem %s1, %s803
          %v805 = vld [vmem:[%s804] sm:$0x1]
          %v806 = vld [vmem:[%s2 + $0x3] sm:$0x1]
          %v807 = vadd.f32 %v805, %v806
          %808 = vst.msk [vmem:[#allocation2 + $0xb] sm:$0x1] %vm741, %v807
          %s809 = sld [smem:[#allocation5 + $0xc]]
          %s810 = scalar_lea.vmem %s1, %s809
          %v811 = vld [vmem:[%s810] sm:$0x1]
          %v812 = vld [vmem:[%s2 + $0x4] sm:$0x1]
          %v813 = vadd.f32 %v811, %v812
          %814 = vst.msk [vmem:[#allocation2 + $0xc] sm:$0x1] %vm741, %v813
          %s815 = sld [smem:[#allocation5 + $0xd]]
          %s816 = scalar_lea.vmem %s1, %s815
          %v817 = vld [vmem:[%s816] sm:$0x1]
          %v818 = vld [vmem:[%s2 + $0x5] sm:$0x1]
          %v819 = vadd.f32 %v817, %v818
          %820 = vst.msk [vmem:[#allocation2 + $0xd] sm:$0x1] %vm741, %v819
          %s821 = sld [smem:[#allocation5 + $0xe]]
          %s822 = scalar_lea.vmem %s1, %s821
          %v823 = vld [vmem:[%s822] sm:$0x1]
          %v824 = vld [vmem:[%s2 + $0x6] sm:$0x1]
          %v825 = vadd.f32 %v823, %v824
          %826 = vst.msk [vmem:[#allocation2 + $0xe] sm:$0x1] %vm741, %v825
          %s827 = sld [smem:[#allocation5 + $0xf]]
          %s828 = scalar_lea.vmem %s1, %s827
          %v829 = vld [vmem:[%s828] sm:$0x1]
          %v830 = vld [vmem:[%s2 + $0x7] sm:$0x1]
          %v831 = vadd.f32 %v829, %v830
          %832 = vst.msk [vmem:[#allocation2 + $0xf] sm:$0x1] %vm741, %v831
        $region92: #{tpu_custom_call.1} parent=87 // pred_fallthru
          _
        %v833 = vld [vmem:[#allocation2] sm:$0xff]
        %v834 = vld [vmem:[#allocation2 + $0x8] sm:$0xff]
        %v835 = vld [vmem:[#allocation3] sm:$0xff]
        %v836 = vld [vmem:[#allocation3 + $0x8] sm:$0xff]
        %v837 = vld [vmem:[#allocation3 + $0x10] sm:$0xff]
        %v838 = vld [vmem:[#allocation3 + $0x18] sm:$0xff]
        %v839 = vld [vmem:[#allocation3 + $0x20] sm:$0xff]
        %v840 = vld [vmem:[#allocation3 + $0x28] sm:$0xff]
        %v841 = vld [vmem:[#allocation3 + $0x30] sm:$0xff]
        %v842 = vld [vmem:[#allocation3 + $0x38] sm:$0xff]
        %v843 = vld [vmem:[%s690] sm:$0x1]
        %v844 = vld [vmem:[%s693] sm:$0x1]
        %vm845 = vcmask 261120
        %v846 = vsel %vm845, %v833, 0.0
        %847 = vadd.xlane.f32.xlu0 %v846
        %v848 = vpop.xlane.xlu0 %847
        %v849 = vsel %vm845, %v834, 0.0
        %850 = vadd.xlane.f32.xlu0 %v849
        %v851 = vpop.xlane.xlu0 %850
        %v852 = vrcp.pop 32.0
        %v853 = vmul.f32 %v848, %v852
        %v854 = vmul.f32 %v851, %v852
        %v855 = vsub.f32 %v833, %v853
        %v856 = vsub.f32 %v834, %v854
        %v857 = vmul.f32 %v855, %v855
        %v858 = vmul.f32 %v856, %v856
        %v859 = vsel %vm845, %v857, 0.0
        %860 = vadd.xlane.f32.xlu0 %v859
        %v861 = vpop.xlane.xlu0 %860
        %v862 = vsel %vm845, %v858, 0.0
        %863 = vadd.xlane.f32.xlu0 %v862
        %v864 = vpop.xlane.xlu0 %863
        %v865 = vmul.f32 %v861, 0.032258064
        %v866 = vmul.f32 %v864, 0.032258064
        %v868 = vlaneseq
        %v869 = vshrl.u32 %v868, 7
        %v870 = vsub.s32 0, %v869
        %v871 = vrot.slane %v843, %v870
        %v873 = vmul.f32 %v871, %v855
        %v874 = vmul.f32 %v871, %v856
        %v875 = vrsqrt.pop %v865
        %v876 = vmul.f32 %v865, %v875
        %vm877 = vcmp.eq.f32.partialorder %v865, inf
        %v878 = vsel %vm877, %v865, %v876
        %vm879 = vcmp.eq.f32.partialorder %v865, 0.0
        %v880 = vand.u32 %v865, 2147483648
        %v881 = vsel %vm879, %v880, %v878
        %v882 = vrsqrt.pop %v866
        %v883 = vmul.f32 %v866, %v882
        %vm884 = vcmp.eq.f32.partialorder %v866, inf
        %v885 = vsel %vm884, %v866, %v883
        %vm886 = vcmp.eq.f32.partialorder %v866, 0.0
        %v887 = vand.u32 %v866, 2147483648
        %v888 = vsel %vm886, %v887, %v885
        %v889 = vadd.f32 %v881, 1e-06
        %v890 = vadd.f32 %v888, 1e-06
        %v891 = vrcp.pop %v889
        %v892 = vmul.f32 %v873, %v891
        %v893 = vrcp.pop %v890
        %v894 = vmul.f32 %v874, %v893
        %v896 = vlaneseq
        %v897 = vshrl.u32 %v896, 7
        %v898 = vsub.s32 0, %v897
        %v899 = vrot.slane %v844, %v898
        %v901 = vadd.f32 %v892, %v899
        %v902 = vadd.f32 %v894, %v899
        %v903 = vld [vmem:[%s676] sm:$0xff]
        %v904 = vld [vmem:[%s676 + $0x8] sm:$0xff]
        %v905 = vld [vmem:[%s676 + $0x10] sm:$0xff]
        %v906 = vld [vmem:[%s676 + $0x18] sm:$0xff]
        %v907 = vld [vmem:[%s679] sm:$0x1]
        %v909 = vlaneseq
        %v910 = vshrl.u32 %v909, 7
        %v911 = vsub.s32 0, %v910
        %v912 = vrot.slane %v907, %v911
        %v915 = vsel %vm845, %v901, 0
        %v918 = vsel %vm845, %v902, 0
        %920 = vmatprep.subr.mxu0 0.0
        %921 = vmatpush1.msra.mxu0 %v903
        %922 = vmatprep.subr.mxu0 0.0
        %923 = vmatpush1.msra.mxu0 %v904
        %924 = vmatprep.subr.mxu0 0.0
        %925 = vmatpush1.msra.mxu0 %v905
        %926 = vmatprep.subr.mxu0 0.0
        %927 = vmatpush1.msra.mxu0 %v906
        %928 = vmatprep.subr.mxu0 0.0
        %929 = vmatpush1.msra.mxu0 0.0
        %930 = vmatprep.subr.mxu0 0.0
        %931 = vmatpush1.msra.mxu0 0.0
        %932 = vmatprep.subr.mxu0 0.0
        %933 = vmatpush1.msra.mxu0 0.0
        %934 = vmatprep.subr.mxu0 0.0
        %935 = vmatpush1.msra.mxu0 0.0
        %936 = vmatprep.subr.mxu0 0.0
        %937 = vmatpush1.msra.mxu0 0.0
        %938 = vmatprep.subr.mxu0 0.0
        %939 = vmatpush1.msra.mxu0 0.0
        %940 = vmatprep.subr.mxu0 0.0
        %941 = vmatpush1.msra.mxu0 0.0
        %942 = vmatprep.subr.mxu0 0.0
        %943 = vmatpush1.msra.mxu0 0.0
        %944 = vmatprep.subr.mxu0 0.0
        %945 = vmatpush1.msra.mxu0 0.0
        %946 = vmatprep.subr.mxu0 0.0
        %947 = vmatpush1.msra.mxu0 0.0
        %948 = vmatprep.subr.mxu0 0.0
        %949 = vmatpush1.msra.mxu0 0.0
        %950 = vmatprep.subr.mxu0 0.0
        %951 = vmatpush1.msra.mxu0 0.0
        %952 = vmatprep.subr.mxu0 0.0
        %953 = vmatpush1.msra.mxu0 0.0
        %954 = vmatprep.subr.mxu0 0.0
        %955 = vmatpush1.msra.mxu0 0.0
        %956 = vmatprep.subr.mxu0 0.0
        %957 = vmatpush1.msra.mxu0 0.0
        %958 = vmatprep.subr.mxu0 0.0
        %959 = vmatpush1.msra.mxu0 0.0
        %960 = vmatprep.subr.mxu0 0.0
        %961 = vmatpush1.msra.mxu0 0.0
        %962 = vmatprep.subr.mxu0 0.0
        %963 = vmatpush1.msra.mxu0 0.0
        %964 = vmatprep.subr.mxu0 0.0
        %965 = vmatpush1.msra.mxu0 0.0
        %966 = vmatprep.subr.mxu0 0.0
        %967 = vmatpush1.msra.mxu0 0.0
        %968 = vmatprep.subr.mxu0 0.0
        %969 = vmatpush1.msra.mxu0 0.0
        %970 = vmatprep.subr.mxu0 0.0
        %971 = vmatpush1.msra.mxu0 0.0
        %972 = vmatprep.subr.mxu0 0.0
        %973 = vmatpush1.msra.mxu0 0.0
        %974 = vmatprep.subr.mxu0 0.0
        %975 = vmatpush1.msra.mxu0 0.0
        %976 = vmatprep.subr.mxu0 0.0
        %977 = vmatpush1.msra.mxu0 0.0
        %978 = vmatprep.subr.mxu0 0.0
        %979 = vmatpush1.msra.mxu0 0.0
        %980 = vmatprep.subr.mxu0 0.0
        %981 = vmatpush1.msra.mxu0 0.0
        %982 = vmatprep.subr.mxu0 0.0
        %983 = vmatpush1.msra.mxu0 0.0
        %984 = vmatprep.mubr.f32.mxu0 0.0
        %985 = vmatmul.mubr.f32.gmra.mrb[0].mxu0 %v915
        %v986 = vpop.f32.mrb[0].mxu0
        %v987 = vadd.f32 %v912, %v986
        %v988 = vpop.f32.mrb[0].mxu0
        %989 = vmatprep.mubr.f32.mxu0 0.0
        %990 = vmatmul.mubr.f32.gmra.mrb[0].mxu0 %v918
        %v991 = vpop.f32.mrb[0].mxu0
        %v992 = vadd.f32 %v912, %v991
        %v993 = vpop.f32.mrb[0].mxu0
        %994 = vdwg.mxu0
        %997 = vrot.lane.b32.xlu0 %v987, 120
        %v998 = vpop.permute.xlu0 %997
        %999 = vrot.lane.b32.xlu0 %v992, 120
        %v1000 = vpop.permute.xlu0 %999
        %1001 = vrot.lane.b32.xlu0 %v987, 112
        %v1002 = vpop.permute.xlu0 %1001
        %1003 = vrot.lane.b32.xlu0 %v992, 112
        %v1004 = vpop.permute.xlu0 %1003
        %1005 = vrot.lane.b32.xlu0 %v987, 104
        %v1006 = vpop.permute.xlu0 %1005
        %1007 = vrot.lane.b32.xlu0 %v992, 104
        %v1008 = vpop.permute.xlu0 %1007
        %1009 = vrot.lane.b32.xlu0 %v987, 96
        %v1010 = vpop.permute.xlu0 %1009
        %vm1011 = vcmask 64512
        %v1012 = vsel %vm1011, %v987, 0
        %v1014 = vsel %vm1011, %v1010, 0
        %1016 = vmatprep.subr.mxu0 0.0
        %1017 = vmatpush1.xpose.msra.mxu0 %v1014
        %1018 = vmatprep.subr.mxu0 0.0
        %1019 = vmatpush1.xpose.msra.mxu0 0.0
        %1020 = vmatprep.subr.mxu0 0.0
        %1021 = vmatpush1.xpose.msra.mxu0 0.0
        %1022 = vmatprep.subr.mxu0 0.0
        %1023 = vmatpush1.xpose.msra.mxu0 0.0
        %1024 = vmatprep.subr.mxu0 0.0
        %1025 = vmatpush1.xpose.msra.mxu0 0.0
        %1026 = vmatprep.subr.mxu0 0.0
        %1027 = vmatpush1.xpose.msra.mxu0 0.0
        %1028 = vmatprep.subr.mxu0 0.0
        %1029 = vmatpush1.xpose.msra.mxu0 0.0
        %1030 = vmatprep.subr.mxu0 0.0
        %1031 = vmatpush1.xpose.msra.mxu0 0.0
        %1032 = vmatprep.subr.mxu0 0.0
        %1033 = vmatpush1.xpose.msra.mxu0 0.0
        %1034 = vmatprep.subr.mxu0 0.0
        %1035 = vmatpush1.xpose.msra.mxu0 0.0
        %1036 = vmatprep.subr.mxu0 0.0
        %1037 = vmatpush1.xpose.msra.mxu0 0.0
        %1038 = vmatprep.subr.mxu0 0.0
        %1039 = vmatpush1.xpose.msra.mxu0 0.0
        %1040 = vmatprep.subr.mxu0 0.0
        %1041 = vmatpush1.xpose.msra.mxu0 0.0
        %1042 = vmatprep.subr.mxu0 0.0
        %1043 = vmatpush1.xpose.msra.mxu0 0.0
        %1044 = vmatprep.subr.mxu0 0.0
        %1045 = vmatpush1.xpose.msra.mxu0 0.0
        %1046 = vmatprep.subr.mxu0 0.0
        %1047 = vmatpush1.xpose.msra.mxu0 0.0
        %1048 = vmatprep.subr.mxu0 0.0
        %1049 = vmatpush1.xpose.msra.mxu0 0.0
        %1050 = vmatprep.subr.mxu0 0.0
        %1051 = vmatpush1.xpose.msra.mxu0 0.0
        %1052 = vmatprep.subr.mxu0 0.0
        %1053 = vmatpush1.xpose.msra.mxu0 0.0
        %1054 = vmatprep.subr.mxu0 0.0
        %1055 = vmatpush1.xpose.msra.mxu0 0.0
        %1056 = vmatprep.subr.mxu0 0.0
        %1057 = vmatpush1.xpose.msra.mxu0 0.0
        %1058 = vmatprep.subr.mxu0 0.0
        %1059 = vmatpush1.xpose.msra.mxu0 0.0
        %1060 = vmatprep.subr.mxu0 0.0
        %1061 = vmatpush1.xpose.msra.mxu0 0.0
        %1062 = vmatprep.subr.mxu0 0.0
        %1063 = vmatpush1.xpose.msra.mxu0 0.0
        %1064 = vmatprep.subr.mxu0 0.0
        %1065 = vmatpush1.xpose.msra.mxu0 0.0
        %1066 = vmatprep.subr.mxu0 0.0
        %1067 = vmatpush1.xpose.msra.mxu0 0.0
        %1068 = vmatprep.subr.mxu0 0.0
        %1069 = vmatpush1.xpose.msra.mxu0 0.0
        %1070 = vmatprep.subr.mxu0 0.0
        %1071 = vmatpush1.xpose.msra.mxu0 0.0
        %1072 = vmatprep.subr.mxu0 0.0
        %1073 = vmatpush1.xpose.msra.mxu0 0.0
        %1074 = vmatprep.subr.mxu0 0.0
        %1075 = vmatpush1.xpose.msra.mxu0 0.0
        %1076 = vmatprep.subr.mxu0 0.0
        %1077 = vmatpush1.xpose.msra.mxu0 0.0
        %1078 = vmatprep.subr.mxu0 0.0
        %1079 = vmatpush1.xpose.msra.mxu0 0.0
        %1080 = vmatprep.mubr.f32.mxu0 0.0
        %1081 = vmatmul.mubr.f32.gmra.mrb[0].mxu0 %v1012
        %v1082 = vpop.f32.mrb[0].mxu0
        %v1083 = vadd.f32 %v835, %v1082
        %v1084 = vpop.f32.mrb[0].mxu0
        %1085 = vdwg.mxu0
        %1086 = vrot.lane.b32.xlu0 %v992, 96
        %v1087 = vpop.permute.xlu0 %1086
        %v1088 = vsel %vm1011, %v992, 0
        %v1090 = vsel %vm1011, %v1087, 0
        %1092 = vmatprep.subr.mxu0 0.0
        %1093 = vmatpush1.xpose.msra.mxu0 %v1090
        %1094 = vmatprep.subr.mxu0 0.0
        %1095 = vmatpush1.xpose.msra.mxu0 0.0
        %1096 = vmatprep.subr.mxu0 0.0
        %1097 = vmatpush1.xpose.msra.mxu0 0.0
        %1098 = vmatprep.subr.mxu0 0.0
        %1099 = vmatpush1.xpose.msra.mxu0 0.0
        %1100 = vmatprep.subr.mxu0 0.0
        %1101 = vmatpush1.xpose.msra.mxu0 0.0
        %1102 = vmatprep.subr.mxu0 0.0
        %1103 = vmatpush1.xpose.msra.mxu0 0.0
        %1104 = vmatprep.subr.mxu0 0.0
        %1105 = vmatpush1.xpose.msra.mxu0 0.0
        %1106 = vmatprep.subr.mxu0 0.0
        %1107 = vmatpush1.xpose.msra.mxu0 0.0
        %1108 = vmatprep.subr.mxu0 0.0
        %1109 = vmatpush1.xpose.msra.mxu0 0.0
        %1110 = vmatprep.subr.mxu0 0.0
        %1111 = vmatpush1.xpose.msra.mxu0 0.0
        %1112 = vmatprep.subr.mxu0 0.0
        %1113 = vmatpush1.xpose.msra.mxu0 0.0
        %1114 = vmatprep.subr.mxu0 0.0
        %1115 = vmatpush1.xpose.msra.mxu0 0.0
        %1116 = vmatprep.subr.mxu0 0.0
        %1117 = vmatpush1.xpose.msra.mxu0 0.0
        %1118 = vmatprep.subr.mxu0 0.0
        %1119 = vmatpush1.xpose.msra.mxu0 0.0
        %1120 = vmatprep.subr.mxu0 0.0
        %1121 = vmatpush1.xpose.msra.mxu0 0.0
        %1122 = vmatprep.subr.mxu0 0.0
        %1123 = vmatpush1.xpose.msra.mxu0 0.0
        %1124 = vmatprep.subr.mxu0 0.0
        %1125 = vmatpush1.xpose.msra.mxu0 0.0
        %1126 = vmatprep.subr.mxu0 0.0
        %1127 = vmatpush1.xpose.msra.mxu0 0.0
        %1128 = vmatprep.subr.mxu0 0.0
        %1129 = vmatpush1.xpose.msra.mxu0 0.0
        %1130 = vmatprep.subr.mxu0 0.0
        %1131 = vmatpush1.xpose.msra.mxu0 0.0
        %1132 = vmatprep.subr.mxu0 0.0
        %1133 = vmatpush1.xpose.msra.mxu0 0.0
        %1134 = vmatprep.subr.mxu0 0.0
        %1135 = vmatpush1.xpose.msra.mxu0 0.0
        %1136 = vmatprep.subr.mxu0 0.0
        %1137 = vmatpush1.xpose.msra.mxu0 0.0
        %1138 = vmatprep.subr.mxu0 0.0
        %1139 = vmatpush1.xpose.msra.mxu0 0.0
        %1140 = vmatprep.subr.mxu0 0.0
        %1141 = vmatpush1.xpose.msra.mxu0 0.0
        %1142 = vmatprep.subr.mxu0 0.0
        %1143 = vmatpush1.xpose.msra.mxu0 0.0
        %1144 = vmatprep.subr.mxu0 0.0
        %1145 = vmatpush1.xpose.msra.mxu0 0.0
        %1146 = vmatprep.subr.mxu0 0.0
        %1147 = vmatpush1.xpose.msra.mxu0 0.0
        %1148 = vmatprep.subr.mxu0 0.0
        %1149 = vmatpush1.xpose.msra.mxu0 0.0
        %1150 = vmatprep.subr.mxu0 0.0
        %1151 = vmatpush1.xpose.msra.mxu0 0.0
        %1152 = vmatprep.subr.mxu0 0.0
        %1153 = vmatpush1.xpose.msra.mxu0 0.0
        %1154 = vmatprep.subr.mxu0 0.0
        %1155 = vmatpush1.xpose.msra.mxu0 0.0
        %1156 = vmatprep.mubr.f32.mxu0 0.0
        %1157 = vmatmul.mubr.f32.gmra.mrb[0].mxu0 %v1088
        %v1158 = vpop.f32.mrb[0].mxu0
        %v1159 = vadd.f32 %v836, %v1158
        %v1160 = vpop.f32.mrb[0].mxu0
        %1161 = vdwg.mxu0
        %1162 = vrot.lane.b32.xlu0 %v998, 96
        %v1163 = vpop.permute.xlu0 %1162
        %v1164 = vsel %vm1011, %v998, 0
        %v1166 = vsel %vm1011, %v1163, 0
        %1168 = vmatprep.subr.mxu0 0.0
        %1169 = vmatpush1.xpose.msra.mxu0 %v1166
        %1170 = vmatprep.subr.mxu0 0.0
        %1171 = vmatpush1.xpose.msra.mxu0 0.0
        %1172 = vmatprep.subr.mxu0 0.0
        %1173 = vmatpush1.xpose.msra.mxu0 0.0
        %1174 = vmatprep.subr.mxu0 0.0
        %1175 = vmatpush1.xpose.msra.mxu0 0.0
        %1176 = vmatprep.subr.mxu0 0.0
        %1177 = vmatpush1.xpose.msra.mxu0 0.0
        %1178 = vmatprep.subr.mxu0 0.0
        %1179 = vmatpush1.xpose.msra.mxu0 0.0
        %1180 = vmatprep.subr.mxu0 0.0
        %1181 = vmatpush1.xpose.msra.mxu0 0.0
        %1182 = vmatprep.subr.mxu0 0.0
        %1183 = vmatpush1.xpose.msra.mxu0 0.0
        %1184 = vmatprep.subr.mxu0 0.0
        %1185 = vmatpush1.xpose.msra.mxu0 0.0
        %1186 = vmatprep.subr.mxu0 0.0
        %1187 = vmatpush1.xpose.msra.mxu0 0.0
        %1188 = vmatprep.subr.mxu0 0.0
        %1189 = vmatpush1.xpose.msra.mxu0 0.0
        %1190 = vmatprep.subr.mxu0 0.0
        %1191 = vmatpush1.xpose.msra.mxu0 0.0
        %1192 = vmatprep.subr.mxu0 0.0
        %1193 = vmatpush1.xpose.msra.mxu0 0.0
        %1194 = vmatprep.subr.mxu0 0.0
        %1195 = vmatpush1.xpose.msra.mxu0 0.0
        %1196 = vmatprep.subr.mxu0 0.0
        %1197 = vmatpush1.xpose.msra.mxu0 0.0
        %1198 = vmatprep.subr.mxu0 0.0
        %1199 = vmatpush1.xpose.msra.mxu0 0.0
        %1200 = vmatprep.subr.mxu0 0.0
        %1201 = vmatpush1.xpose.msra.mxu0 0.0
        %1202 = vmatprep.subr.mxu0 0.0
        %1203 = vmatpush1.xpose.msra.mxu0 0.0
        %1204 = vmatprep.subr.mxu0 0.0
        %1205 = vmatpush1.xpose.msra.mxu0 0.0
        %1206 = vmatprep.subr.mxu0 0.0
        %1207 = vmatpush1.xpose.msra.mxu0 0.0
        %1208 = vmatprep.subr.mxu0 0.0
        %1209 = vmatpush1.xpose.msra.mxu0 0.0
        %1210 = vmatprep.subr.mxu0 0.0
        %1211 = vmatpush1.xpose.msra.mxu0 0.0
        %1212 = vmatprep.subr.mxu0 0.0
        %1213 = vmatpush1.xpose.msra.mxu0 0.0
        %1214 = vmatprep.subr.mxu0 0.0
        %1215 = vmatpush1.xpose.msra.mxu0 0.0
        %1216 = vmatprep.subr.mxu0 0.0
        %1217 = vmatpush1.xpose.msra.mxu0 0.0
        %1218 = vmatprep.subr.mxu0 0.0
        %1219 = vmatpush1.xpose.msra.mxu0 0.0
        %1220 = vmatprep.subr.mxu0 0.0
        %1221 = vmatpush1.xpose.msra.mxu0 0.0
        %1222 = vmatprep.subr.mxu0 0.0
        %1223 = vmatpush1.xpose.msra.mxu0 0.0
        %1224 = vmatprep.subr.mxu0 0.0
        %1225 = vmatpush1.xpose.msra.mxu0 0.0
        %1226 = vmatprep.subr.mxu0 0.0
        %1227 = vmatpush1.xpose.msra.mxu0 0.0
        %1228 = vmatprep.subr.mxu0 0.0
        %1229 = vmatpush1.xpose.msra.mxu0 0.0
        %1230 = vmatprep.subr.mxu0 0.0
        %1231 = vmatpush1.xpose.msra.mxu0 0.0
        %1232 = vmatprep.mubr.f32.mxu0 0.0
        %1233 = vmatmul.mubr.f32.gmra.mrb[0].mxu0 %v1164
        %v1234 = vpop.f32.mrb[0].mxu0
        %v1235 = vadd.f32 %v837, %v1234
        %v1236 = vpop.f32.mrb[0].mxu0
        %1237 = vdwg.mxu0
        %1238 = vrot.lane.b32.xlu0 %v1000, 96
        %v1239 = vpop.permute.xlu0 %1238
        %v1240 = vsel %vm1011, %v1000, 0
        %v1242 = vsel %vm1011, %v1239, 0
        %1244 = vmatprep.subr.mxu0 0.0
        %1245 = vmatpush1.xpose.msra.mxu0 %v1242
        %1246 = vmatprep.subr.mxu0 0.0
        %1247 = vmatpush1.xpose.msra.mxu0 0.0
        %1248 = vmatprep.subr.mxu0 0.0
        %1249 = vmatpush1.xpose.msra.mxu0 0.0
        %1250 = vmatprep.subr.mxu0 0.0
        %1251 = vmatpush1.xpose.msra.mxu0 0.0
        %1252 = vmatprep.subr.mxu0 0.0
        %1253 = vmatpush1.xpose.msra.mxu0 0.0
        %1254 = vmatprep.subr.mxu0 0.0
        %1255 = vmatpush1.xpose.msra.mxu0 0.0
        %1256 = vmatprep.subr.mxu0 0.0
        %1257 = vmatpush1.xpose.msra.mxu0 0.0
        %1258 = vmatprep.subr.mxu0 0.0
        %1259 = vmatpush1.xpose.msra.mxu0 0.0
        %1260 = vmatprep.subr.mxu0 0.0
        %1261 = vmatpush1.xpose.msra.mxu0 0.0
        %1262 = vmatprep.subr.mxu0 0.0
        %1263 = vmatpush1.xpose.msra.mxu0 0.0
        %1264 = vmatprep.subr.mxu0 0.0
        %1265 = vmatpush1.xpose.msra.mxu0 0.0
        %1266 = vmatprep.subr.mxu0 0.0
        %1267 = vmatpush1.xpose.msra.mxu0 0.0
        %1268 = vmatprep.subr.mxu0 0.0
        %1269 = vmatpush1.xpose.msra.mxu0 0.0
        %1270 = vmatprep.subr.mxu0 0.0
        %1271 = vmatpush1.xpose.msra.mxu0 0.0
        %1272 = vmatprep.subr.mxu0 0.0
        %1273 = vmatpush1.xpose.msra.mxu0 0.0
        %1274 = vmatprep.subr.mxu0 0.0
        %1275 = vmatpush1.xpose.msra.mxu0 0.0
        %1276 = vmatprep.subr.mxu0 0.0
        %1277 = vmatpush1.xpose.msra.mxu0 0.0
        %1278 = vmatprep.subr.mxu0 0.0
        %1279 = vmatpush1.xpose.msra.mxu0 0.0
        %1280 = vmatprep.subr.mxu0 0.0
        %1281 = vmatpush1.xpose.msra.mxu0 0.0
        %1282 = vmatprep.subr.mxu0 0.0
        %1283 = vmatpush1.xpose.msra.mxu0 0.0
        %1284 = vmatprep.subr.mxu0 0.0
        %1285 = vmatpush1.xpose.msra.mxu0 0.0
        %1286 = vmatprep.subr.mxu0 0.0
        %1287 = vmatpush1.xpose.msra.mxu0 0.0
        %1288 = vmatprep.subr.mxu0 0.0
        %1289 = vmatpush1.xpose.msra.mxu0 0.0
        %1290 = vmatprep.subr.mxu0 0.0
        %1291 = vmatpush1.xpose.msra.mxu0 0.0
        %1292 = vmatprep.subr.mxu0 0.0
        %1293 = vmatpush1.xpose.msra.mxu0 0.0
        %1294 = vmatprep.subr.mxu0 0.0
        %1295 = vmatpush1.xpose.msra.mxu0 0.0
        %1296 = vmatprep.subr.mxu0 0.0
        %1297 = vmatpush1.xpose.msra.mxu0 0.0
        %1298 = vmatprep.subr.mxu0 0.0
        %1299 = vmatpush1.xpose.msra.mxu0 0.0
        %1300 = vmatprep.subr.mxu0 0.0
        %1301 = vmatpush1.xpose.msra.mxu0 0.0
        %1302 = vmatprep.subr.mxu0 0.0
        %1303 = vmatpush1.xpose.msra.mxu0 0.0
        %1304 = vmatprep.subr.mxu0 0.0
        %1305 = vmatpush1.xpose.msra.mxu0 0.0
        %1306 = vmatprep.subr.mxu0 0.0
        %1307 = vmatpush1.xpose.msra.mxu0 0.0
        %1308 = vmatprep.mubr.f32.mxu0 0.0
        %1309 = vmatmul.mubr.f32.gmra.mrb[0].mxu0 %v1240
        %v1310 = vpop.f32.mrb[0].mxu0
        %v1311 = vadd.f32 %v838, %v1310
        %v1312 = vpop.f32.mrb[0].mxu0
        %1313 = vdwg.mxu0
        %1314 = vrot.lane.b32.xlu0 %v1002, 96
        %v1315 = vpop.permute.xlu0 %1314
        %v1316 = vsel %vm1011, %v1002, 0
        %v1318 = vsel %vm1011, %v1315, 0
        %1320 = vmatprep.subr.mxu0 0.0
        %1321 = vmatpush1.xpose.msra.mxu0 %v1318
        %1322 = vmatprep.subr.mxu0 0.0
        %1323 = vmatpush1.xpose.msra.mxu0 0.0
        %1324 = vmatprep.subr.mxu0 0.0
        %1325 = vmatpush1.xpose.msra.mxu0 0.0
        %1326 = vmatprep.subr.mxu0 0.0
        %1327 = vmatpush1.xpose.msra.mxu0 0.0
        %1328 = vmatprep.subr.mxu0 0.0
        %1329 = vmatpush1.xpose.msra.mxu0 0.0
        %1330 = vmatprep.subr.mxu0 0.0
        %1331 = vmatpush1.xpose.msra.mxu0 0.0
        %1332 = vmatprep.subr.mxu0 0.0
        %1333 = vmatpush1.xpose.msra.mxu0 0.0
        %1334 = vmatprep.subr.mxu0 0.0
        %1335 = vmatpush1.xpose.msra.mxu0 0.0
        %1336 = vmatprep.subr.mxu0 0.0
        %1337 = vmatpush1.xpose.msra.mxu0 0.0
        %1338 = vmatprep.subr.mxu0 0.0
        %1339 = vmatpush1.xpose.msra.mxu0 0.0
        %1340 = vmatprep.subr.mxu0 0.0
        %1341 = vmatpush1.xpose.msra.mxu0 0.0
        %1342 = vmatprep.subr.mxu0 0.0
        %1343 = vmatpush1.xpose.msra.mxu0 0.0
        %1344 = vmatprep.subr.mxu0 0.0
        %1345 = vmatpush1.xpose.msra.mxu0 0.0
        %1346 = vmatprep.subr.mxu0 0.0
        %1347 = vmatpush1.xpose.msra.mxu0 0.0
        %1348 = vmatprep.subr.mxu0 0.0
        %1349 = vmatpush1.xpose.msra.mxu0 0.0
        %1350 = vmatprep.subr.mxu0 0.0
        %1351 = vmatpush1.xpose.msra.mxu0 0.0
        %1352 = vmatprep.subr.mxu0 0.0
        %1353 = vmatpush1.xpose.msra.mxu0 0.0
        %1354 = vmatprep.subr.mxu0 0.0
        %1355 = vmatpush1.xpose.msra.mxu0 0.0
        %1356 = vmatprep.subr.mxu0 0.0
        %1357 = vmatpush1.xpose.msra.mxu0 0.0
        %1358 = vmatprep.subr.mxu0 0.0
        %1359 = vmatpush1.xpose.msra.mxu0 0.0
        %1360 = vmatprep.subr.mxu0 0.0
        %1361 = vmatpush1.xpose.msra.mxu0 0.0
        %1362 = vmatprep.subr.mxu0 0.0
        %1363 = vmatpush1.xpose.msra.mxu0 0.0
        %1364 = vmatprep.subr.mxu0 0.0
        %1365 = vmatpush1.xpose.msra.mxu0 0.0
        %1366 = vmatprep.subr.mxu0 0.0
        %1367 = vmatpush1.xpose.msra.mxu0 0.0
        %1368 = vmatprep.subr.mxu0 0.0
        %1369 = vmatpush1.xpose.msra.mxu0 0.0
        %1370 = vmatprep.subr.mxu0 0.0
        %1371 = vmatpush1.xpose.msra.mxu0 0.0
        %1372 = vmatprep.subr.mxu0 0.0
        %1373 = vmatpush1.xpose.msra.mxu0 0.0
        %1374 = vmatprep.subr.mxu0 0.0
        %1375 = vmatpush1.xpose.msra.mxu0 0.0
        %1376 = vmatprep.subr.mxu0 0.0
        %1377 = vmatpush1.xpose.msra.mxu0 0.0
        %1378 = vmatprep.subr.mxu0 0.0
        %1379 = vmatpush1.xpose.msra.mxu0 0.0
        %1380 = vmatprep.subr.mxu0 0.0
        %1381 = vmatpush1.xpose.msra.mxu0 0.0
        %1382 = vmatprep.subr.mxu0 0.0
        %1383 = vmatpush1.xpose.msra.mxu0 0.0
        %1384 = vmatprep.mubr.f32.mxu0 0.0
        %1385 = vmatmul.mubr.f32.gmra.mrb[0].mxu0 %v1316
        %v1386 = vpop.f32.mrb[0].mxu0
        %v1387 = vadd.f32 %v839, %v1386
        %v1388 = vpop.f32.mrb[0].mxu0
        %1389 = vdwg.mxu0
        %1390 = vrot.lane.b32.xlu0 %v1004, 96
        %v1391 = vpop.permute.xlu0 %1390
        %v1392 = vsel %vm1011, %v1004, 0
        %v1394 = vsel %vm1011, %v1391, 0
        %1396 = vmatprep.subr.mxu0 0.0
        %1397 = vmatpush1.xpose.msra.mxu0 %v1394
        %1398 = vmatprep.subr.mxu0 0.0
        %1399 = vmatpush1.xpose.msra.mxu0 0.0
        %1400 = vmatprep.subr.mxu0 0.0
        %1401 = vmatpush1.xpose.msra.mxu0 0.0
        %1402 = vmatprep.subr.mxu0 0.0
        %1403 = vmatpush1.xpose.msra.mxu0 0.0
        %1404 = vmatprep.subr.mxu0 0.0
        %1405 = vmatpush1.xpose.msra.mxu0 0.0
        %1406 = vmatprep.subr.mxu0 0.0
        %1407 = vmatpush1.xpose.msra.mxu0 0.0
        %1408 = vmatprep.subr.mxu0 0.0
        %1409 = vmatpush1.xpose.msra.mxu0 0.0
        %1410 = vmatprep.subr.mxu0 0.0
        %1411 = vmatpush1.xpose.msra.mxu0 0.0
        %1412 = vmatprep.subr.mxu0 0.0
        %1413 = vmatpush1.xpose.msra.mxu0 0.0
        %1414 = vmatprep.subr.mxu0 0.0
        %1415 = vmatpush1.xpose.msra.mxu0 0.0
        %1416 = vmatprep.subr.mxu0 0.0
        %1417 = vmatpush1.xpose.msra.mxu0 0.0
        %1418 = vmatprep.subr.mxu0 0.0
        %1419 = vmatpush1.xpose.msra.mxu0 0.0
        %1420 = vmatprep.subr.mxu0 0.0
        %1421 = vmatpush1.xpose.msra.mxu0 0.0
        %1422 = vmatprep.subr.mxu0 0.0
        %1423 = vmatpush1.xpose.msra.mxu0 0.0
        %1424 = vmatprep.subr.mxu0 0.0
        %1425 = vmatpush1.xpose.msra.mxu0 0.0
        %1426 = vmatprep.subr.mxu0 0.0
        %1427 = vmatpush1.xpose.msra.mxu0 0.0
        %1428 = vmatprep.subr.mxu0 0.0
        %1429 = vmatpush1.xpose.msra.mxu0 0.0
        %1430 = vmatprep.subr.mxu0 0.0
        %1431 = vmatpush1.xpose.msra.mxu0 0.0
        %1432 = vmatprep.subr.mxu0 0.0
        %1433 = vmatpush1.xpose.msra.mxu0 0.0
        %1434 = vmatprep.subr.mxu0 0.0
        %1435 = vmatpush1.xpose.msra.mxu0 0.0
        %1436 = vmatprep.subr.mxu0 0.0
        %1437 = vmatpush1.xpose.msra.mxu0 0.0
        %1438 = vmatprep.subr.mxu0 0.0
        %1439 = vmatpush1.xpose.msra.mxu0 0.0
        %1440 = vmatprep.subr.mxu0 0.0
        %1441 = vmatpush1.xpose.msra.mxu0 0.0
        %1442 = vmatprep.subr.mxu0 0.0
        %1443 = vmatpush1.xpose.msra.mxu0 0.0
        %1444 = vmatprep.subr.mxu0 0.0
        %1445 = vmatpush1.xpose.msra.mxu0 0.0
        %1446 = vmatprep.subr.mxu0 0.0
        %1447 = vmatpush1.xpose.msra.mxu0 0.0
        %1448 = vmatprep.subr.mxu0 0.0
        %1449 = vmatpush1.xpose.msra.mxu0 0.0
        %1450 = vmatprep.subr.mxu0 0.0
        %1451 = vmatpush1.xpose.msra.mxu0 0.0
        %1452 = vmatprep.subr.mxu0 0.0
        %1453 = vmatpush1.xpose.msra.mxu0 0.0
        %1454 = vmatprep.subr.mxu0 0.0
        %1455 = vmatpush1.xpose.msra.mxu0 0.0
        %1456 = vmatprep.subr.mxu0 0.0
        %1457 = vmatpush1.xpose.msra.mxu0 0.0
        %1458 = vmatprep.subr.mxu0 0.0
        %1459 = vmatpush1.xpose.msra.mxu0 0.0
        %1460 = vmatprep.mubr.f32.mxu0 0.0
        %1461 = vmatmul.mubr.f32.gmra.mrb[0].mxu0 %v1392
        %v1462 = vpop.f32.mrb[0].mxu0
        %v1463 = vadd.f32 %v840, %v1462
        %v1464 = vpop.f32.mrb[0].mxu0
        %1465 = vdwg.mxu0
        %1466 = vrot.lane.b32.xlu0 %v1006, 96
        %v1467 = vpop.permute.xlu0 %1466
        %v1468 = vsel %vm1011, %v1006, 0
        %v1470 = vsel %vm1011, %v1467, 0
        %1472 = vmatprep.subr.mxu0 0.0
        %1473 = vmatpush1.xpose.msra.mxu0 %v1470
        %1474 = vmatprep.subr.mxu0 0.0
        %1475 = vmatpush1.xpose.msra.mxu0 0.0
        %1476 = vmatprep.subr.mxu0 0.0
        %1477 = vmatpush1.xpose.msra.mxu0 0.0
        %1478 = vmatprep.subr.mxu0 0.0
        %1479 = vmatpush1.xpose.msra.mxu0 0.0
        %1480 = vmatprep.subr.mxu0 0.0
        %1481 = vmatpush1.xpose.msra.mxu0 0.0
        %1482 = vmatprep.subr.mxu0 0.0
        %1483 = vmatpush1.xpose.msra.mxu0 0.0
        %1484 = vmatprep.subr.mxu0 0.0
        %1485 = vmatpush1.xpose.msra.mxu0 0.0
        %1486 = vmatprep.subr.mxu0 0.0
        %1487 = vmatpush1.xpose.msra.mxu0 0.0
        %1488 = vmatprep.subr.mxu0 0.0
        %1489 = vmatpush1.xpose.msra.mxu0 0.0
        %1490 = vmatprep.subr.mxu0 0.0
        %1491 = vmatpush1.xpose.msra.mxu0 0.0
        %1492 = vmatprep.subr.mxu0 0.0
        %1493 = vmatpush1.xpose.msra.mxu0 0.0
        %1494 = vmatprep.subr.mxu0 0.0
        %1495 = vmatpush1.xpose.msra.mxu0 0.0
        %1496 = vmatprep.subr.mxu0 0.0
        %1497 = vmatpush1.xpose.msra.mxu0 0.0
        %1498 = vmatprep.subr.mxu0 0.0
        %1499 = vmatpush1.xpose.msra.mxu0 0.0
        %1500 = vmatprep.subr.mxu0 0.0
        %1501 = vmatpush1.xpose.msra.mxu0 0.0
        %1502 = vmatprep.subr.mxu0 0.0
        %1503 = vmatpush1.xpose.msra.mxu0 0.0
        %1504 = vmatprep.subr.mxu0 0.0
        %1505 = vmatpush1.xpose.msra.mxu0 0.0
        %1506 = vmatprep.subr.mxu0 0.0
        %1507 = vmatpush1.xpose.msra.mxu0 0.0
        %1508 = vmatprep.subr.mxu0 0.0
        %1509 = vmatpush1.xpose.msra.mxu0 0.0
        %1510 = vmatprep.subr.mxu0 0.0
        %1511 = vmatpush1.xpose.msra.mxu0 0.0
        %1512 = vmatprep.subr.mxu0 0.0
        %1513 = vmatpush1.xpose.msra.mxu0 0.0
        %1514 = vmatprep.subr.mxu0 0.0
        %1515 = vmatpush1.xpose.msra.mxu0 0.0
        %1516 = vmatprep.subr.mxu0 0.0
        %1517 = vmatpush1.xpose.msra.mxu0 0.0
        %1518 = vmatprep.subr.mxu0 0.0
        %1519 = vmatpush1.xpose.msra.mxu0 0.0
        %1520 = vmatprep.subr.mxu0 0.0
        %1521 = vmatpush1.xpose.msra.mxu0 0.0
        %1522 = vmatprep.subr.mxu0 0.0
        %1523 = vmatpush1.xpose.msra.mxu0 0.0
        %1524 = vmatprep.subr.mxu0 0.0
        %1525 = vmatpush1.xpose.msra.mxu0 0.0
        %1526 = vmatprep.subr.mxu0 0.0
        %1527 = vmatpush1.xpose.msra.mxu0 0.0
        %1528 = vmatprep.subr.mxu0 0.0
        %1529 = vmatpush1.xpose.msra.mxu0 0.0
        %1530 = vmatprep.subr.mxu0 0.0
        %1531 = vmatpush1.xpose.msra.mxu0 0.0
        %1532 = vmatprep.subr.mxu0 0.0
        %1533 = vmatpush1.xpose.msra.mxu0 0.0
        %1534 = vmatprep.subr.mxu0 0.0
        %1535 = vmatpush1.xpose.msra.mxu0 0.0
        %1536 = vmatprep.mubr.f32.mxu0 0.0
        %1537 = vmatmul.mubr.f32.gmra.mrb[0].mxu0 %v1468
        %v1538 = vpop.f32.mrb[0].mxu0
        %v1539 = vadd.f32 %v841, %v1538
        %v1540 = vpop.f32.mrb[0].mxu0
        %1541 = vdwg.mxu0
        %1542 = vrot.lane.b32.xlu0 %v1008, 96
        %v1543 = vpop.permute.xlu0 %1542
        %v1544 = vsel %vm1011, %v1008, 0
        %v1546 = vsel %vm1011, %v1543, 0
        %1548 = vmatprep.subr.mxu0 0.0
        %1549 = vmatpush1.xpose.msra.mxu0 %v1546
        %1550 = vmatprep.subr.mxu0 0.0
        %1551 = vmatpush1.xpose.msra.mxu0 0.0
        %1552 = vmatprep.subr.mxu0 0.0
        %1553 = vmatpush1.xpose.msra.mxu0 0.0
        %1554 = vmatprep.subr.mxu0 0.0
        %1555 = vmatpush1.xpose.msra.mxu0 0.0
        %1556 = vmatprep.subr.mxu0 0.0
        %1557 = vmatpush1.xpose.msra.mxu0 0.0
        %1558 = vmatprep.subr.mxu0 0.0
        %1559 = vmatpush1.xpose.msra.mxu0 0.0
        %1560 = vmatprep.subr.mxu0 0.0
        %1561 = vmatpush1.xpose.msra.mxu0 0.0
        %1562 = vmatprep.subr.mxu0 0.0
        %1563 = vmatpush1.xpose.msra.mxu0 0.0
        %1564 = vmatprep.subr.mxu0 0.0
        %1565 = vmatpush1.xpose.msra.mxu0 0.0
        %1566 = vmatprep.subr.mxu0 0.0
        %1567 = vmatpush1.xpose.msra.mxu0 0.0
        %1568 = vmatprep.subr.mxu0 0.0
        %1569 = vmatpush1.xpose.msra.mxu0 0.0
        %1570 = vmatprep.subr.mxu0 0.0
        %1571 = vmatpush1.xpose.msra.mxu0 0.0
        %1572 = vmatprep.subr.mxu0 0.0
        %1573 = vmatpush1.xpose.msra.mxu0 0.0
        %1574 = vmatprep.subr.mxu0 0.0
        %1575 = vmatpush1.xpose.msra.mxu0 0.0
        %1576 = vmatprep.subr.mxu0 0.0
        %1577 = vmatpush1.xpose.msra.mxu0 0.0
        %1578 = vmatprep.subr.mxu0 0.0
        %1579 = vmatpush1.xpose.msra.mxu0 0.0
        %1580 = vmatprep.subr.mxu0 0.0
        %1581 = vmatpush1.xpose.msra.mxu0 0.0
        %1582 = vmatprep.subr.mxu0 0.0
        %1583 = vmatpush1.xpose.msra.mxu0 0.0
        %1584 = vmatprep.subr.mxu0 0.0
        %1585 = vmatpush1.xpose.msra.mxu0 0.0
        %1586 = vmatprep.subr.mxu0 0.0
        %1587 = vmatpush1.xpose.msra.mxu0 0.0
        %1588 = vmatprep.subr.mxu0 0.0
        %1589 = vmatpush1.xpose.msra.mxu0 0.0
        %1590 = vmatprep.subr.mxu0 0.0
        %1591 = vmatpush1.xpose.msra.mxu0 0.0
        %1592 = vmatprep.subr.mxu0 0.0
        %1593 = vmatpush1.xpose.msra.mxu0 0.0
        %1594 = vmatprep.subr.mxu0 0.0
        %1595 = vmatpush1.xpose.msra.mxu0 0.0
        %1596 = vmatprep.subr.mxu0 0.0
        %1597 = vmatpush1.xpose.msra.mxu0 0.0
        %1598 = vmatprep.subr.mxu0 0.0
        %1599 = vmatpush1.xpose.msra.mxu0 0.0
        %1600 = vmatprep.subr.mxu0 0.0
        %1601 = vmatpush1.xpose.msra.mxu0 0.0
        %1602 = vmatprep.subr.mxu0 0.0
        %1603 = vmatpush1.xpose.msra.mxu0 0.0
        %1604 = vmatprep.subr.mxu0 0.0
        %1605 = vmatpush1.xpose.msra.mxu0 0.0
        %1606 = vmatprep.subr.mxu0 0.0
        %1607 = vmatpush1.xpose.msra.mxu0 0.0
        %1608 = vmatprep.subr.mxu0 0.0
        %1609 = vmatpush1.xpose.msra.mxu0 0.0
        %1610 = vmatprep.subr.mxu0 0.0
        %1611 = vmatpush1.xpose.msra.mxu0 0.0
        %1612 = vmatprep.mubr.f32.mxu0 0.0
        %1613 = vmatmul.mubr.f32.gmra.mrb[0].mxu0 %v1544
        %v1614 = vpop.f32.mrb[0].mxu0
        %v1615 = vadd.f32 %v842, %v1614
        %v1616 = vpop.f32.mrb[0].mxu0
        %1617 = vdwg.mxu0
        %v1618 = vsel %vm1011, %v1083, -inf
        %1619 = vmax.xlane.f32.xlu0 %v1618
        %v1620 = vpop.xlane.xlu0 %1619
        %v1621 = vsel %vm1011, %v1159, -inf
        %1622 = vmax.xlane.f32.xlu0 %v1621
        %v1623 = vpop.xlane.xlu0 %1622
        %v1624 = vsel %vm1011, %v1235, -inf
        %1625 = vmax.xlane.f32.xlu0 %v1624
        %v1626 = vpop.xlane.xlu0 %1625
        %v1627 = vsel %vm1011, %v1311, -inf
        %1628 = vmax.xlane.f32.xlu0 %v1627
        %v1629 = vpop.xlane.xlu0 %1628
        %v1630 = vsel %vm1011, %v1387, -inf
        %1631 = vmax.xlane.f32.xlu0 %v1630
        %v1632 = vpop.xlane.xlu0 %1631
        %v1633 = vsel %vm1011, %v1463, -inf
        %1634 = vmax.xlane.f32.xlu0 %v1633
        %v1635 = vpop.xlane.xlu0 %1634
        %v1636 = vsel %vm1011, %v1539, -inf
        %1637 = vmax.xlane.f32.xlu0 %v1636
        %v1638 = vpop.xlane.xlu0 %1637
        %v1639 = vsel %vm1011, %v1615, -inf
        %1640 = vmax.xlane.f32.xlu0 %v1639
        %v1641 = vpop.xlane.xlu0 %1640
        %v1642 = vsub.f32 %v1083, %v1620
        %v1643 = vsub.f32 %v1159, %v1623
        %v1644 = vsub.f32 %v1235, %v1626
        %v1645 = vsub.f32 %v1311, %v1629
        %v1646 = vsub.f32 %v1387, %v1632
        %v1647 = vsub.f32 %v1463, %v1635
        %v1648 = vsub.f32 %v1539, %v1638
        %v1649 = vsub.f32 %v1615, %v1641
        %v1650 = vmul.f32 %v1642, 1.442695
        %v1651 = vpow.pop %v1650
        %v1652 = vmul.f32 %v1643, 1.442695
        %v1653 = vpow.pop %v1652
        %v1654 = vmul.f32 %v1644, 1.442695
        %v1655 = vpow.pop %v1654
        %v1656 = vmul.f32 %v1645, 1.442695
        %v1657 = vpow.pop %v1656
        %v1658 = vmul.f32 %v1646, 1.442695
        %v1659 = vpow.pop %v1658
        %v1660 = vmul.f32 %v1647, 1.442695
        %v1661 = vpow.pop %v1660
        %v1662 = vmul.f32 %v1648, 1.442695
        %v1663 = vpow.pop %v1662
        %v1664 = vmul.f32 %v1649, 1.442695
        %v1665 = vpow.pop %v1664
        %v1666 = vsel %vm1011, %v1651, 0.0
        %1667 = vadd.xlane.f32.xlu0 %v1666
        %v1668 = vpop.xlane.xlu0 %1667
        %v1669 = vsel %vm1011, %v1653, 0.0
        %1670 = vadd.xlane.f32.xlu0 %v1669
        %v1671 = vpop.xlane.xlu0 %1670
        %v1672 = vsel %vm1011, %v1655, 0.0
        %1673 = vadd.xlane.f32.xlu0 %v1672
        %v1674 = vpop.xlane.xlu0 %1673
        %v1675 = vsel %vm1011, %v1657, 0.0
        %1676 = vadd.xlane.f32.xlu0 %v1675
        %v1677 = vpop.xlane.xlu0 %1676
        %v1678 = vsel %vm1011, %v1659, 0.0
        %1679 = vadd.xlane.f32.xlu0 %v1678
        %v1680 = vpop.xlane.xlu0 %1679
        %v1681 = vsel %vm1011, %v1661, 0.0
        %1682 = vadd.xlane.f32.xlu0 %v1681
        %v1683 = vpop.xlane.xlu0 %1682
        %v1684 = vsel %vm1011, %v1663, 0.0
        %1685 = vadd.xlane.f32.xlu0 %v1684
        %v1686 = vpop.xlane.xlu0 %1685
        %v1687 = vsel %vm1011, %v1665, 0.0
        %1688 = vadd.xlane.f32.xlu0 %v1687
        %v1689 = vpop.xlane.xlu0 %1688
        %v1690 = vrcp.pop %v1668
        %v1691 = vrcp.pop %v1671
        %v1692 = vrcp.pop %v1674
        %v1693 = vrcp.pop %v1677
        %v1694 = vrcp.pop %v1680
        %v1695 = vrcp.pop %v1683
        %v1696 = vrcp.pop %v1686
        %v1697 = vrcp.pop %v1689
        %v1698 = vmul.f32 %v1651, %v1690
        %v1699 = vmul.f32 %v1653, %v1691
        %v1700 = vmul.f32 %v1655, %v1692
        %v1701 = vmul.f32 %v1657, %v1693
        %v1702 = vmul.f32 %v1659, %v1694
        %v1703 = vmul.f32 %v1661, %v1695
        %v1704 = vmul.f32 %v1663, %v1696
        %v1705 = vmul.f32 %v1665, %v1697
        %1706 = vrot.lane.b32.xlu0 %v987, 64
        %v1707 = vpop.permute.xlu0 %1706
        %v1710 = vsel %vm1011, %v1698, 0
        %1712 = vmatprep.subr.mxu0 0.0
        %1713 = vmatpush1.msra.mxu0 %v1707
        %1714 = vmatprep.subr.mxu0 0.0
        %1715 = vmatpush1.msra.mxu0 0.0
        %1716 = vmatprep.subr.mxu0 0.0
        %1717 = vmatpush1.msra.mxu0 0.0
        %1718 = vmatprep.subr.mxu0 0.0
        %1719 = vmatpush1.msra.mxu0 0.0
        %1720 = vmatprep.subr.mxu0 0.0
        %1721 = vmatpush1.msra.mxu0 0.0
        %1722 = vmatprep.subr.mxu0 0.0
        %1723 = vmatpush1.msra.mxu0 0.0
        %1724 = vmatprep.subr.mxu0 0.0
        %1725 = vmatpush1.msra.mxu0 0.0
        %1726 = vmatprep.subr.mxu0 0.0
        %1727 = vmatpush1.msra.mxu0 0.0
        %1728 = vmatprep.subr.mxu0 0.0
        %1729 = vmatpush1.msra.mxu0 0.0
        %1730 = vmatprep.subr.mxu0 0.0
        %1731 = vmatpush1.msra.mxu0 0.0
        %1732 = vmatprep.subr.mxu0 0.0
        %1733 = vmatpush1.msra.mxu0 0.0
        %1734 = vmatprep.subr.mxu0 0.0
        %1735 = vmatpush1.msra.mxu0 0.0
        %1736 = vmatprep.subr.mxu0 0.0
        %1737 = vmatpush1.msra.mxu0 0.0
        %1738 = vmatprep.subr.mxu0 0.0
        %1739 = vmatpush1.msra.mxu0 0.0
        %1740 = vmatprep.subr.mxu0 0.0
        %1741 = vmatpush1.msra.mxu0 0.0
        %1742 = vmatprep.subr.mxu0 0.0
        %1743 = vmatpush1.msra.mxu0 0.0
        %1744 = vmatprep.subr.mxu0 0.0
        %1745 = vmatpush1.msra.mxu0 0.0
        %1746 = vmatprep.subr.mxu0 0.0
        %1747 = vmatpush1.msra.mxu0 0.0
        %1748 = vmatprep.subr.mxu0 0.0
        %1749 = vmatpush1.msra.mxu0 0.0
        %1750 = vmatprep.subr.mxu0 0.0
        %1751 = vmatpush1.msra.mxu0 0.0
        %1752 = vmatprep.subr.mxu0 0.0
        %1753 = vmatpush1.msra.mxu0 0.0
        %1754 = vmatprep.subr.mxu0 0.0
        %1755 = vmatpush1.msra.mxu0 0.0
        %1756 = vmatprep.subr.mxu0 0.0
        %1757 = vmatpush1.msra.mxu0 0.0
        %1758 = vmatprep.subr.mxu0 0.0
        %1759 = vmatpush1.msra.mxu0 0.0
        %1760 = vmatprep.subr.mxu0 0.0
        %1761 = vmatpush1.msra.mxu0 0.0
        %1762 = vmatprep.subr.mxu0 0.0
        %1763 = vmatpush1.msra.mxu0 0.0
        %1764 = vmatprep.subr.mxu0 0.0
        %1765 = vmatpush1.msra.mxu0 0.0
        %1766 = vmatprep.subr.mxu0 0.0
        %1767 = vmatpush1.msra.mxu0 0.0
        %1768 = vmatprep.subr.mxu0 0.0
        %1769 = vmatpush1.msra.mxu0 0.0
        %1770 = vmatprep.subr.mxu0 0.0
        %1771 = vmatpush1.msra.mxu0 0.0
        %1772 = vmatprep.subr.mxu0 0.0
        %1773 = vmatpush1.msra.mxu0 0.0
        %1774 = vmatprep.subr.mxu0 0.0
        %1775 = vmatpush1.msra.mxu0 0.0
        %1776 = vmatprep.mubr.f32.mxu0 0.0
        %1777 = vmatmul.mubr.f32.gmra.mrb[0].mxu0 %v1710
        %v1778 = vpop.f32.mrb[0].mxu0
        %v1779 = vadd.f32 0.0, %v1778
        %v1780 = vpop.f32.mrb[0].mxu0
        %1781 = vdwg.mxu0
        %1782 = vrot.lane.b32.xlu0 %v992, 64
        %v1783 = vpop.permute.xlu0 %1782
        %v1786 = vsel %vm1011, %v1699, 0
        %1788 = vmatprep.subr.mxu0 0.0
        %1789 = vmatpush1.msra.mxu0 %v1783
        %1790 = vmatprep.subr.mxu0 0.0
        %1791 = vmatpush1.msra.mxu0 0.0
        %1792 = vmatprep.subr.mxu0 0.0
        %1793 = vmatpush1.msra.mxu0 0.0
        %1794 = vmatprep.subr.mxu0 0.0
        %1795 = vmatpush1.msra.mxu0 0.0
        %1796 = vmatprep.subr.mxu0 0.0
        %1797 = vmatpush1.msra.mxu0 0.0
        %1798 = vmatprep.subr.mxu0 0.0
        %1799 = vmatpush1.msra.mxu0 0.0
        %1800 = vmatprep.subr.mxu0 0.0
        %1801 = vmatpush1.msra.mxu0 0.0
        %1802 = vmatprep.subr.mxu0 0.0
        %1803 = vmatpush1.msra.mxu0 0.0
        %1804 = vmatprep.subr.mxu0 0.0
        %1805 = vmatpush1.msra.mxu0 0.0
        %1806 = vmatprep.subr.mxu0 0.0
        %1807 = vmatpush1.msra.mxu0 0.0
        %1808 = vmatprep.subr.mxu0 0.0
        %1809 = vmatpush1.msra.mxu0 0.0
        %1810 = vmatprep.subr.mxu0 0.0
        %1811 = vmatpush1.msra.mxu0 0.0
        %1812 = vmatprep.subr.mxu0 0.0
        %1813 = vmatpush1.msra.mxu0 0.0
        %1814 = vmatprep.subr.mxu0 0.0
        %1815 = vmatpush1.msra.mxu0 0.0
        %1816 = vmatprep.subr.mxu0 0.0
        %1817 = vmatpush1.msra.mxu0 0.0
        %1818 = vmatprep.subr.mxu0 0.0
        %1819 = vmatpush1.msra.mxu0 0.0
        %1820 = vmatprep.subr.mxu0 0.0
        %1821 = vmatpush1.msra.mxu0 0.0
        %1822 = vmatprep.subr.mxu0 0.0
        %1823 = vmatpush1.msra.mxu0 0.0
        %1824 = vmatprep.subr.mxu0 0.0
        %1825 = vmatpush1.msra.mxu0 0.0
        %1826 = vmatprep.subr.mxu0 0.0
        %1827 = vmatpush1.msra.mxu0 0.0
        %1828 = vmatprep.subr.mxu0 0.0
        %1829 = vmatpush1.msra.mxu0 0.0
        %1830 = vmatprep.subr.mxu0 0.0
        %1831 = vmatpush1.msra.mxu0 0.0
        %1832 = vmatprep.subr.mxu0 0.0
        %1833 = vmatpush1.msra.mxu0 0.0
        %1834 = vmatprep.subr.mxu0 0.0
        %1835 = vmatpush1.msra.mxu0 0.0
        %1836 = vmatprep.subr.mxu0 0.0
        %1837 = vmatpush1.msra.mxu0 0.0
        %1838 = vmatprep.subr.mxu0 0.0
        %1839 = vmatpush1.msra.mxu0 0.0
        %1840 = vmatprep.subr.mxu0 0.0
        %1841 = vmatpush1.msra.mxu0 0.0
        %1842 = vmatprep.subr.mxu0 0.0
        %1843 = vmatpush1.msra.mxu0 0.0
        %1844 = vmatprep.subr.mxu0 0.0
        %1845 = vmatpush1.msra.mxu0 0.0
        %1846 = vmatprep.subr.mxu0 0.0
        %1847 = vmatpush1.msra.mxu0 0.0
        %1848 = vmatprep.subr.mxu0 0.0
        %1849 = vmatpush1.msra.mxu0 0.0
        %1850 = vmatprep.subr.mxu0 0.0
        %1851 = vmatpush1.msra.mxu0 0.0
        %1852 = vmatprep.mubr.f32.mxu0 0.0
        %1853 = vmatmul.mubr.f32.gmra.mrb[0].mxu0 %v1786
        %v1854 = vpop.f32.mrb[0].mxu0
        %v1855 = vadd.f32 0.0, %v1854
        %v1856 = vpop.f32.mrb[0].mxu0
        %1857 = vdwg.mxu0
        %1858 = vrot.lane.b32.xlu0 %v998, 64
        %v1859 = vpop.permute.xlu0 %1858
        %v1862 = vsel %vm1011, %v1700, 0
        %1864 = vmatprep.subr.mxu0 0.0
        %1865 = vmatpush1.msra.mxu0 %v1859
        %1866 = vmatprep.subr.mxu0 0.0
        %1867 = vmatpush1.msra.mxu0 0.0
        %1868 = vmatprep.subr.mxu0 0.0
        %1869 = vmatpush1.msra.mxu0 0.0
        %1870 = vmatprep.subr.mxu0 0.0
        %1871 = vmatpush1.msra.mxu0 0.0
        %1872 = vmatprep.subr.mxu0 0.0
        %1873 = vmatpush1.msra.mxu0 0.0
        %1874 = vmatprep.subr.mxu0 0.0
        %1875 = vmatpush1.msra.mxu0 0.0
        %1876 = vmatprep.subr.mxu0 0.0
        %1877 = vmatpush1.msra.mxu0 0.0
        %1878 = vmatprep.subr.mxu0 0.0
        %1879 = vmatpush1.msra.mxu0 0.0
        %1880 = vmatprep.subr.mxu0 0.0
        %1881 = vmatpush1.msra.mxu0 0.0
        %1882 = vmatprep.subr.mxu0 0.0
        %1883 = vmatpush1.msra.mxu0 0.0
        %1884 = vmatprep.subr.mxu0 0.0
        %1885 = vmatpush1.msra.mxu0 0.0
        %1886 = vmatprep.subr.mxu0 0.0
        %1887 = vmatpush1.msra.mxu0 0.0
        %1888 = vmatprep.subr.mxu0 0.0
        %1889 = vmatpush1.msra.mxu0 0.0
        %1890 = vmatprep.subr.mxu0 0.0
        %1891 = vmatpush1.msra.mxu0 0.0
        %1892 = vmatprep.subr.mxu0 0.0
        %1893 = vmatpush1.msra.mxu0 0.0
        %1894 = vmatprep.subr.mxu0 0.0
        %1895 = vmatpush1.msra.mxu0 0.0
        %1896 = vmatprep.subr.mxu0 0.0
        %1897 = vmatpush1.msra.mxu0 0.0
        %1898 = vmatprep.subr.mxu0 0.0
        %1899 = vmatpush1.msra.mxu0 0.0
        %1900 = vmatprep.subr.mxu0 0.0
        %1901 = vmatpush1.msra.mxu0 0.0
        %1902 = vmatprep.subr.mxu0 0.0
        %1903 = vmatpush1.msra.mxu0 0.0
        %1904 = vmatprep.subr.mxu0 0.0
        %1905 = vmatpush1.msra.mxu0 0.0
        %1906 = vmatprep.subr.mxu0 0.0
        %1907 = vmatpush1.msra.mxu0 0.0
        %1908 = vmatprep.subr.mxu0 0.0
        %1909 = vmatpush1.msra.mxu0 0.0
        %1910 = vmatprep.subr.mxu0 0.0
        %1911 = vmatpush1.msra.mxu0 0.0
        %1912 = vmatprep.subr.mxu0 0.0
        %1913 = vmatpush1.msra.mxu0 0.0
        %1914 = vmatprep.subr.mxu0 0.0
        %1915 = vmatpush1.msra.mxu0 0.0
        %1916 = vmatprep.subr.mxu0 0.0
        %1917 = vmatpush1.msra.mxu0 0.0
        %1918 = vmatprep.subr.mxu0 0.0
        %1919 = vmatpush1.msra.mxu0 0.0
        %1920 = vmatprep.subr.mxu0 0.0
        %1921 = vmatpush1.msra.mxu0 0.0
        %1922 = vmatprep.subr.mxu0 0.0
        %1923 = vmatpush1.msra.mxu0 0.0
        %1924 = vmatprep.subr.mxu0 0.0
        %1925 = vmatpush1.msra.mxu0 0.0
        %1926 = vmatprep.subr.mxu0 0.0
        %1927 = vmatpush1.msra.mxu0 0.0
        %1928 = vmatprep.mubr.f32.mxu0 0.0
        %1929 = vmatmul.mubr.f32.gmra.mrb[0].mxu0 %v1862
        %v1930 = vpop.f32.mrb[0].mxu0
        %v1931 = vadd.f32 0.0, %v1930
        %v1932 = vpop.f32.mrb[0].mxu0
        %1933 = vdwg.mxu0
        %1934 = vrot.lane.b32.xlu0 %v1000, 64
        %v1935 = vpop.permute.xlu0 %1934
        %v1938 = vsel %vm1011, %v1701, 0
        %1940 = vmatprep.subr.mxu0 0.0
        %1941 = vmatpush1.msra.mxu0 %v1935
        %1942 = vmatprep.subr.mxu0 0.0
        %1943 = vmatpush1.msra.mxu0 0.0
        %1944 = vmatprep.subr.mxu0 0.0
        %1945 = vmatpush1.msra.mxu0 0.0
        %1946 = vmatprep.subr.mxu0 0.0
        %1947 = vmatpush1.msra.mxu0 0.0
        %1948 = vmatprep.subr.mxu0 0.0
        %1949 = vmatpush1.msra.mxu0 0.0
        %1950 = vmatprep.subr.mxu0 0.0
        %1951 = vmatpush1.msra.mxu0 0.0
        %1952 = vmatprep.subr.mxu0 0.0
        %1953 = vmatpush1.msra.mxu0 0.0
        %1954 = vmatprep.subr.mxu0 0.0
        %1955 = vmatpush1.msra.mxu0 0.0
        %1956 = vmatprep.subr.mxu0 0.0
        %1957 = vmatpush1.msra.mxu0 0.0
        %1958 = vmatprep.subr.mxu0 0.0
        %1959 = vmatpush1.msra.mxu0 0.0
        %1960 = vmatprep.subr.mxu0 0.0
        %1961 = vmatpush1.msra.mxu0 0.0
        %1962 = vmatprep.subr.mxu0 0.0
        %1963 = vmatpush1.msra.mxu0 0.0
        %1964 = vmatprep.subr.mxu0 0.0
        %1965 = vmatpush1.msra.mxu0 0.0
        %1966 = vmatprep.subr.mxu0 0.0
        %1967 = vmatpush1.msra.mxu0 0.0
        %1968 = vmatprep.subr.mxu0 0.0
        %1969 = vmatpush1.msra.mxu0 0.0
        %1970 = vmatprep.subr.mxu0 0.0
        %1971 = vmatpush1.msra.mxu0 0.0
        %1972 = vmatprep.subr.mxu0 0.0
        %1973 = vmatpush1.msra.mxu0 0.0
        %1974 = vmatprep.subr.mxu0 0.0
        %1975 = vmatpush1.msra.mxu0 0.0
        %1976 = vmatprep.subr.mxu0 0.0
        %1977 = vmatpush1.msra.mxu0 0.0
        %1978 = vmatprep.subr.mxu0 0.0
        %1979 = vmatpush1.msra.mxu0 0.0
        %1980 = vmatprep.subr.mxu0 0.0
        %1981 = vmatpush1.msra.mxu0 0.0
        %1982 = vmatprep.subr.mxu0 0.0
        %1983 = vmatpush1.msra.mxu0 0.0
        %1984 = vmatprep.subr.mxu0 0.0
        %1985 = vmatpush1.msra.mxu0 0.0
        %1986 = vmatprep.subr.mxu0 0.0
        %1987 = vmatpush1.msra.mxu0 0.0
        %1988 = vmatprep.subr.mxu0 0.0
        %1989 = vmatpush1.msra.mxu0 0.0
        %1990 = vmatprep.subr.mxu0 0.0
        %1991 = vmatpush1.msra.mxu0 0.0
        %1992 = vmatprep.subr.mxu0 0.0
        %1993 = vmatpush1.msra.mxu0 0.0
        %1994 = vmatprep.subr.mxu0 0.0
        %1995 = vmatpush1.msra.mxu0 0.0
        %1996 = vmatprep.subr.mxu0 0.0
        %1997 = vmatpush1.msra.mxu0 0.0
        %1998 = vmatprep.subr.mxu0 0.0
        %1999 = vmatpush1.msra.mxu0 0.0
        %2000 = vmatprep.subr.mxu0 0.0
        %2001 = vmatpush1.msra.mxu0 0.0
        %2002 = vmatprep.subr.mxu0 0.0
        %2003 = vmatpush1.msra.mxu0 0.0
        %2004 = vmatprep.mubr.f32.mxu0 0.0
        %2005 = vmatmul.mubr.f32.gmra.mrb[0].mxu0 %v1938
        %v2006 = vpop.f32.mrb[0].mxu0
        %v2007 = vadd.f32 0.0, %v2006
        %v2008 = vpop.f32.mrb[0].mxu0
        %2009 = vdwg.mxu0
        %2010 = vrot.lane.b32.xlu0 %v1002, 64
        %v2011 = vpop.permute.xlu0 %2010
        %v2014 = vsel %vm1011, %v1702, 0
        %2016 = vmatprep.subr.mxu0 0.0
        %2017 = vmatpush1.msra.mxu0 %v2011
        %2018 = vmatprep.subr.mxu0 0.0
        %2019 = vmatpush1.msra.mxu0 0.0
        %2020 = vmatprep.subr.mxu0 0.0
        %2021 = vmatpush1.msra.mxu0 0.0
        %2022 = vmatprep.subr.mxu0 0.0
        %2023 = vmatpush1.msra.mxu0 0.0
        %2024 = vmatprep.subr.mxu0 0.0
        %2025 = vmatpush1.msra.mxu0 0.0
        %2026 = vmatprep.subr.mxu0 0.0
        %2027 = vmatpush1.msra.mxu0 0.0
        %2028 = vmatprep.subr.mxu0 0.0
        %2029 = vmatpush1.msra.mxu0 0.0
        %2030 = vmatprep.subr.mxu0 0.0
        %2031 = vmatpush1.msra.mxu0 0.0
        %2032 = vmatprep.subr.mxu0 0.0
        %2033 = vmatpush1.msra.mxu0 0.0
        %2034 = vmatprep.subr.mxu0 0.0
        %2035 = vmatpush1.msra.mxu0 0.0
        %2036 = vmatprep.subr.mxu0 0.0
        %2037 = vmatpush1.msra.mxu0 0.0
        %2038 = vmatprep.subr.mxu0 0.0
        %2039 = vmatpush1.msra.mxu0 0.0
        %2040 = vmatprep.subr.mxu0 0.0
        %2041 = vmatpush1.msra.mxu0 0.0
        %2042 = vmatprep.subr.mxu0 0.0
        %2043 = vmatpush1.msra.mxu0 0.0
        %2044 = vmatprep.subr.mxu0 0.0
        %2045 = vmatpush1.msra.mxu0 0.0
        %2046 = vmatprep.subr.mxu0 0.0
        %2047 = vmatpush1.msra.mxu0 0.0
        %2048 = vmatprep.subr.mxu0 0.0
        %2049 = vmatpush1.msra.mxu0 0.0
        %2050 = vmatprep.subr.mxu0 0.0
        %2051 = vmatpush1.msra.mxu0 0.0
        %2052 = vmatprep.subr.mxu0 0.0
        %2053 = vmatpush1.msra.mxu0 0.0
        %2054 = vmatprep.subr.mxu0 0.0
        %2055 = vmatpush1.msra.mxu0 0.0
        %2056 = vmatprep.subr.mxu0 0.0
        %2057 = vmatpush1.msra.mxu0 0.0
        %2058 = vmatprep.subr.mxu0 0.0
        %2059 = vmatpush1.msra.mxu0 0.0
        %2060 = vmatprep.subr.mxu0 0.0
        %2061 = vmatpush1.msra.mxu0 0.0
        %2062 = vmatprep.subr.mxu0 0.0
        %2063 = vmatpush1.msra.mxu0 0.0
        %2064 = vmatprep.subr.mxu0 0.0
        %2065 = vmatpush1.msra.mxu0 0.0
        %2066 = vmatprep.subr.mxu0 0.0
        %2067 = vmatpush1.msra.mxu0 0.0
        %2068 = vmatprep.subr.mxu0 0.0
        %2069 = vmatpush1.msra.mxu0 0.0
        %2070 = vmatprep.subr.mxu0 0.0
        %2071 = vmatpush1.msra.mxu0 0.0
        %2072 = vmatprep.subr.mxu0 0.0
        %2073 = vmatpush1.msra.mxu0 0.0
        %2074 = vmatprep.subr.mxu0 0.0
        %2075 = vmatpush1.msra.mxu0 0.0
        %2076 = vmatprep.subr.mxu0 0.0
        %2077 = vmatpush1.msra.mxu0 0.0
        %2078 = vmatprep.subr.mxu0 0.0
        %2079 = vmatpush1.msra.mxu0 0.0
        %2080 = vmatprep.mubr.f32.mxu0 0.0
        %2081 = vmatmul.mubr.f32.gmra.mrb[0].mxu0 %v2014
        %v2082 = vpop.f32.mrb[0].mxu0
        %v2083 = vadd.f32 0.0, %v2082
        %v2084 = vpop.f32.mrb[0].mxu0
        %2085 = vdwg.mxu0
        %2086 = vrot.lane.b32.xlu0 %v1004, 64
        %v2087 = vpop.permute.xlu0 %2086
        %v2090 = vsel %vm1011, %v1703, 0
        %2092 = vmatprep.subr.mxu0 0.0
        %2093 = vmatpush1.msra.mxu0 %v2087
        %2094 = vmatprep.subr.mxu0 0.0
        %2095 = vmatpush1.msra.mxu0 0.0
        %2096 = vmatprep.subr.mxu0 0.0
        %2097 = vmatpush1.msra.mxu0 0.0
        %2098 = vmatprep.subr.mxu0 0.0
        %2099 = vmatpush1.msra.mxu0 0.0
        %2100 = vmatprep.subr.mxu0 0.0
        %2101 = vmatpush1.msra.mxu0 0.0
        %2102 = vmatprep.subr.mxu0 0.0
        %2103 = vmatpush1.msra.mxu0 0.0
        %2104 = vmatprep.subr.mxu0 0.0
        %2105 = vmatpush1.msra.mxu0 0.0
        %2106 = vmatprep.subr.mxu0 0.0
        %2107 = vmatpush1.msra.mxu0 0.0
        %2108 = vmatprep.subr.mxu0 0.0
        %2109 = vmatpush1.msra.mxu0 0.0
        %2110 = vmatprep.subr.mxu0 0.0
        %2111 = vmatpush1.msra.mxu0 0.0
        %2112 = vmatprep.subr.mxu0 0.0
        %2113 = vmatpush1.msra.mxu0 0.0
        %2114 = vmatprep.subr.mxu0 0.0
        %2115 = vmatpush1.msra.mxu0 0.0
        %2116 = vmatprep.subr.mxu0 0.0
        %2117 = vmatpush1.msra.mxu0 0.0
        %2118 = vmatprep.subr.mxu0 0.0
        %2119 = vmatpush1.msra.mxu0 0.0
        %2120 = vmatprep.subr.mxu0 0.0
        %2121 = vmatpush1.msra.mxu0 0.0
        %2122 = vmatprep.subr.mxu0 0.0
        %2123 = vmatpush1.msra.mxu0 0.0
        %2124 = vmatprep.subr.mxu0 0.0
        %2125 = vmatpush1.msra.mxu0 0.0
        %2126 = vmatprep.subr.mxu0 0.0
        %2127 = vmatpush1.msra.mxu0 0.0
        %2128 = vmatprep.subr.mxu0 0.0
        %2129 = vmatpush1.msra.mxu0 0.0
        %2130 = vmatprep.subr.mxu0 0.0
        %2131 = vmatpush1.msra.mxu0 0.0
        %2132 = vmatprep.subr.mxu0 0.0
        %2133 = vmatpush1.msra.mxu0 0.0
        %2134 = vmatprep.subr.mxu0 0.0
        %2135 = vmatpush1.msra.mxu0 0.0
        %2136 = vmatprep.subr.mxu0 0.0
        %2137 = vmatpush1.msra.mxu0 0.0
        %2138 = vmatprep.subr.mxu0 0.0
        %2139 = vmatpush1.msra.mxu0 0.0
        %2140 = vmatprep.subr.mxu0 0.0
        %2141 = vmatpush1.msra.mxu0 0.0
        %2142 = vmatprep.subr.mxu0 0.0
        %2143 = vmatpush1.msra.mxu0 0.0
        %2144 = vmatprep.subr.mxu0 0.0
        %2145 = vmatpush1.msra.mxu0 0.0
        %2146 = vmatprep.subr.mxu0 0.0
        %2147 = vmatpush1.msra.mxu0 0.0
        %2148 = vmatprep.subr.mxu0 0.0
        %2149 = vmatpush1.msra.mxu0 0.0
        %2150 = vmatprep.subr.mxu0 0.0
        %2151 = vmatpush1.msra.mxu0 0.0
        %2152 = vmatprep.subr.mxu0 0.0
        %2153 = vmatpush1.msra.mxu0 0.0
        %2154 = vmatprep.subr.mxu0 0.0
        %2155 = vmatpush1.msra.mxu0 0.0
        %2156 = vmatprep.mubr.f32.mxu0 0.0
        %2157 = vmatmul.mubr.f32.gmra.mrb[0].mxu0 %v2090
        %v2158 = vpop.f32.mrb[0].mxu0
        %v2159 = vadd.f32 0.0, %v2158
        %v2160 = vpop.f32.mrb[0].mxu0
        %2161 = vdwg.mxu0
        %2162 = vrot.lane.b32.xlu0 %v1006, 64
        %v2163 = vpop.permute.xlu0 %2162
        %v2166 = vsel %vm1011, %v1704, 0
        %2168 = vmatprep.subr.mxu0 0.0
        %2169 = vmatpush1.msra.mxu0 %v2163
        %2170 = vmatprep.subr.mxu0 0.0
        %2171 = vmatpush1.msra.mxu0 0.0
        %2172 = vmatprep.subr.mxu0 0.0
        %2173 = vmatpush1.msra.mxu0 0.0
        %2174 = vmatprep.subr.mxu0 0.0
        %2175 = vmatpush1.msra.mxu0 0.0
        %2176 = vmatprep.subr.mxu0 0.0
        %2177 = vmatpush1.msra.mxu0 0.0
        %2178 = vmatprep.subr.mxu0 0.0
        %2179 = vmatpush1.msra.mxu0 0.0
        %2180 = vmatprep.subr.mxu0 0.0
        %2181 = vmatpush1.msra.mxu0 0.0
        %2182 = vmatprep.subr.mxu0 0.0
        %2183 = vmatpush1.msra.mxu0 0.0
        %2184 = vmatprep.subr.mxu0 0.0
        %2185 = vmatpush1.msra.mxu0 0.0
        %2186 = vmatprep.subr.mxu0 0.0
        %2187 = vmatpush1.msra.mxu0 0.0
        %2188 = vmatprep.subr.mxu0 0.0
        %2189 = vmatpush1.msra.mxu0 0.0
        %2190 = vmatprep.subr.mxu0 0.0
        %2191 = vmatpush1.msra.mxu0 0.0
        %2192 = vmatprep.subr.mxu0 0.0
        %2193 = vmatpush1.msra.mxu0 0.0
        %2194 = vmatprep.subr.mxu0 0.0
        %2195 = vmatpush1.msra.mxu0 0.0
        %2196 = vmatprep.subr.mxu0 0.0
        %2197 = vmatpush1.msra.mxu0 0.0
        %2198 = vmatprep.subr.mxu0 0.0
        %2199 = vmatpush1.msra.mxu0 0.0
        %2200 = vmatprep.subr.mxu0 0.0
        %2201 = vmatpush1.msra.mxu0 0.0
        %2202 = vmatprep.subr.mxu0 0.0
        %2203 = vmatpush1.msra.mxu0 0.0
        %2204 = vmatprep.subr.mxu0 0.0
        %2205 = vmatpush1.msra.mxu0 0.0
        %2206 = vmatprep.subr.mxu0 0.0
        %2207 = vmatpush1.msra.mxu0 0.0
        %2208 = vmatprep.subr.mxu0 0.0
        %2209 = vmatpush1.msra.mxu0 0.0
        %2210 = vmatprep.subr.mxu0 0.0
        %2211 = vmatpush1.msra.mxu0 0.0
        %2212 = vmatprep.subr.mxu0 0.0
        %2213 = vmatpush1.msra.mxu0 0.0
        %2214 = vmatprep.subr.mxu0 0.0
        %2215 = vmatpush1.msra.mxu0 0.0
        %2216 = vmatprep.subr.mxu0 0.0
        %2217 = vmatpush1.msra.mxu0 0.0
        %2218 = vmatprep.subr.mxu0 0.0
        %2219 = vmatpush1.msra.mxu0 0.0
        %2220 = vmatprep.subr.mxu0 0.0
        %2221 = vmatpush1.msra.mxu0 0.0
        %2222 = vmatprep.subr.mxu0 0.0
        %2223 = vmatpush1.msra.mxu0 0.0
        %2224 = vmatprep.subr.mxu0 0.0
        %2225 = vmatpush1.msra.mxu0 0.0
        %2226 = vmatprep.subr.mxu0 0.0
        %2227 = vmatpush1.msra.mxu0 0.0
        %2228 = vmatprep.subr.mxu0 0.0
        %2229 = vmatpush1.msra.mxu0 0.0
        %2230 = vmatprep.subr.mxu0 0.0
        %2231 = vmatpush1.msra.mxu0 0.0
        %2232 = vmatprep.mubr.f32.mxu0 0.0
        %2233 = vmatmul.mubr.f32.gmra.mrb[0].mxu0 %v2166
        %v2234 = vpop.f32.mrb[0].mxu0
        %v2235 = vadd.f32 0.0, %v2234
        %v2236 = vpop.f32.mrb[0].mxu0
        %2237 = vdwg.mxu0
        %2238 = vrot.lane.b32.xlu0 %v1008, 64
        %v2239 = vpop.permute.xlu0 %2238
        %v2242 = vsel %vm1011, %v1705, 0
        %2244 = vmatprep.subr.mxu0 0.0
        %2245 = vmatpush1.msra.mxu0 %v2239
        %2246 = vmatprep.subr.mxu0 0.0
        %2247 = vmatpush1.msra.mxu0 0.0
        %2248 = vmatprep.subr.mxu0 0.0
        %2249 = vmatpush1.msra.mxu0 0.0
        %2250 = vmatprep.subr.mxu0 0.0
        %2251 = vmatpush1.msra.mxu0 0.0
        %2252 = vmatprep.subr.mxu0 0.0
        %2253 = vmatpush1.msra.mxu0 0.0
        %2254 = vmatprep.subr.mxu0 0.0
        %2255 = vmatpush1.msra.mxu0 0.0
        %2256 = vmatprep.subr.mxu0 0.0
        %2257 = vmatpush1.msra.mxu0 0.0
        %2258 = vmatprep.subr.mxu0 0.0
        %2259 = vmatpush1.msra.mxu0 0.0
        %2260 = vmatprep.subr.mxu0 0.0
        %2261 = vmatpush1.msra.mxu0 0.0
        %2262 = vmatprep.subr.mxu0 0.0
        %2263 = vmatpush1.msra.mxu0 0.0
        %2264 = vmatprep.subr.mxu0 0.0
        %2265 = vmatpush1.msra.mxu0 0.0
        %2266 = vmatprep.subr.mxu0 0.0
        %2267 = vmatpush1.msra.mxu0 0.0
        %2268 = vmatprep.subr.mxu0 0.0
        %2269 = vmatpush1.msra.mxu0 0.0
        %2270 = vmatprep.subr.mxu0 0.0
        %2271 = vmatpush1.msra.mxu0 0.0
        %2272 = vmatprep.subr.mxu0 0.0
        %2273 = vmatpush1.msra.mxu0 0.0
        %2274 = vmatprep.subr.mxu0 0.0
        %2275 = vmatpush1.msra.mxu0 0.0
        %2276 = vmatprep.subr.mxu0 0.0
        %2277 = vmatpush1.msra.mxu0 0.0
        %2278 = vmatprep.subr.mxu0 0.0
        %2279 = vmatpush1.msra.mxu0 0.0
        %2280 = vmatprep.subr.mxu0 0.0
        %2281 = vmatpush1.msra.mxu0 0.0
        %2282 = vmatprep.subr.mxu0 0.0
        %2283 = vmatpush1.msra.mxu0 0.0
        %2284 = vmatprep.subr.mxu0 0.0
        %2285 = vmatpush1.msra.mxu0 0.0
        %2286 = vmatprep.subr.mxu0 0.0
        %2287 = vmatpush1.msra.mxu0 0.0
        %2288 = vmatprep.subr.mxu0 0.0
        %2289 = vmatpush1.msra.mxu0 0.0
        %2290 = vmatprep.subr.mxu0 0.0
        %2291 = vmatpush1.msra.mxu0 0.0
        %2292 = vmatprep.subr.mxu0 0.0
        %2293 = vmatpush1.msra.mxu0 0.0
        %2294 = vmatprep.subr.mxu0 0.0
        %2295 = vmatpush1.msra.mxu0 0.0
        %2296 = vmatprep.subr.mxu0 0.0
        %2297 = vmatpush1.msra.mxu0 0.0
        %2298 = vmatprep.subr.mxu0 0.0
        %2299 = vmatpush1.msra.mxu0 0.0
        %2300 = vmatprep.subr.mxu0 0.0
        %2301 = vmatpush1.msra.mxu0 0.0
        %2302 = vmatprep.subr.mxu0 0.0
        %2303 = vmatpush1.msra.mxu0 0.0
        %2304 = vmatprep.subr.mxu0 0.0
        %2305 = vmatpush1.msra.mxu0 0.0
        %2306 = vmatprep.subr.mxu0 0.0
        %2307 = vmatpush1.msra.mxu0 0.0
        %2308 = vmatprep.mubr.f32.mxu0 0.0
        %2309 = vmatmul.mubr.f32.gmra.mrb[0].mxu0 %v2242
        %v2310 = vpop.f32.mrb[0].mxu0
        %v2311 = vadd.f32 0.0, %v2310
        %v2312 = vpop.f32.mrb[0].mxu0
        %2313 = vdwg.mxu0
        %2316 = vrot.lane.b32.xlu0 %v1931, 8
        %v2317 = vpop.permute.xlu0 %2316
        %2318 = vrot.lane.b32.xlu0 %v2007, 8
        %v2319 = vpop.permute.xlu0 %2318
        %2324 = vrot.lane.b32.xlu0 %v2083, 16
        %v2325 = vpop.permute.xlu0 %2324
        %2326 = vrot.lane.b32.xlu0 %v2159, 16
        %v2327 = vpop.permute.xlu0 %2326
        %2332 = vrot.lane.b32.xlu0 %v2235, 24
        %v2333 = vpop.permute.xlu0 %2332
        %2334 = vrot.lane.b32.xlu0 %v2311, 24
        %v2335 = vpop.permute.xlu0 %2334
        %v2338 = vsel %vm1011, %v1779, %v2317
        %v2339 = vsel %vm1011, %v1855, %v2319
        %vm2340 = vcmask 130048
        %v2341 = vsel %vm2340, %v2338, %v2325
        %v2342 = vsel %vm2340, %v2339, %v2327
        %vm2343 = vcmask 195584
        %v2344 = vsel %vm2343, %v2341, %v2333
        %v2345 = vsel %vm2343, %v2342, %v2335
        %v2346 = vld [vmem:[%s684] sm:$0xff]
        %v2347 = vld [vmem:[%s684 + $0x8] sm:$0xff]
        %v2348 = vld [vmem:[%s684 + $0x10] sm:$0xff]
        %v2349 = vld [vmem:[%s684 + $0x18] sm:$0xff]
        %v2351 = vsel %vm845, %v2344, 0
        %v2354 = vsel %vm845, %v2345, 0
        %2356 = vmatprep.subr.mxu0 0.0
        %2357 = vmatpush1.msra.mxu0 %v2346
        %2358 = vmatprep.subr.mxu0 0.0
        %2359 = vmatpush1.msra.mxu0 %v2347
        %2360 = vmatprep.subr.mxu0 0.0
        %2361 = vmatpush1.msra.mxu0 %v2348
        %2362 = vmatprep.subr.mxu0 0.0
        %2363 = vmatpush1.msra.mxu0 %v2349
        %2364 = vmatprep.subr.mxu0 0.0
        %2365 = vmatpush1.msra.mxu0 0.0
        %2366 = vmatprep.subr.mxu0 0.0
        %2367 = vmatpush1.msra.mxu0 0.0
        %2368 = vmatprep.subr.mxu0 0.0
        %2369 = vmatpush1.msra.mxu0 0.0
        %2370 = vmatprep.subr.mxu0 0.0
        %2371 = vmatpush1.msra.mxu0 0.0
        %2372 = vmatprep.subr.mxu0 0.0
        %2373 = vmatpush1.msra.mxu0 0.0
        %2374 = vmatprep.subr.mxu0 0.0
        %2375 = vmatpush1.msra.mxu0 0.0
        %2376 = vmatprep.subr.mxu0 0.0
        %2377 = vmatpush1.msra.mxu0 0.0
        %2378 = vmatprep.subr.mxu0 0.0
        %2379 = vmatpush1.msra.mxu0 0.0
        %2380 = vmatprep.subr.mxu0 0.0
        %2381 = vmatpush1.msra.mxu0 0.0
        %2382 = vmatprep.subr.mxu0 0.0
        %2383 = vmatpush1.msra.mxu0 0.0
        %2384 = vmatprep.subr.mxu0 0.0
        %2385 = vmatpush1.msra.mxu0 0.0
        %2386 = vmatprep.subr.mxu0 0.0
        %2387 = vmatpush1.msra.mxu0 0.0
        %2388 = vmatprep.subr.mxu0 0.0
        %2389 = vmatpush1.msra.mxu0 0.0
        %2390 = vmatprep.subr.mxu0 0.0
        %2391 = vmatpush1.msra.mxu0 0.0
        %2392 = vmatprep.subr.mxu0 0.0
        %2393 = vmatpush1.msra.mxu0 0.0
        %2394 = vmatprep.subr.mxu0 0.0
        %2395 = vmatpush1.msra.mxu0 0.0
        %2396 = vmatprep.subr.mxu0 0.0
        %2397 = vmatpush1.msra.mxu0 0.0
        %2398 = vmatprep.subr.mxu0 0.0
        %2399 = vmatpush1.msra.mxu0 0.0
        %2400 = vmatprep.subr.mxu0 0.0
        %2401 = vmatpush1.msra.mxu0 0.0
        %2402 = vmatprep.subr.mxu0 0.0
        %2403 = vmatpush1.msra.mxu0 0.0
        %2404 = vmatprep.subr.mxu0 0.0
        %2405 = vmatpush1.msra.mxu0 0.0
        %2406 = vmatprep.subr.mxu0 0.0
        %2407 = vmatpush1.msra.mxu0 0.0
        %2408 = vmatprep.subr.mxu0 0.0
        %2409 = vmatpush1.msra.mxu0 0.0
        %2410 = vmatprep.subr.mxu0 0.0
        %2411 = vmatpush1.msra.mxu0 0.0
        %2412 = vmatprep.subr.mxu0 0.0
        %2413 = vmatpush1.msra.mxu0 0.0
        %2414 = vmatprep.subr.mxu0 0.0
        %2415 = vmatpush1.msra.mxu0 0.0
        %2416 = vmatprep.subr.mxu0 0.0
        %2417 = vmatpush1.msra.mxu0 0.0
        %2418 = vmatprep.subr.mxu0 0.0
        %2419 = vmatpush1.msra.mxu0 0.0
        %2420 = vmatprep.mubr.f32.mxu0 0.0
        %2421 = vmatmul.mubr.f32.gmra.mrb[0].mxu0 %v2351
        %v2422 = vpop.f32.mrb[0].mxu0
        %v2423 = vadd.f32 0.0, %v2422
        %v2424 = vpop.f32.mrb[0].mxu0
        %2425 = vmatprep.mubr.f32.mxu0 0.0
        %2426 = vmatmul.mubr.f32.gmra.mrb[0].mxu0 %v2354
        %v2427 = vpop.f32.mrb[0].mxu0
        %v2428 = vadd.f32 0.0, %v2427
        %v2429 = vpop.f32.mrb[0].mxu0
        %2430 = vdwg.mxu0
        %v2431 = vadd.f32 %v833, %v2423
        %v2432 = vadd.f32 %v834, %v2428
        %v2433 = vld [vmem:[%s687] sm:$0x1]
        %v2435 = vlaneseq
        %v2436 = vshrl.u32 %v2435, 7
        %v2437 = vsub.s32 0, %v2436
        %v2438 = vrot.slane %v2433, %v2437
        %v2440 = vadd.f32 %v2431, %v2438
        %v2441 = vadd.f32 %v2432, %v2438
        %v2442 = vld [vmem:[%s696] sm:$0x1]
        %v2443 = vld [vmem:[%s699] sm:$0x1]
        %v2444 = vsel %vm845, %v2440, 0.0
        %2445 = vadd.xlane.f32.xlu0 %v2444
        %v2446 = vpop.xlane.xlu0 %2445
        %v2447 = vsel %vm845, %v2441, 0.0
        %2448 = vadd.xlane.f32.xlu0 %v2447
        %v2449 = vpop.xlane.xlu0 %2448
        %v2450 = vmul.f32 %v2446, %v852
        %v2451 = vmul.f32 %v2449, %v852
        %v2452 = vsub.f32 %v2440, %v2450
        %v2453 = vsub.f32 %v2441, %v2451
        %v2454 = vmul.f32 %v2452, %v2452
        %v2455 = vmul.f32 %v2453, %v2453
        %v2456 = vsel %vm845, %v2454, 0.0
        %2457 = vadd.xlane.f32.xlu0 %v2456
        %v2458 = vpop.xlane.xlu0 %2457
        %v2459 = vsel %vm845, %v2455, 0.0
        %2460 = vadd.xlane.f32.xlu0 %v2459
        %v2461 = vpop.xlane.xlu0 %2460
        %v2462 = vmul.f32 %v2458, 0.032258064
        %v2463 = vmul.f32 %v2461, 0.032258064
        %v2465 = vlaneseq
        %v2466 = vshrl.u32 %v2465, 7
        %v2467 = vsub.s32 0, %v2466
        %v2468 = vrot.slane %v2442, %v2467
        %v2470 = vmul.f32 %v2468, %v2452
        %v2471 = vmul.f32 %v2468, %v2453
        %v2472 = vrsqrt.pop %v2462
        %v2473 = vmul.f32 %v2462, %v2472
        %vm2474 = vcmp.eq.f32.partialorder %v2462, inf
        %v2475 = vsel %vm2474, %v2462, %v2473
        %vm2476 = vcmp.eq.f32.partialorder %v2462, 0.0
        %v2477 = vand.u32 %v2462, 2147483648
        %v2478 = vsel %vm2476, %v2477, %v2475
        %v2479 = vrsqrt.pop %v2463
        %v2480 = vmul.f32 %v2463, %v2479
        %vm2481 = vcmp.eq.f32.partialorder %v2463, inf
        %v2482 = vsel %vm2481, %v2463, %v2480
        %vm2483 = vcmp.eq.f32.partialorder %v2463, 0.0
        %v2484 = vand.u32 %v2463, 2147483648
        %v2485 = vsel %vm2483, %v2484, %v2482
        %v2486 = vadd.f32 %v2478, 1e-06
        %v2487 = vadd.f32 %v2485, 1e-06
        %v2488 = vrcp.pop %v2486
        %v2489 = vmul.f32 %v2470, %v2488
        %v2490 = vrcp.pop %v2487
        %v2491 = vmul.f32 %v2471, %v2490
        %v2493 = vlaneseq
        %v2494 = vshrl.u32 %v2493, 7
        %v2495 = vsub.s32 0, %v2494
        %v2496 = vrot.slane %v2443, %v2495
        %v2498 = vadd.f32 %v2489, %v2496
        %v2499 = vadd.f32 %v2491, %v2496
        %v2500 = vld [vmem:[%s704] sm:$0xff]
        %v2501 = vld [vmem:[%s704 + $0x8] sm:$0xff]
        %v2502 = vld [vmem:[%s704 + $0x10] sm:$0xff]
        %v2503 = vld [vmem:[%s704 + $0x18] sm:$0xff]
        %v2504 = vld [vmem:[%s704 + $0x80] sm:$0xff]
        %v2505 = vld [vmem:[%s704 + $0x88] sm:$0xff]
        %v2506 = vld [vmem:[%s704 + $0x90] sm:$0xff]
        %v2507 = vld [vmem:[%s704 + $0x98] sm:$0xff]
        %v2508 = vld [vmem:[%s704 + $0x100] sm:$0xff]
        %v2509 = vld [vmem:[%s704 + $0x108] sm:$0xff]
        %v2510 = vld [vmem:[%s704 + $0x110] sm:$0xff]
        %v2511 = vld [vmem:[%s704 + $0x118] sm:$0xff]
        %v2512 = vld [vmem:[%s704 + $0x180] sm:$0xff]
        %v2513 = vld [vmem:[%s704 + $0x188] sm:$0xff]
        %v2514 = vld [vmem:[%s704 + $0x190] sm:$0xff]
        %v2515 = vld [vmem:[%s704 + $0x198] sm:$0xff]
        %v2516 = vld [vmem:[%s708] sm:$0xf]
        %v2518 = vlaneseq
        %v2519 = vshrl.u32 %v2518, 7
        %v2520 = vsub.s32 0, %v2519
        %v2521 = vrot.slane %v2516, %v2520
        %v2522 = vlaneseq
        %v2523 = vshrl.u32 %v2522, 7
        %v2524 = vsub.s32 1, %v2523
        %v2525 = vrot.slane %v2516, %v2524
        %v2526 = vlaneseq
        %v2527 = vshrl.u32 %v2526, 7
        %v2528 = vsub.s32 2, %v2527
        %v2529 = vrot.slane %v2516, %v2528
        %v2530 = vlaneseq
        %v2531 = vshrl.u32 %v2530, 7
        %v2532 = vsub.s32 3, %v2531
        %v2533 = vrot.slane %v2516, %v2532
        %v2539 = vsel %vm845, %v2498, 0
        %v2542 = vsel %vm845, %v2499, 0
        %2544 = vmatprep.subr.mxu0 %v2501
        %2545 = vmatpush1.msra.mxu0 %v2500
        %2546 = vmatprep.subr.mxu0 %v2505
        %2547 = vmatpush1.msra.mxu0 %v2504
        %2548 = vmatprep.subr.mxu0 %v2509
        %2549 = vmatpush1.msra.mxu0 %v2508
        %2550 = vmatprep.subr.mxu0 %v2513
        %2551 = vmatpush1.msra.mxu0 %v2512
        %2552 = vmatprep.subr.mxu0 0.0
        %2553 = vmatpush1.msra.mxu0 0.0
        %2554 = vmatprep.subr.mxu0 0.0
        %2555 = vmatpush1.msra.mxu0 0.0
        %2556 = vmatprep.subr.mxu0 0.0
        %2557 = vmatpush1.msra.mxu0 0.0
        %2558 = vmatprep.subr.mxu0 0.0
        %2559 = vmatpush1.msra.mxu0 0.0
        %2560 = vmatprep.subr.mxu0 0.0
        %2561 = vmatpush1.msra.mxu0 0.0
        %2562 = vmatprep.subr.mxu0 0.0
        %2563 = vmatpush1.msra.mxu0 0.0
        %2564 = vmatprep.subr.mxu0 0.0
        %2565 = vmatpush1.msra.mxu0 0.0
        %2566 = vmatprep.subr.mxu0 0.0
        %2567 = vmatpush1.msra.mxu0 0.0
        %2568 = vmatprep.subr.mxu0 0.0
        %2569 = vmatpush1.msra.mxu0 0.0
        %2570 = vmatprep.subr.mxu0 0.0
        %2571 = vmatpush1.msra.mxu0 0.0
        %2572 = vmatprep.subr.mxu0 0.0
        %2573 = vmatpush1.msra.mxu0 0.0
        %2574 = vmatprep.subr.mxu0 0.0
        %2575 = vmatpush1.msra.mxu0 0.0
        %2576 = vmatprep.subr.mxu0 0.0
        %2577 = vmatpush1.msra.mxu0 0.0
        %2578 = vmatprep.subr.mxu0 0.0
        %2579 = vmatpush1.msra.mxu0 0.0
        %2580 = vmatprep.subr.mxu0 0.0
        %2581 = vmatpush1.msra.mxu0 0.0
        %2582 = vmatprep.subr.mxu0 0.0
        %2583 = vmatpush1.msra.mxu0 0.0
        %2584 = vmatprep.subr.mxu0 0.0
        %2585 = vmatpush1.msra.mxu0 0.0
        %2586 = vmatprep.subr.mxu0 0.0
        %2587 = vmatpush1.msra.mxu0 0.0
        %2588 = vmatprep.subr.mxu0 0.0
        %2589 = vmatpush1.msra.mxu0 0.0
        %2590 = vmatprep.subr.mxu0 0.0
        %2591 = vmatpush1.msra.mxu0 0.0
        %2592 = vmatprep.subr.mxu0 0.0
        %2593 = vmatpush1.msra.mxu0 0.0
        %2594 = vmatprep.subr.mxu0 0.0
        %2595 = vmatpush1.msra.mxu0 0.0
        %2596 = vmatprep.subr.mxu0 0.0
        %2597 = vmatpush1.msra.mxu0 0.0
        %2598 = vmatprep.subr.mxu0 0.0
        %2599 = vmatpush1.msra.mxu0 0.0
        %2600 = vmatprep.subr.mxu0 0.0
        %2601 = vmatpush1.msra.mxu0 0.0
        %2602 = vmatprep.subr.mxu0 0.0
        %2603 = vmatpush1.msra.mxu0 0.0
        %2604 = vmatprep.subr.mxu0 0.0
        %2605 = vmatpush1.msra.mxu0 0.0
        %2606 = vmatprep.subr.mxu0 0.0
        %2607 = vmatpush1.msra.mxu0 0.0
        %2608 = vmatprep.mubr.f32.mxu0 0.0
        %2609 = vmatmul.mubr.f32.gmra.mrb[0].mxu0 %v2539
        %v2610 = vpop.f32.mrb[0].mxu0
        %v2611 = vadd.f32 %v2521, %v2610
        %v2612 = vpop.f32.mrb[0].mxu0
        %v2613 = vadd.f32 %v2525, %v2612
        %2614 = vmatprep.mubr.f32.mxu0 0.0
        %2615 = vmatmul.mubr.f32.gmra.mrb[0].mxu0 %v2542
        %v2616 = vpop.f32.mrb[0].mxu0
        %v2617 = vadd.f32 %v2521, %v2616
        %v2618 = vpop.f32.mrb[0].mxu0
        %v2619 = vadd.f32 %v2525, %v2618
        %2620 = vdwg.mxu0
        %2621 = vmatprep.subr.mxu0 %v2503
        %2622 = vmatpush1.msra.mxu0 %v2502
        %2623 = vmatprep.subr.mxu0 %v2507
        %2624 = vmatpush1.msra.mxu0 %v2506
        %2625 = vmatprep.subr.mxu0 %v2511
        %2626 = vmatpush1.msra.mxu0 %v2510
        %2627 = vmatprep.subr.mxu0 %v2515
        %2628 = vmatpush1.msra.mxu0 %v2514
        %2629 = vmatprep.subr.mxu0 0.0
        %2630 = vmatpush1.msra.mxu0 0.0
        %2631 = vmatprep.subr.mxu0 0.0
        %2632 = vmatpush1.msra.mxu0 0.0
        %2633 = vmatprep.subr.mxu0 0.0
        %2634 = vmatpush1.msra.mxu0 0.0
        %2635 = vmatprep.subr.mxu0 0.0
        %2636 = vmatpush1.msra.mxu0 0.0
        %2637 = vmatprep.subr.mxu0 0.0
        %2638 = vmatpush1.msra.mxu0 0.0
        %2639 = vmatprep.subr.mxu0 0.0
        %2640 = vmatpush1.msra.mxu0 0.0
        %2641 = vmatprep.subr.mxu0 0.0
        %2642 = vmatpush1.msra.mxu0 0.0
        %2643 = vmatprep.subr.mxu0 0.0
        %2644 = vmatpush1.msra.mxu0 0.0
        %2645 = vmatprep.subr.mxu0 0.0
        %2646 = vmatpush1.msra.mxu0 0.0
        %2647 = vmatprep.subr.mxu0 0.0
        %2648 = vmatpush1.msra.mxu0 0.0
        %2649 = vmatprep.subr.mxu0 0.0
        %2650 = vmatpush1.msra.mxu0 0.0
        %2651 = vmatprep.subr.mxu0 0.0
        %2652 = vmatpush1.msra.mxu0 0.0
        %2653 = vmatprep.subr.mxu0 0.0
        %2654 = vmatpush1.msra.mxu0 0.0
        %2655 = vmatprep.subr.mxu0 0.0
        %2656 = vmatpush1.msra.mxu0 0.0
        %2657 = vmatprep.subr.mxu0 0.0
        %2658 = vmatpush1.msra.mxu0 0.0
        %2659 = vmatprep.subr.mxu0 0.0
        %2660 = vmatpush1.msra.mxu0 0.0
        %2661 = vmatprep.subr.mxu0 0.0
        %2662 = vmatpush1.msra.mxu0 0.0
        %2663 = vmatprep.subr.mxu0 0.0
        %2664 = vmatpush1.msra.mxu0 0.0
        %2665 = vmatprep.subr.mxu0 0.0
        %2666 = vmatpush1.msra.mxu0 0.0
        %2667 = vmatprep.subr.mxu0 0.0
        %2668 = vmatpush1.msra.mxu0 0.0
        %2669 = vmatprep.subr.mxu0 0.0
        %2670 = vmatpush1.msra.mxu0 0.0
        %2671 = vmatprep.subr.mxu0 0.0
        %2672 = vmatpush1.msra.mxu0 0.0
        %2673 = vmatprep.subr.mxu0 0.0
        %2674 = vmatpush1.msra.mxu0 0.0
        %2675 = vmatprep.subr.mxu0 0.0
        %2676 = vmatpush1.msra.mxu0 0.0
        %2677 = vmatprep.subr.mxu0 0.0
        %2678 = vmatpush1.msra.mxu0 0.0
        %2679 = vmatprep.subr.mxu0 0.0
        %2680 = vmatpush1.msra.mxu0 0.0
        %2681 = vmatprep.subr.mxu0 0.0
        %2682 = vmatpush1.msra.mxu0 0.0
        %2683 = vmatprep.subr.mxu0 0.0
        %2684 = vmatpush1.msra.mxu0 0.0
        %2685 = vmatprep.mubr.f32.mxu0 0.0
        %2686 = vmatmul.mubr.f32.gmra.mrb[0].mxu0 %v2539
        %v2687 = vpop.f32.mrb[0].mxu0
        %v2688 = vadd.f32 %v2529, %v2687
        %v2689 = vpop.f32.mrb[0].mxu0
        %v2690 = vadd.f32 %v2533, %v2689
        %2691 = vmatprep.mubr.f32.mxu0 0.0
        %2692 = vmatmul.mubr.f32.gmra.mrb[0].mxu0 %v2542
        %v2693 = vpop.f32.mrb[0].mxu0
        %v2694 = vadd.f32 %v2529, %v2693
        %v2695 = vpop.f32.mrb[0].mxu0
        %v2696 = vadd.f32 %v2533, %v2695
        %2697 = vdwg.mxu0
        %v2698 = vmax.f32 %v2611, 0.0
        %v2699 = vmax.f32 %v2613, 0.0
        %v2700 = vmax.f32 %v2688, 0.0
        %v2701 = vmax.f32 %v2690, 0.0
        %v2702 = vmax.f32 %v2617, 0.0
        %v2703 = vmax.f32 %v2619, 0.0
        %v2704 = vmax.f32 %v2694, 0.0
        %v2705 = vmax.f32 %v2696, 0.0
        %v2706 = vld [vmem:[%s713] sm:$0xff]
        %v2707 = vld [vmem:[%s713 + $0x8] sm:$0xff]
        %v2708 = vld [vmem:[%s713 + $0x10] sm:$0xff]
        %v2709 = vld [vmem:[%s713 + $0x18] sm:$0xff]
        %v2710 = vld [vmem:[%s713 + $0x20] sm:$0xff]
        %v2711 = vld [vmem:[%s713 + $0x28] sm:$0xff]
        %v2712 = vld [vmem:[%s713 + $0x30] sm:$0xff]
        %v2713 = vld [vmem:[%s713 + $0x38] sm:$0xff]
        %v2714 = vld [vmem:[%s713 + $0x40] sm:$0xff]
        %v2715 = vld [vmem:[%s713 + $0x48] sm:$0xff]
        %v2716 = vld [vmem:[%s713 + $0x50] sm:$0xff]
        %v2717 = vld [vmem:[%s713 + $0x58] sm:$0xff]
        %v2718 = vld [vmem:[%s713 + $0x60] sm:$0xff]
        %v2719 = vld [vmem:[%s713 + $0x68] sm:$0xff]
        %v2720 = vld [vmem:[%s713 + $0x70] sm:$0xff]
        %v2721 = vld [vmem:[%s713 + $0x78] sm:$0xff]
        %v2722 = vld [vmem:[%s713 + $0x80] sm:$0xff]
        %v2723 = vld [vmem:[%s713 + $0x88] sm:$0xff]
        %v2724 = vld [vmem:[%s713 + $0x90] sm:$0xff]
        %v2725 = vld [vmem:[%s713 + $0x98] sm:$0xff]
        %v2726 = vld [vmem:[%s713 + $0xa0] sm:$0xff]
        %v2727 = vld [vmem:[%s713 + $0xa8] sm:$0xff]
        %v2728 = vld [vmem:[%s713 + $0xb0] sm:$0xff]
        %v2729 = vld [vmem:[%s713 + $0xb8] sm:$0xff]
        %v2730 = vld [vmem:[%s713 + $0xc0] sm:$0xff]
        %v2731 = vld [vmem:[%s713 + $0xc8] sm:$0xff]
        %v2732 = vld [vmem:[%s713 + $0xd0] sm:$0xff]
        %v2733 = vld [vmem:[%s713 + $0xd8] sm:$0xff]
        %v2734 = vld [vmem:[%s713 + $0xe0] sm:$0xff]
        %v2735 = vld [vmem:[%s713 + $0xe8] sm:$0xff]
        %v2736 = vld [vmem:[%s713 + $0xf0] sm:$0xff]
        %v2737 = vld [vmem:[%s713 + $0xf8] sm:$0xff]
        %v2738 = vld [vmem:[%s713 + $0x100] sm:$0xff]
        %v2739 = vld [vmem:[%s713 + $0x108] sm:$0xff]
        %v2740 = vld [vmem:[%s713 + $0x110] sm:$0xff]
        %v2741 = vld [vmem:[%s713 + $0x118] sm:$0xff]
        %v2742 = vld [vmem:[%s713 + $0x120] sm:$0xff]
        %v2743 = vld [vmem:[%s713 + $0x128] sm:$0xff]
        %v2744 = vld [vmem:[%s713 + $0x130] sm:$0xff]
        %v2745 = vld [vmem:[%s713 + $0x138] sm:$0xff]
        %v2746 = vld [vmem:[%s713 + $0x140] sm:$0xff]
        %v2747 = vld [vmem:[%s713 + $0x148] sm:$0xff]
        %v2748 = vld [vmem:[%s713 + $0x150] sm:$0xff]
        %v2749 = vld [vmem:[%s713 + $0x158] sm:$0xff]
        %v2750 = vld [vmem:[%s713 + $0x160] sm:$0xff]
        %v2751 = vld [vmem:[%s713 + $0x168] sm:$0xff]
        %v2752 = vld [vmem:[%s713 + $0x170] sm:$0xff]
        %v2753 = vld [vmem:[%s713 + $0x178] sm:$0xff]
        %v2754 = vld [vmem:[%s713 + $0x180] sm:$0xff]
        %v2755 = vld [vmem:[%s713 + $0x188] sm:$0xff]
        %v2756 = vld [vmem:[%s713 + $0x190] sm:$0xff]
        %v2757 = vld [vmem:[%s713 + $0x198] sm:$0xff]
        %v2758 = vld [vmem:[%s713 + $0x1a0] sm:$0xff]
        %v2759 = vld [vmem:[%s713 + $0x1a8] sm:$0xff]
        %v2760 = vld [vmem:[%s713 + $0x1b0] sm:$0xff]
        %v2761 = vld [vmem:[%s713 + $0x1b8] sm:$0xff]
        %v2762 = vld [vmem:[%s713 + $0x1c0] sm:$0xff]
        %v2763 = vld [vmem:[%s713 + $0x1c8] sm:$0xff]
        %v2764 = vld [vmem:[%s713 + $0x1d0] sm:$0xff]
        %v2765 = vld [vmem:[%s713 + $0x1d8] sm:$0xff]
        %v2766 = vld [vmem:[%s713 + $0x1e0] sm:$0xff]
        %v2767 = vld [vmem:[%s713 + $0x1e8] sm:$0xff]
        %v2768 = vld [vmem:[%s713 + $0x1f0] sm:$0xff]
        %v2769 = vld [vmem:[%s713 + $0x1f8] sm:$0xff]
        %v2770 = vld [vmem:[%s704 + $0x20] sm:$0xff]
        %v2771 = vld [vmem:[%s704 + $0x28] sm:$0xff]
        %v2772 = vld [vmem:[%s704 + $0x30] sm:$0xff]
        %v2773 = vld [vmem:[%s704 + $0x38] sm:$0xff]
        %v2774 = vld [vmem:[%s704 + $0xa0] sm:$0xff]
        %v2775 = vld [vmem:[%s704 + $0xa8] sm:$0xff]
        %v2776 = vld [vmem:[%s704 + $0xb0] sm:$0xff]
        %v2777 = vld [vmem:[%s704 + $0xb8] sm:$0xff]
        %v2778 = vld [vmem:[%s704 + $0x120] sm:$0xff]
        %v2779 = vld [vmem:[%s704 + $0x128] sm:$0xff]
        %v2780 = vld [vmem:[%s704 + $0x130] sm:$0xff]
        %v2781 = vld [vmem:[%s704 + $0x138] sm:$0xff]
        %v2782 = vld [vmem:[%s704 + $0x1a0] sm:$0xff]
        %v2783 = vld [vmem:[%s704 + $0x1a8] sm:$0xff]
        %v2784 = vld [vmem:[%s704 + $0x1b0] sm:$0xff]
        %v2785 = vld [vmem:[%s704 + $0x1b8] sm:$0xff]
        %v2786 = vld [vmem:[%s708 + $0x4] sm:$0xf]
        %v2788 = vlaneseq
        %v2789 = vshrl.u32 %v2788, 7
        %v2790 = vsub.s32 0, %v2789
        %v2791 = vrot.slane %v2786, %v2790
        %v2792 = vlaneseq
        %v2793 = vshrl.u32 %v2792, 7
        %v2794 = vsub.s32 1, %v2793
        %v2795 = vrot.slane %v2786, %v2794
        %v2796 = vlaneseq
        %v2797 = vshrl.u32 %v2796, 7
        %v2798 = vsub.s32 2, %v2797
        %v2799 = vrot.slane %v2786, %v2798
        %v2800 = vlaneseq
        %v2801 = vshrl.u32 %v2800, 7
        %v2802 = vsub.s32 3, %v2801
        %v2803 = vrot.slane %v2786, %v2802
        %2808 = vmatprep.subr.mxu0 %v2771
        %2809 = vmatpush1.msra.mxu0 %v2770
        %2810 = vmatprep.subr.mxu0 %v2775
        %2811 = vmatpush1.msra.mxu0 %v2774
        %2812 = vmatprep.subr.mxu0 %v2779
        %2813 = vmatpush1.msra.mxu0 %v2778
        %2814 = vmatprep.subr.mxu0 %v2783
        %2815 = vmatpush1.msra.mxu0 %v2782
        %2816 = vmatprep.subr.mxu0 0.0
        %2817 = vmatpush1.msra.mxu0 0.0
        %2818 = vmatprep.subr.mxu0 0.0
        %2819 = vmatpush1.msra.mxu0 0.0
        %2820 = vmatprep.subr.mxu0 0.0
        %2821 = vmatpush1.msra.mxu0 0.0
        %2822 = vmatprep.subr.mxu0 0.0
        %2823 = vmatpush1.msra.mxu0 0.0
        %2824 = vmatprep.subr.mxu0 0.0
        %2825 = vmatpush1.msra.mxu0 0.0
        %2826 = vmatprep.subr.mxu0 0.0
        %2827 = vmatpush1.msra.mxu0 0.0
        %2828 = vmatprep.subr.mxu0 0.0
        %2829 = vmatpush1.msra.mxu0 0.0
        %2830 = vmatprep.subr.mxu0 0.0
        %2831 = vmatpush1.msra.mxu0 0.0
        %2832 = vmatprep.subr.mxu0 0.0
        %2833 = vmatpush1.msra.mxu0 0.0
        %2834 = vmatprep.subr.mxu0 0.0
        %2835 = vmatpush1.msra.mxu0 0.0
        %2836 = vmatprep.subr.mxu0 0.0
        %2837 = vmatpush1.msra.mxu0 0.0
        %2838 = vmatprep.subr.mxu0 0.0
        %2839 = vmatpush1.msra.mxu0 0.0
        %2840 = vmatprep.subr.mxu0 0.0
        %2841 = vmatpush1.msra.mxu0 0.0
        %2842 = vmatprep.subr.mxu0 0.0
        %2843 = vmatpush1.msra.mxu0 0.0
        %2844 = vmatprep.subr.mxu0 0.0
        %2845 = vmatpush1.msra.mxu0 0.0
        %2846 = vmatprep.subr.mxu0 0.0
        %2847 = vmatpush1.msra.mxu0 0.0
        %2848 = vmatprep.subr.mxu0 0.0
        %2849 = vmatpush1.msra.mxu0 0.0
        %2850 = vmatprep.subr.mxu0 0.0
        %2851 = vmatpush1.msra.mxu0 0.0
        %2852 = vmatprep.subr.mxu0 0.0
        %2853 = vmatpush1.msra.mxu0 0.0
        %2854 = vmatprep.subr.mxu0 0.0
        %2855 = vmatpush1.msra.mxu0 0.0
        %2856 = vmatprep.subr.mxu0 0.0
        %2857 = vmatpush1.msra.mxu0 0.0
        %2858 = vmatprep.subr.mxu0 0.0
        %2859 = vmatpush1.msra.mxu0 0.0
        %2860 = vmatprep.subr.mxu0 0.0
        %2861 = vmatpush1.msra.mxu0 0.0
        %2862 = vmatprep.subr.mxu0 0.0
        %2863 = vmatpush1.msra.mxu0 0.0
        %2864 = vmatprep.subr.mxu0 0.0
        %2865 = vmatpush1.msra.mxu0 0.0
        %2866 = vmatprep.subr.mxu0 0.0
        %2867 = vmatpush1.msra.mxu0 0.0
        %2868 = vmatprep.subr.mxu0 0.0
        %2869 = vmatpush1.msra.mxu0 0.0
        %2870 = vmatprep.subr.mxu0 0.0
        %2871 = vmatpush1.msra.mxu0 0.0
        %2872 = vmatprep.mubr.f32.mxu0 0.0
        %2873 = vmatmul.mubr.f32.gmra.mrb[0].mxu0 %v2539
        %v2874 = vpop.f32.mrb[0].mxu0
        %v2875 = vadd.f32 %v2791, %v2874
        %v2876 = vpop.f32.mrb[0].mxu0
        %v2877 = vadd.f32 %v2795, %v2876
        %2878 = vmatprep.mubr.f32.mxu0 0.0
        %2879 = vmatmul.mubr.f32.gmra.mrb[0].mxu0 %v2542
        %v2880 = vpop.f32.mrb[0].mxu0
        %v2881 = vadd.f32 %v2791, %v2880
        %v2882 = vpop.f32.mrb[0].mxu0
        %v2883 = vadd.f32 %v2795, %v2882
        %2884 = vdwg.mxu0
        %2885 = vmatprep.subr.mxu0 %v2773
        %2886 = vmatpush1.msra.mxu0 %v2772
        %2887 = vmatprep.subr.mxu0 %v2777
        %2888 = vmatpush1.msra.mxu0 %v2776
        %2889 = vmatprep.subr.mxu0 %v2781
        %2890 = vmatpush1.msra.mxu0 %v2780
        %2891 = vmatprep.subr.mxu0 %v2785
        %2892 = vmatpush1.msra.mxu0 %v2784
        %2893 = vmatprep.subr.mxu0 0.0
        %2894 = vmatpush1.msra.mxu0 0.0
        %2895 = vmatprep.subr.mxu0 0.0
        %2896 = vmatpush1.msra.mxu0 0.0
        %2897 = vmatprep.subr.mxu0 0.0
        %2898 = vmatpush1.msra.mxu0 0.0
        %2899 = vmatprep.subr.mxu0 0.0
        %2900 = vmatpush1.msra.mxu0 0.0
        %2901 = vmatprep.subr.mxu0 0.0
        %2902 = vmatpush1.msra.mxu0 0.0
        %2903 = vmatprep.subr.mxu0 0.0
        %2904 = vmatpush1.msra.mxu0 0.0
        %2905 = vmatprep.subr.mxu0 0.0
        %2906 = vmatpush1.msra.mxu0 0.0
        %2907 = vmatprep.subr.mxu0 0.0
        %2908 = vmatpush1.msra.mxu0 0.0
        %2909 = vmatprep.subr.mxu0 0.0
        %2910 = vmatpush1.msra.mxu0 0.0
        %2911 = vmatprep.subr.mxu0 0.0
        %2912 = vmatpush1.msra.mxu0 0.0
        %2913 = vmatprep.subr.mxu0 0.0
        %2914 = vmatpush1.msra.mxu0 0.0
        %2915 = vmatprep.subr.mxu0 0.0
        %2916 = vmatpush1.msra.mxu0 0.0
        %2917 = vmatprep.subr.mxu0 0.0
        %2918 = vmatpush1.msra.mxu0 0.0
        %2919 = vmatprep.subr.mxu0 0.0
        %2920 = vmatpush1.msra.mxu0 0.0
        %2921 = vmatprep.subr.mxu0 0.0
        %2922 = vmatpush1.msra.mxu0 0.0
        %2923 = vmatprep.subr.mxu0 0.0
        %2924 = vmatpush1.msra.mxu0 0.0
        %2925 = vmatprep.subr.mxu0 0.0
        %2926 = vmatpush1.msra.mxu0 0.0
        %2927 = vmatprep.subr.mxu0 0.0
        %2928 = vmatpush1.msra.mxu0 0.0
        %2929 = vmatprep.subr.mxu0 0.0
        %2930 = vmatpush1.msra.mxu0 0.0
        %2931 = vmatprep.subr.mxu0 0.0
        %2932 = vmatpush1.msra.mxu0 0.0
        %2933 = vmatprep.subr.mxu0 0.0
        %2934 = vmatpush1.msra.mxu0 0.0
        %2935 = vmatprep.subr.mxu0 0.0
        %2936 = vmatpush1.msra.mxu0 0.0
        %2937 = vmatprep.subr.mxu0 0.0
        %2938 = vmatpush1.msra.mxu0 0.0
        %2939 = vmatprep.subr.mxu0 0.0
        %2940 = vmatpush1.msra.mxu0 0.0
        %2941 = vmatprep.subr.mxu0 0.0
        %2942 = vmatpush1.msra.mxu0 0.0
        %2943 = vmatprep.subr.mxu0 0.0
        %2944 = vmatpush1.msra.mxu0 0.0
        %2945 = vmatprep.subr.mxu0 0.0
        %2946 = vmatpush1.msra.mxu0 0.0
        %2947 = vmatprep.subr.mxu0 0.0
        %2948 = vmatpush1.msra.mxu0 0.0
        %2949 = vmatprep.mubr.f32.mxu0 0.0
        %2950 = vmatmul.mubr.f32.gmra.mrb[0].mxu0 %v2539
        %v2951 = vpop.f32.mrb[0].mxu0
        %v2952 = vadd.f32 %v2799, %v2951
        %v2953 = vpop.f32.mrb[0].mxu0
        %v2954 = vadd.f32 %v2803, %v2953
        %2955 = vmatprep.mubr.f32.mxu0 0.0
        %2956 = vmatmul.mubr.f32.gmra.mrb[0].mxu0 %v2542
        %v2957 = vpop.f32.mrb[0].mxu0
        %v2958 = vadd.f32 %v2799, %v2957
        %v2959 = vpop.f32.mrb[0].mxu0
        %v2960 = vadd.f32 %v2803, %v2959
        %2961 = vdwg.mxu0
        %v2962 = vmax.f32 %v2875, 0.0
        %v2963 = vmax.f32 %v2877, 0.0
        %v2964 = vmax.f32 %v2952, 0.0
        %v2965 = vmax.f32 %v2954, 0.0
        %v2966 = vmax.f32 %v2881, 0.0
        %v2967 = vmax.f32 %v2883, 0.0
        %v2968 = vmax.f32 %v2958, 0.0
        %v2969 = vmax.f32 %v2960, 0.0
        %v2970 = vld [vmem:[%s713 + $0x200] sm:$0xff]
        %v2971 = vld [vmem:[%s713 + $0x208] sm:$0xff]
        %v2972 = vld [vmem:[%s713 + $0x210] sm:$0xff]
        %v2973 = vld [vmem:[%s713 + $0x218] sm:$0xff]
        %v2974 = vld [vmem:[%s713 + $0x220] sm:$0xff]
        %v2975 = vld [vmem:[%s713 + $0x228] sm:$0xff]
        %v2976 = vld [vmem:[%s713 + $0x230] sm:$0xff]
        %v2977 = vld [vmem:[%s713 + $0x238] sm:$0xff]
        %v2978 = vld [vmem:[%s713 + $0x240] sm:$0xff]
        %v2979 = vld [vmem:[%s713 + $0x248] sm:$0xff]
        %v2980 = vld [vmem:[%s713 + $0x250] sm:$0xff]
        %v2981 = vld [vmem:[%s713 + $0x258] sm:$0xff]
        %v2982 = vld [vmem:[%s713 + $0x260] sm:$0xff]
        %v2983 = vld [vmem:[%s713 + $0x268] sm:$0xff]
        %v2984 = vld [vmem:[%s713 + $0x270] sm:$0xff]
        %v2985 = vld [vmem:[%s713 + $0x278] sm:$0xff]
        %v2986 = vld [vmem:[%s713 + $0x280] sm:$0xff]
        %v2987 = vld [vmem:[%s713 + $0x288] sm:$0xff]
        %v2988 = vld [vmem:[%s713 + $0x290] sm:$0xff]
        %v2989 = vld [vmem:[%s713 + $0x298] sm:$0xff]
        %v2990 = vld [vmem:[%s713 + $0x2a0] sm:$0xff]
        %v2991 = vld [vmem:[%s713 + $0x2a8] sm:$0xff]
        %v2992 = vld [vmem:[%s713 + $0x2b0] sm:$0xff]
        %v2993 = vld [vmem:[%s713 + $0x2b8] sm:$0xff]
        %v2994 = vld [vmem:[%s713 + $0x2c0] sm:$0xff]
        %v2995 = vld [vmem:[%s713 + $0x2c8] sm:$0xff]
        %v2996 = vld [vmem:[%s713 + $0x2d0] sm:$0xff]
        %v2997 = vld [vmem:[%s713 + $0x2d8] sm:$0xff]
        %v2998 = vld [vmem:[%s713 + $0x2e0] sm:$0xff]
        %v2999 = vld [vmem:[%s713 + $0x2e8] sm:$0xff]
        %v3000 = vld [vmem:[%s713 + $0x2f0] sm:$0xff]
        %v3001 = vld [vmem:[%s713 + $0x2f8] sm:$0xff]
        %v3002 = vld [vmem:[%s713 + $0x300] sm:$0xff]
        %v3003 = vld [vmem:[%s713 + $0x308] sm:$0xff]
        %v3004 = vld [vmem:[%s713 + $0x310] sm:$0xff]
        %v3005 = vld [vmem:[%s713 + $0x318] sm:$0xff]
        %v3006 = vld [vmem:[%s713 + $0x320] sm:$0xff]
        %v3007 = vld [vmem:[%s713 + $0x328] sm:$0xff]
        %v3008 = vld [vmem:[%s713 + $0x330] sm:$0xff]
        %v3009 = vld [vmem:[%s713 + $0x338] sm:$0xff]
        %v3010 = vld [vmem:[%s713 + $0x340] sm:$0xff]
        %v3011 = vld [vmem:[%s713 + $0x348] sm:$0xff]
        %v3012 = vld [vmem:[%s713 + $0x350] sm:$0xff]
        %v3013 = vld [vmem:[%s713 + $0x358] sm:$0xff]
        %v3014 = vld [vmem:[%s713 + $0x360] sm:$0xff]
        %v3015 = vld [vmem:[%s713 + $0x368] sm:$0xff]
        %v3016 = vld [vmem:[%s713 + $0x370] sm:$0xff]
        %v3017 = vld [vmem:[%s713 + $0x378] sm:$0xff]
        %v3018 = vld [vmem:[%s713 + $0x380] sm:$0xff]
        %v3019 = vld [vmem:[%s713 + $0x388] sm:$0xff]
        %v3020 = vld [vmem:[%s713 + $0x390] sm:$0xff]
        %v3021 = vld [vmem:[%s713 + $0x398] sm:$0xff]
        %v3022 = vld [vmem:[%s713 + $0x3a0] sm:$0xff]
        %v3023 = vld [vmem:[%s713 + $0x3a8] sm:$0xff]
        %v3024 = vld [vmem:[%s713 + $0x3b0] sm:$0xff]
        %v3025 = vld [vmem:[%s713 + $0x3b8] sm:$0xff]
        %v3026 = vld [vmem:[%s713 + $0x3c0] sm:$0xff]
        %v3027 = vld [vmem:[%s713 + $0x3c8] sm:$0xff]
        %v3028 = vld [vmem:[%s713 + $0x3d0] sm:$0xff]
        %v3029 = vld [vmem:[%s713 + $0x3d8] sm:$0xff]
        %v3030 = vld [vmem:[%s713 + $0x3e0] sm:$0xff]
        %v3031 = vld [vmem:[%s713 + $0x3e8] sm:$0xff]
        %v3032 = vld [vmem:[%s713 + $0x3f0] sm:$0xff]
        %v3033 = vld [vmem:[%s713 + $0x3f8] sm:$0xff]
        %3034 = vmatprep.subr.mxu0 0.0
        %3035 = vmatpush1.msra.mxu0 %v2970
        %3036 = vmatprep.subr.mxu0 0.0
        %3037 = vmatpush1.msra.mxu0 %v2971
        %3038 = vmatprep.subr.mxu0 0.0
        %3039 = vmatpush1.msra.mxu0 %v2972
        %3040 = vmatprep.subr.mxu0 0.0
        %3041 = vmatpush1.msra.mxu0 %v2973
        %3042 = vmatprep.subr.mxu0 0.0
        %3043 = vmatpush1.msra.mxu0 %v2974
        %3044 = vmatprep.subr.mxu0 0.0
        %3045 = vmatpush1.msra.mxu0 %v2975
        %3046 = vmatprep.subr.mxu0 0.0
        %3047 = vmatpush1.msra.mxu0 %v2976
        %3048 = vmatprep.subr.mxu0 0.0
        %3049 = vmatpush1.msra.mxu0 %v2977
        %3050 = vmatprep.subr.mxu0 0.0
        %3051 = vmatpush1.msra.mxu0 %v2978
        %3052 = vmatprep.subr.mxu0 0.0
        %3053 = vmatpush1.msra.mxu0 %v2979
        %3054 = vmatprep.subr.mxu0 0.0
        %3055 = vmatpush1.msra.mxu0 %v2980
        %3056 = vmatprep.subr.mxu0 0.0
        %3057 = vmatpush1.msra.mxu0 %v2981
        %3058 = vmatprep.subr.mxu0 0.0
        %3059 = vmatpush1.msra.mxu0 %v2982
        %3060 = vmatprep.subr.mxu0 0.0
        %3061 = vmatpush1.msra.mxu0 %v2983
        %3062 = vmatprep.subr.mxu0 0.0
        %3063 = vmatpush1.msra.mxu0 %v2984
        %3064 = vmatprep.subr.mxu0 0.0
        %3065 = vmatpush1.msra.mxu0 %v2985
        %3066 = vmatprep.subr.mxu0 0.0
        %3067 = vmatpush1.msra.mxu0 %v2986
        %3068 = vmatprep.subr.mxu0 0.0
        %3069 = vmatpush1.msra.mxu0 %v2987
        %3070 = vmatprep.subr.mxu0 0.0
        %3071 = vmatpush1.msra.mxu0 %v2988
        %3072 = vmatprep.subr.mxu0 0.0
        %3073 = vmatpush1.msra.mxu0 %v2989
        %3074 = vmatprep.subr.mxu0 0.0
        %3075 = vmatpush1.msra.mxu0 %v2990
        %3076 = vmatprep.subr.mxu0 0.0
        %3077 = vmatpush1.msra.mxu0 %v2991
        %3078 = vmatprep.subr.mxu0 0.0
        %3079 = vmatpush1.msra.mxu0 %v2992
        %3080 = vmatprep.subr.mxu0 0.0
        %3081 = vmatpush1.msra.mxu0 %v2993
        %3082 = vmatprep.subr.mxu0 0.0
        %3083 = vmatpush1.msra.mxu0 %v2994
        %3084 = vmatprep.subr.mxu0 0.0
        %3085 = vmatpush1.msra.mxu0 %v2995
        %3086 = vmatprep.subr.mxu0 0.0
        %3087 = vmatpush1.msra.mxu0 %v2996
        %3088 = vmatprep.subr.mxu0 0.0
        %3089 = vmatpush1.msra.mxu0 %v2997
        %3090 = vmatprep.subr.mxu0 0.0
        %3091 = vmatpush1.msra.mxu0 %v2998
        %3092 = vmatprep.subr.mxu0 0.0
        %3093 = vmatpush1.msra.mxu0 %v2999
        %3094 = vmatprep.subr.mxu0 0.0
        %3095 = vmatpush1.msra.mxu0 %v3000
        %3096 = vmatprep.subr.mxu0 0.0
        %3097 = vmatpush1.msra.mxu0 %v3001
        %3098 = vmatprep.mubr.f32.mxu0 %v2963
        %3099 = vmatmul.mubr.f32.gmra.mrb[0].mxu0 %v2962
        %v3100 = vpop.f32.mrb[0].mxu0
        %v3101 = vadd.f32 0.0, %v3100
        %v3102 = vpop.f32.mrb[0].mxu0
        %3103 = vmatprep.mubr.f32.mxu0 %v2967
        %3104 = vmatmul.mubr.f32.gmra.mrb[0].mxu0 %v2966
        %v3105 = vpop.f32.mrb[0].mxu0
        %v3106 = vadd.f32 0.0, %v3105
        %v3107 = vpop.f32.mrb[0].mxu0
        %3108 = vdwg.mxu0
        %3109 = vmatprep.subr.mxu0 0.0
        %3110 = vmatpush1.msra.mxu0 %v3002
        %3111 = vmatprep.subr.mxu0 0.0
        %3112 = vmatpush1.msra.mxu0 %v3003
        %3113 = vmatprep.subr.mxu0 0.0
        %3114 = vmatpush1.msra.mxu0 %v3004
        %3115 = vmatprep.subr.mxu0 0.0
        %3116 = vmatpush1.msra.mxu0 %v3005
        %3117 = vmatprep.subr.mxu0 0.0
        %3118 = vmatpush1.msra.mxu0 %v3006
        %3119 = vmatprep.subr.mxu0 0.0
        %3120 = vmatpush1.msra.mxu0 %v3007
        %3121 = vmatprep.subr.mxu0 0.0
        %3122 = vmatpush1.msra.mxu0 %v3008
        %3123 = vmatprep.subr.mxu0 0.0
        %3124 = vmatpush1.msra.mxu0 %v3009
        %3125 = vmatprep.subr.mxu0 0.0
        %3126 = vmatpush1.msra.mxu0 %v3010
        %3127 = vmatprep.subr.mxu0 0.0
        %3128 = vmatpush1.msra.mxu0 %v3011
        %3129 = vmatprep.subr.mxu0 0.0
        %3130 = vmatpush1.msra.mxu0 %v3012
        %3131 = vmatprep.subr.mxu0 0.0
        %3132 = vmatpush1.msra.mxu0 %v3013
        %3133 = vmatprep.subr.mxu0 0.0
        %3134 = vmatpush1.msra.mxu0 %v3014
        %3135 = vmatprep.subr.mxu0 0.0
        %3136 = vmatpush1.msra.mxu0 %v3015
        %3137 = vmatprep.subr.mxu0 0.0
        %3138 = vmatpush1.msra.mxu0 %v3016
        %3139 = vmatprep.subr.mxu0 0.0
        %3140 = vmatpush1.msra.mxu0 %v3017
        %3141 = vmatprep.subr.mxu0 0.0
        %3142 = vmatpush1.msra.mxu0 %v3018
        %3143 = vmatprep.subr.mxu0 0.0
        %3144 = vmatpush1.msra.mxu0 %v3019
        %3145 = vmatprep.subr.mxu0 0.0
        %3146 = vmatpush1.msra.mxu0 %v3020
        %3147 = vmatprep.subr.mxu0 0.0
        %3148 = vmatpush1.msra.mxu0 %v3021
        %3149 = vmatprep.subr.mxu0 0.0
        %3150 = vmatpush1.msra.mxu0 %v3022
        %3151 = vmatprep.subr.mxu0 0.0
        %3152 = vmatpush1.msra.mxu0 %v3023
        %3153 = vmatprep.subr.mxu0 0.0
        %3154 = vmatpush1.msra.mxu0 %v3024
        %3155 = vmatprep.subr.mxu0 0.0
        %3156 = vmatpush1.msra.mxu0 %v3025
        %3157 = vmatprep.subr.mxu0 0.0
        %3158 = vmatpush1.msra.mxu0 %v3026
        %3159 = vmatprep.subr.mxu0 0.0
        %3160 = vmatpush1.msra.mxu0 %v3027
        %3161 = vmatprep.subr.mxu0 0.0
        %3162 = vmatpush1.msra.mxu0 %v3028
        %3163 = vmatprep.subr.mxu0 0.0
        %3164 = vmatpush1.msra.mxu0 %v3029
        %3165 = vmatprep.subr.mxu0 0.0
        %3166 = vmatpush1.msra.mxu0 %v3030
        %3167 = vmatprep.subr.mxu0 0.0
        %3168 = vmatpush1.msra.mxu0 %v3031
        %3169 = vmatprep.subr.mxu0 0.0
        %3170 = vmatpush1.msra.mxu0 %v3032
        %3171 = vmatprep.subr.mxu0 0.0
        %3172 = vmatpush1.msra.mxu0 %v3033
        %3173 = vmatprep.mubr.f32.mxu0 %v2965
        %3174 = vmatmul.mubr.f32.gmra.mrb[0].mxu0 %v2964
        %v3175 = vpop.f32.mrb[0].mxu0
        %v3176 = vadd.f32 %v3101, %v3175
        %v3177 = vpop.f32.mrb[0].mxu0
        %3178 = vmatprep.mubr.f32.mxu0 %v2969
        %3179 = vmatmul.mubr.f32.gmra.mrb[0].mxu0 %v2968
        %v3180 = vpop.f32.mrb[0].mxu0
        %v3181 = vadd.f32 %v3106, %v3180
        %v3182 = vpop.f32.mrb[0].mxu0
        %3183 = vdwg.mxu0
        %3184 = vmatprep.subr.mxu0 0.0
        %3185 = vmatpush1.msra.mxu0 %v2706
        %3186 = vmatprep.subr.mxu0 0.0
        %3187 = vmatpush1.msra.mxu0 %v2707
        %3188 = vmatprep.subr.mxu0 0.0
        %3189 = vmatpush1.msra.mxu0 %v2708
        %3190 = vmatprep.subr.mxu0 0.0
        %3191 = vmatpush1.msra.mxu0 %v2709
        %3192 = vmatprep.subr.mxu0 0.0
        %3193 = vmatpush1.msra.mxu0 %v2710
        %3194 = vmatprep.subr.mxu0 0.0
        %3195 = vmatpush1.msra.mxu0 %v2711
        %3196 = vmatprep.subr.mxu0 0.0
        %3197 = vmatpush1.msra.mxu0 %v2712
        %3198 = vmatprep.subr.mxu0 0.0
        %3199 = vmatpush1.msra.mxu0 %v2713
        %3200 = vmatprep.subr.mxu0 0.0
        %3201 = vmatpush1.msra.mxu0 %v2714
        %3202 = vmatprep.subr.mxu0 0.0
        %3203 = vmatpush1.msra.mxu0 %v2715
        %3204 = vmatprep.subr.mxu0 0.0
        %3205 = vmatpush1.msra.mxu0 %v2716
        %3206 = vmatprep.subr.mxu0 0.0
        %3207 = vmatpush1.msra.mxu0 %v2717
        %3208 = vmatprep.subr.mxu0 0.0
        %3209 = vmatpush1.msra.mxu0 %v2718
        %3210 = vmatprep.subr.mxu0 0.0
        %3211 = vmatpush1.msra.mxu0 %v2719
        %3212 = vmatprep.subr.mxu0 0.0
        %3213 = vmatpush1.msra.mxu0 %v2720
        %3214 = vmatprep.subr.mxu0 0.0
        %3215 = vmatpush1.msra.mxu0 %v2721
        %3216 = vmatprep.subr.mxu0 0.0
        %3217 = vmatpush1.msra.mxu0 %v2722
        %3218 = vmatprep.subr.mxu0 0.0
        %3219 = vmatpush1.msra.mxu0 %v2723
        %3220 = vmatprep.subr.mxu0 0.0
        %3221 = vmatpush1.msra.mxu0 %v2724
        %3222 = vmatprep.subr.mxu0 0.0
        %3223 = vmatpush1.msra.mxu0 %v2725
        %3224 = vmatprep.subr.mxu0 0.0
        %3225 = vmatpush1.msra.mxu0 %v2726
        %3226 = vmatprep.subr.mxu0 0.0
        %3227 = vmatpush1.msra.mxu0 %v2727
        %3228 = vmatprep.subr.mxu0 0.0
        %3229 = vmatpush1.msra.mxu0 %v2728
        %3230 = vmatprep.subr.mxu0 0.0
        %3231 = vmatpush1.msra.mxu0 %v2729
        %3232 = vmatprep.subr.mxu0 0.0
        %3233 = vmatpush1.msra.mxu0 %v2730
        %3234 = vmatprep.subr.mxu0 0.0
        %3235 = vmatpush1.msra.mxu0 %v2731
        %3236 = vmatprep.subr.mxu0 0.0
        %3237 = vmatpush1.msra.mxu0 %v2732
        %3238 = vmatprep.subr.mxu0 0.0
        %3239 = vmatpush1.msra.mxu0 %v2733
        %3240 = vmatprep.subr.mxu0 0.0
        %3241 = vmatpush1.msra.mxu0 %v2734
        %3242 = vmatprep.subr.mxu0 0.0
        %3243 = vmatpush1.msra.mxu0 %v2735
        %3244 = vmatprep.subr.mxu0 0.0
        %3245 = vmatpush1.msra.mxu0 %v2736
        %3246 = vmatprep.subr.mxu0 0.0
        %3247 = vmatpush1.msra.mxu0 %v2737
        %3248 = vmatprep.mubr.f32.mxu0 %v2699
        %3249 = vmatmul.mubr.f32.gmra.mrb[0].mxu0 %v2698
        %v3250 = vpop.f32.mrb[0].mxu0
        %v3251 = vadd.f32 %v3176, %v3250
        %v3252 = vpop.f32.mrb[0].mxu0
        %3253 = vmatprep.mubr.f32.mxu0 %v2703
        %3254 = vmatmul.mubr.f32.gmra.mrb[0].mxu0 %v2702
        %v3255 = vpop.f32.mrb[0].mxu0
        %v3256 = vadd.f32 %v3181, %v3255
        %v3257 = vpop.f32.mrb[0].mxu0
        %3258 = vdwg.mxu0
        %3259 = vmatprep.subr.mxu0 0.0
        %3260 = vmatpush1.msra.mxu0 %v2738
        %3261 = vmatprep.subr.mxu0 0.0
        %3262 = vmatpush1.msra.mxu0 %v2739
        %3263 = vmatprep.subr.mxu0 0.0
        %3264 = vmatpush1.msra.mxu0 %v2740
        %3265 = vmatprep.subr.mxu0 0.0
        %3266 = vmatpush1.msra.mxu0 %v2741
        %3267 = vmatprep.subr.mxu0 0.0
        %3268 = vmatpush1.msra.mxu0 %v2742
        %3269 = vmatprep.subr.mxu0 0.0
        %3270 = vmatpush1.msra.mxu0 %v2743
        %3271 = vmatprep.subr.mxu0 0.0
        %3272 = vmatpush1.msra.mxu0 %v2744
        %3273 = vmatprep.subr.mxu0 0.0
        %3274 = vmatpush1.msra.mxu0 %v2745
        %3275 = vmatprep.subr.mxu0 0.0
        %3276 = vmatpush1.msra.mxu0 %v2746
        %3277 = vmatprep.subr.mxu0 0.0
        %3278 = vmatpush1.msra.mxu0 %v2747
        %3279 = vmatprep.subr.mxu0 0.0
        %3280 = vmatpush1.msra.mxu0 %v2748
        %3281 = vmatprep.subr.mxu0 0.0
        %3282 = vmatpush1.msra.mxu0 %v2749
        %3283 = vmatprep.subr.mxu0 0.0
        %3284 = vmatpush1.msra.mxu0 %v2750
        %3285 = vmatprep.subr.mxu0 0.0
        %3286 = vmatpush1.msra.mxu0 %v2751
        %3287 = vmatprep.subr.mxu0 0.0
        %3288 = vmatpush1.msra.mxu0 %v2752
        %3289 = vmatprep.subr.mxu0 0.0
        %3290 = vmatpush1.msra.mxu0 %v2753
        %3291 = vmatprep.subr.mxu0 0.0
        %3292 = vmatpush1.msra.mxu0 %v2754
        %3293 = vmatprep.subr.mxu0 0.0
        %3294 = vmatpush1.msra.mxu0 %v2755
        %3295 = vmatprep.subr.mxu0 0.0
        %3296 = vmatpush1.msra.mxu0 %v2756
        %3297 = vmatprep.subr.mxu0 0.0
        %3298 = vmatpush1.msra.mxu0 %v2757
        %3299 = vmatprep.subr.mxu0 0.0
        %3300 = vmatpush1.msra.mxu0 %v2758
        %3301 = vmatprep.subr.mxu0 0.0
        %3302 = vmatpush1.msra.mxu0 %v2759
        %3303 = vmatprep.subr.mxu0 0.0
        %3304 = vmatpush1.msra.mxu0 %v2760
        %3305 = vmatprep.subr.mxu0 0.0
        %3306 = vmatpush1.msra.mxu0 %v2761
        %3307 = vmatprep.subr.mxu0 0.0
        %3308 = vmatpush1.msra.mxu0 %v2762
        %3309 = vmatprep.subr.mxu0 0.0
        %3310 = vmatpush1.msra.mxu0 %v2763
        %3311 = vmatprep.subr.mxu0 0.0
        %3312 = vmatpush1.msra.mxu0 %v2764
        %3313 = vmatprep.subr.mxu0 0.0
        %3314 = vmatpush1.msra.mxu0 %v2765
        %3315 = vmatprep.subr.mxu0 0.0
        %3316 = vmatpush1.msra.mxu0 %v2766
        %3317 = vmatprep.subr.mxu0 0.0
        %3318 = vmatpush1.msra.mxu0 %v2767
        %3319 = vmatprep.subr.mxu0 0.0
        %3320 = vmatpush1.msra.mxu0 %v2768
        %3321 = vmatprep.subr.mxu0 0.0
        %3322 = vmatpush1.msra.mxu0 %v2769
        %3323 = vmatprep.mubr.f32.mxu0 %v2701
        %3324 = vmatmul.mubr.f32.gmra.mrb[0].mxu0 %v2700
        %v3325 = vpop.f32.mrb[0].mxu0
        %v3326 = vadd.f32 %v3251, %v3325
        %v3327 = vpop.f32.mrb[0].mxu0
        %3328 = vmatprep.mubr.f32.mxu0 %v2705
        %3329 = vmatmul.mubr.f32.gmra.mrb[0].mxu0 %v2704
        %v3330 = vpop.f32.mrb[0].mxu0
        %v3331 = vadd.f32 %v3256, %v3330
        %v3332 = vpop.f32.mrb[0].mxu0
        %3333 = vdwg.mxu0
        %v3334 = vld [vmem:[%s704 + $0x40] sm:$0xff]
        %v3335 = vld [vmem:[%s704 + $0x48] sm:$0xff]
        %v3336 = vld [vmem:[%s704 + $0x50] sm:$0xff]
        %v3337 = vld [vmem:[%s704 + $0x58] sm:$0xff]
        %v3338 = vld [vmem:[%s704 + $0xc0] sm:$0xff]
        %v3339 = vld [vmem:[%s704 + $0xc8] sm:$0xff]
        %v3340 = vld [vmem:[%s704 + $0xd0] sm:$0xff]
        %v3341 = vld [vmem:[%s704 + $0xd8] sm:$0xff]
        %v3342 = vld [vmem:[%s704 + $0x140] sm:$0xff]
        %v3343 = vld [vmem:[%s704 + $0x148] sm:$0xff]
        %v3344 = vld [vmem:[%s704 + $0x150] sm:$0xff]
        %v3345 = vld [vmem:[%s704 + $0x158] sm:$0xff]
        %v3346 = vld [vmem:[%s704 + $0x1c0] sm:$0xff]
        %v3347 = vld [vmem:[%s704 + $0x1c8] sm:$0xff]
        %v3348 = vld [vmem:[%s704 + $0x1d0] sm:$0xff]
        %v3349 = vld [vmem:[%s704 + $0x1d8] sm:$0xff]
        %v3350 = vld [vmem:[%s708 + $0x8] sm:$0xf]
        %v3352 = vlaneseq
        %v3353 = vshrl.u32 %v3352, 7
        %v3354 = vsub.s32 0, %v3353
        %v3355 = vrot.slane %v3350, %v3354
        %v3356 = vlaneseq
        %v3357 = vshrl.u32 %v3356, 7
        %v3358 = vsub.s32 1, %v3357
        %v3359 = vrot.slane %v3350, %v3358
        %v3360 = vlaneseq
        %v3361 = vshrl.u32 %v3360, 7
        %v3362 = vsub.s32 2, %v3361
        %v3363 = vrot.slane %v3350, %v3362
        %v3364 = vlaneseq
        %v3365 = vshrl.u32 %v3364, 7
        %v3366 = vsub.s32 3, %v3365
        %v3367 = vrot.slane %v3350, %v3366
        %3372 = vmatprep.subr.mxu0 %v3335
        %3373 = vmatpush1.msra.mxu0 %v3334
        %3374 = vmatprep.subr.mxu0 %v3339
        %3375 = vmatpush1.msra.mxu0 %v3338
        %3376 = vmatprep.subr.mxu0 %v3343
        %3377 = vmatpush1.msra.mxu0 %v3342
        %3378 = vmatprep.subr.mxu0 %v3347
        %3379 = vmatpush1.msra.mxu0 %v3346
        %3380 = vmatprep.subr.mxu0 0.0
        %3381 = vmatpush1.msra.mxu0 0.0
        %3382 = vmatprep.subr.mxu0 0.0
        %3383 = vmatpush1.msra.mxu0 0.0
        %3384 = vmatprep.subr.mxu0 0.0
        %3385 = vmatpush1.msra.mxu0 0.0
        %3386 = vmatprep.subr.mxu0 0.0
        %3387 = vmatpush1.msra.mxu0 0.0
        %3388 = vmatprep.subr.mxu0 0.0
        %3389 = vmatpush1.msra.mxu0 0.0
        %3390 = vmatprep.subr.mxu0 0.0
        %3391 = vmatpush1.msra.mxu0 0.0
        %3392 = vmatprep.subr.mxu0 0.0
        %3393 = vmatpush1.msra.mxu0 0.0
        %3394 = vmatprep.subr.mxu0 0.0
        %3395 = vmatpush1.msra.mxu0 0.0
        %3396 = vmatprep.subr.mxu0 0.0
        %3397 = vmatpush1.msra.mxu0 0.0
        %3398 = vmatprep.subr.mxu0 0.0
        %3399 = vmatpush1.msra.mxu0 0.0
        %3400 = vmatprep.subr.mxu0 0.0
        %3401 = vmatpush1.msra.mxu0 0.0
        %3402 = vmatprep.subr.mxu0 0.0
        %3403 = vmatpush1.msra.mxu0 0.0
        %3404 = vmatprep.subr.mxu0 0.0
        %3405 = vmatpush1.msra.mxu0 0.0
        %3406 = vmatprep.subr.mxu0 0.0
        %3407 = vmatpush1.msra.mxu0 0.0
        %3408 = vmatprep.subr.mxu0 0.0
        %3409 = vmatpush1.msra.mxu0 0.0
        %3410 = vmatprep.subr.mxu0 0.0
        %3411 = vmatpush1.msra.mxu0 0.0
        %3412 = vmatprep.subr.mxu0 0.0
        %3413 = vmatpush1.msra.mxu0 0.0
        %3414 = vmatprep.subr.mxu0 0.0
        %3415 = vmatpush1.msra.mxu0 0.0
        %3416 = vmatprep.subr.mxu0 0.0
        %3417 = vmatpush1.msra.mxu0 0.0
        %3418 = vmatprep.subr.mxu0 0.0
        %3419 = vmatpush1.msra.mxu0 0.0
        %3420 = vmatprep.subr.mxu0 0.0
        %3421 = vmatpush1.msra.mxu0 0.0
        %3422 = vmatprep.subr.mxu0 0.0
        %3423 = vmatpush1.msra.mxu0 0.0
        %3424 = vmatprep.subr.mxu0 0.0
        %3425 = vmatpush1.msra.mxu0 0.0
        %3426 = vmatprep.subr.mxu0 0.0
        %3427 = vmatpush1.msra.mxu0 0.0
        %3428 = vmatprep.subr.mxu0 0.0
        %3429 = vmatpush1.msra.mxu0 0.0
        %3430 = vmatprep.subr.mxu0 0.0
        %3431 = vmatpush1.msra.mxu0 0.0
        %3432 = vmatprep.subr.mxu0 0.0
        %3433 = vmatpush1.msra.mxu0 0.0
        %3434 = vmatprep.subr.mxu0 0.0
        %3435 = vmatpush1.msra.mxu0 0.0
        %3436 = vmatprep.mubr.f32.mxu0 0.0
        %3437 = vmatmul.mubr.f32.gmra.mrb[0].mxu0 %v2539
        %v3438 = vpop.f32.mrb[0].mxu0
        %v3439 = vadd.f32 %v3355, %v3438
        %v3440 = vpop.f32.mrb[0].mxu0
        %v3441 = vadd.f32 %v3359, %v3440
        %3442 = vmatprep.mubr.f32.mxu0 0.0
        %3443 = vmatmul.mubr.f32.gmra.mrb[0].mxu0 %v2542
        %v3444 = vpop.f32.mrb[0].mxu0
        %v3445 = vadd.f32 %v3355, %v3444
        %v3446 = vpop.f32.mrb[0].mxu0
        %v3447 = vadd.f32 %v3359, %v3446
        %3448 = vdwg.mxu0
        %3449 = vmatprep.subr.mxu0 %v3337
        %3450 = vmatpush1.msra.mxu0 %v3336
        %3451 = vmatprep.subr.mxu0 %v3341
        %3452 = vmatpush1.msra.mxu0 %v3340
        %3453 = vmatprep.subr.mxu0 %v3345
        %3454 = vmatpush1.msra.mxu0 %v3344
        %3455 = vmatprep.subr.mxu0 %v3349
        %3456 = vmatpush1.msra.mxu0 %v3348
        %3457 = vmatprep.subr.mxu0 0.0
        %3458 = vmatpush1.msra.mxu0 0.0
        %3459 = vmatprep.subr.mxu0 0.0
        %3460 = vmatpush1.msra.mxu0 0.0
        %3461 = vmatprep.subr.mxu0 0.0
        %3462 = vmatpush1.msra.mxu0 0.0
        %3463 = vmatprep.subr.mxu0 0.0
        %3464 = vmatpush1.msra.mxu0 0.0
        %3465 = vmatprep.subr.mxu0 0.0
        %3466 = vmatpush1.msra.mxu0 0.0
        %3467 = vmatprep.subr.mxu0 0.0
        %3468 = vmatpush1.msra.mxu0 0.0
        %3469 = vmatprep.subr.mxu0 0.0
        %3470 = vmatpush1.msra.mxu0 0.0
        %3471 = vmatprep.subr.mxu0 0.0
        %3472 = vmatpush1.msra.mxu0 0.0
        %3473 = vmatprep.subr.mxu0 0.0
        %3474 = vmatpush1.msra.mxu0 0.0
        %3475 = vmatprep.subr.mxu0 0.0
        %3476 = vmatpush1.msra.mxu0 0.0
        %3477 = vmatprep.subr.mxu0 0.0
        %3478 = vmatpush1.msra.mxu0 0.0
        %3479 = vmatprep.subr.mxu0 0.0
        %3480 = vmatpush1.msra.mxu0 0.0
        %3481 = vmatprep.subr.mxu0 0.0
        %3482 = vmatpush1.msra.mxu0 0.0
        %3483 = vmatprep.subr.mxu0 0.0
        %3484 = vmatpush1.msra.mxu0 0.0
        %3485 = vmatprep.subr.mxu0 0.0
        %3486 = vmatpush1.msra.mxu0 0.0
        %3487 = vmatprep.subr.mxu0 0.0
        %3488 = vmatpush1.msra.mxu0 0.0
        %3489 = vmatprep.subr.mxu0 0.0
        %3490 = vmatpush1.msra.mxu0 0.0
        %3491 = vmatprep.subr.mxu0 0.0
        %3492 = vmatpush1.msra.mxu0 0.0
        %3493 = vmatprep.subr.mxu0 0.0
        %3494 = vmatpush1.msra.mxu0 0.0
        %3495 = vmatprep.subr.mxu0 0.0
        %3496 = vmatpush1.msra.mxu0 0.0
        %3497 = vmatprep.subr.mxu0 0.0
        %3498 = vmatpush1.msra.mxu0 0.0
        %3499 = vmatprep.subr.mxu0 0.0
        %3500 = vmatpush1.msra.mxu0 0.0
        %3501 = vmatprep.subr.mxu0 0.0
        %3502 = vmatpush1.msra.mxu0 0.0
        %3503 = vmatprep.subr.mxu0 0.0
        %3504 = vmatpush1.msra.mxu0 0.0
        %3505 = vmatprep.subr.mxu0 0.0
        %3506 = vmatpush1.msra.mxu0 0.0
        %3507 = vmatprep.subr.mxu0 0.0
        %3508 = vmatpush1.msra.mxu0 0.0
        %3509 = vmatprep.subr.mxu0 0.0
        %3510 = vmatpush1.msra.mxu0 0.0
        %3511 = vmatprep.subr.mxu0 0.0
        %3512 = vmatpush1.msra.mxu0 0.0
        %3513 = vmatprep.mubr.f32.mxu0 0.0
        %3514 = vmatmul.mubr.f32.gmra.mrb[0].mxu0 %v2539
        %v3515 = vpop.f32.mrb[0].mxu0
        %v3516 = vadd.f32 %v3363, %v3515
        %v3517 = vpop.f32.mrb[0].mxu0
        %v3518 = vadd.f32 %v3367, %v3517
        %3519 = vmatprep.mubr.f32.mxu0 0.0
        %3520 = vmatmul.mubr.f32.gmra.mrb[0].mxu0 %v2542
        %v3521 = vpop.f32.mrb[0].mxu0
        %v3522 = vadd.f32 %v3363, %v3521
        %v3523 = vpop.f32.mrb[0].mxu0
        %v3524 = vadd.f32 %v3367, %v3523
        %3525 = vdwg.mxu0
        %v3526 = vmax.f32 %v3439, 0.0
        %v3527 = vmax.f32 %v3441, 0.0
        %v3528 = vmax.f32 %v3516, 0.0
        %v3529 = vmax.f32 %v3518, 0.0
        %v3530 = vmax.f32 %v3445, 0.0
        %v3531 = vmax.f32 %v3447, 0.0
        %v3532 = vmax.f32 %v3522, 0.0
        %v3533 = vmax.f32 %v3524, 0.0
        %v3534 = vld [vmem:[%s713 + $0x400] sm:$0xff]
        %v3535 = vld [vmem:[%s713 + $0x408] sm:$0xff]
        %v3536 = vld [vmem:[%s713 + $0x410] sm:$0xff]
        %v3537 = vld [vmem:[%s713 + $0x418] sm:$0xff]
        %v3538 = vld [vmem:[%s713 + $0x420] sm:$0xff]
        %v3539 = vld [vmem:[%s713 + $0x428] sm:$0xff]
        %v3540 = vld [vmem:[%s713 + $0x430] sm:$0xff]
        %v3541 = vld [vmem:[%s713 + $0x438] sm:$0xff]
        %v3542 = vld [vmem:[%s713 + $0x440] sm:$0xff]
        %v3543 = vld [vmem:[%s713 + $0x448] sm:$0xff]
        %v3544 = vld [vmem:[%s713 + $0x450] sm:$0xff]
        %v3545 = vld [vmem:[%s713 + $0x458] sm:$0xff]
        %v3546 = vld [vmem:[%s713 + $0x460] sm:$0xff]
        %v3547 = vld [vmem:[%s713 + $0x468] sm:$0xff]
        %v3548 = vld [vmem:[%s713 + $0x470] sm:$0xff]
        %v3549 = vld [vmem:[%s713 + $0x478] sm:$0xff]
        %v3550 = vld [vmem:[%s713 + $0x480] sm:$0xff]
        %v3551 = vld [vmem:[%s713 + $0x488] sm:$0xff]
        %v3552 = vld [vmem:[%s713 + $0x490] sm:$0xff]
        %v3553 = vld [vmem:[%s713 + $0x498] sm:$0xff]
        %v3554 = vld [vmem:[%s713 + $0x4a0] sm:$0xff]
        %v3555 = vld [vmem:[%s713 + $0x4a8] sm:$0xff]
        %v3556 = vld [vmem:[%s713 + $0x4b0] sm:$0xff]
        %v3557 = vld [vmem:[%s713 + $0x4b8] sm:$0xff]
        %v3558 = vld [vmem:[%s713 + $0x4c0] sm:$0xff]
        %v3559 = vld [vmem:[%s713 + $0x4c8] sm:$0xff]
        %v3560 = vld [vmem:[%s713 + $0x4d0] sm:$0xff]
        %v3561 = vld [vmem:[%s713 + $0x4d8] sm:$0xff]
        %v3562 = vld [vmem:[%s713 + $0x4e0] sm:$0xff]
        %v3563 = vld [vmem:[%s713 + $0x4e8] sm:$0xff]
        %v3564 = vld [vmem:[%s713 + $0x4f0] sm:$0xff]
        %v3565 = vld [vmem:[%s713 + $0x4f8] sm:$0xff]
        %v3566 = vld [vmem:[%s713 + $0x500] sm:$0xff]
        %v3567 = vld [vmem:[%s713 + $0x508] sm:$0xff]
        %v3568 = vld [vmem:[%s713 + $0x510] sm:$0xff]
        %v3569 = vld [vmem:[%s713 + $0x518] sm:$0xff]
        %v3570 = vld [vmem:[%s713 + $0x520] sm:$0xff]
        %v3571 = vld [vmem:[%s713 + $0x528] sm:$0xff]
        %v3572 = vld [vmem:[%s713 + $0x530] sm:$0xff]
        %v3573 = vld [vmem:[%s713 + $0x538] sm:$0xff]
        %v3574 = vld [vmem:[%s713 + $0x540] sm:$0xff]
        %v3575 = vld [vmem:[%s713 + $0x548] sm:$0xff]
        %v3576 = vld [vmem:[%s713 + $0x550] sm:$0xff]
        %v3577 = vld [vmem:[%s713 + $0x558] sm:$0xff]
        %v3578 = vld [vmem:[%s713 + $0x560] sm:$0xff]
        %v3579 = vld [vmem:[%s713 + $0x568] sm:$0xff]
        %v3580 = vld [vmem:[%s713 + $0x570] sm:$0xff]
        %v3581 = vld [vmem:[%s713 + $0x578] sm:$0xff]
        %v3582 = vld [vmem:[%s713 + $0x580] sm:$0xff]
        %v3583 = vld [vmem:[%s713 + $0x588] sm:$0xff]
        %v3584 = vld [vmem:[%s713 + $0x590] sm:$0xff]
        %v3585 = vld [vmem:[%s713 + $0x598] sm:$0xff]
        %v3586 = vld [vmem:[%s713 + $0x5a0] sm:$0xff]
        %v3587 = vld [vmem:[%s713 + $0x5a8] sm:$0xff]
        %v3588 = vld [vmem:[%s713 + $0x5b0] sm:$0xff]
        %v3589 = vld [vmem:[%s713 + $0x5b8] sm:$0xff]
        %v3590 = vld [vmem:[%s713 + $0x5c0] sm:$0xff]
        %v3591 = vld [vmem:[%s713 + $0x5c8] sm:$0xff]
        %v3592 = vld [vmem:[%s713 + $0x5d0] sm:$0xff]
        %v3593 = vld [vmem:[%s713 + $0x5d8] sm:$0xff]
        %v3594 = vld [vmem:[%s713 + $0x5e0] sm:$0xff]
        %v3595 = vld [vmem:[%s713 + $0x5e8] sm:$0xff]
        %v3596 = vld [vmem:[%s713 + $0x5f0] sm:$0xff]
        %v3597 = vld [vmem:[%s713 + $0x5f8] sm:$0xff]
        %3598 = vmatprep.subr.mxu0 0.0
        %3599 = vmatpush1.msra.mxu0 %v3534
        %3600 = vmatprep.subr.mxu0 0.0
        %3601 = vmatpush1.msra.mxu0 %v3535
        %3602 = vmatprep.subr.mxu0 0.0
        %3603 = vmatpush1.msra.mxu0 %v3536
        %3604 = vmatprep.subr.mxu0 0.0
        %3605 = vmatpush1.msra.mxu0 %v3537
        %3606 = vmatprep.subr.mxu0 0.0
        %3607 = vmatpush1.msra.mxu0 %v3538
        %3608 = vmatprep.subr.mxu0 0.0
        %3609 = vmatpush1.msra.mxu0 %v3539
        %3610 = vmatprep.subr.mxu0 0.0
        %3611 = vmatpush1.msra.mxu0 %v3540
        %3612 = vmatprep.subr.mxu0 0.0
        %3613 = vmatpush1.msra.mxu0 %v3541
        %3614 = vmatprep.subr.mxu0 0.0
        %3615 = vmatpush1.msra.mxu0 %v3542
        %3616 = vmatprep.subr.mxu0 0.0
        %3617 = vmatpush1.msra.mxu0 %v3543
        %3618 = vmatprep.subr.mxu0 0.0
        %3619 = vmatpush1.msra.mxu0 %v3544
        %3620 = vmatprep.subr.mxu0 0.0
        %3621 = vmatpush1.msra.mxu0 %v3545
        %3622 = vmatprep.subr.mxu0 0.0
        %3623 = vmatpush1.msra.mxu0 %v3546
        %3624 = vmatprep.subr.mxu0 0.0
        %3625 = vmatpush1.msra.mxu0 %v3547
        %3626 = vmatprep.subr.mxu0 0.0
        %3627 = vmatpush1.msra.mxu0 %v3548
        %3628 = vmatprep.subr.mxu0 0.0
        %3629 = vmatpush1.msra.mxu0 %v3549
        %3630 = vmatprep.subr.mxu0 0.0
        %3631 = vmatpush1.msra.mxu0 %v3550
        %3632 = vmatprep.subr.mxu0 0.0
        %3633 = vmatpush1.msra.mxu0 %v3551
        %3634 = vmatprep.subr.mxu0 0.0
        %3635 = vmatpush1.msra.mxu0 %v3552
        %3636 = vmatprep.subr.mxu0 0.0
        %3637 = vmatpush1.msra.mxu0 %v3553
        %3638 = vmatprep.subr.mxu0 0.0
        %3639 = vmatpush1.msra.mxu0 %v3554
        %3640 = vmatprep.subr.mxu0 0.0
        %3641 = vmatpush1.msra.mxu0 %v3555
        %3642 = vmatprep.subr.mxu0 0.0
        %3643 = vmatpush1.msra.mxu0 %v3556
        %3644 = vmatprep.subr.mxu0 0.0
        %3645 = vmatpush1.msra.mxu0 %v3557
        %3646 = vmatprep.subr.mxu0 0.0
        %3647 = vmatpush1.msra.mxu0 %v3558
        %3648 = vmatprep.subr.mxu0 0.0
        %3649 = vmatpush1.msra.mxu0 %v3559
        %3650 = vmatprep.subr.mxu0 0.0
        %3651 = vmatpush1.msra.mxu0 %v3560
        %3652 = vmatprep.subr.mxu0 0.0
        %3653 = vmatpush1.msra.mxu0 %v3561
        %3654 = vmatprep.subr.mxu0 0.0
        %3655 = vmatpush1.msra.mxu0 %v3562
        %3656 = vmatprep.subr.mxu0 0.0
        %3657 = vmatpush1.msra.mxu0 %v3563
        %3658 = vmatprep.subr.mxu0 0.0
        %3659 = vmatpush1.msra.mxu0 %v3564
        %3660 = vmatprep.subr.mxu0 0.0
        %3661 = vmatpush1.msra.mxu0 %v3565
        %3662 = vmatprep.mubr.f32.mxu0 %v3527
        %3663 = vmatmul.mubr.f32.gmra.mrb[0].mxu0 %v3526
        %v3664 = vpop.f32.mrb[0].mxu0
        %v3665 = vadd.f32 0.0, %v3664
        %v3666 = vpop.f32.mrb[0].mxu0
        %3667 = vmatprep.mubr.f32.mxu0 %v3531
        %3668 = vmatmul.mubr.f32.gmra.mrb[0].mxu0 %v3530
        %v3669 = vpop.f32.mrb[0].mxu0
        %v3670 = vadd.f32 0.0, %v3669
        %v3671 = vpop.f32.mrb[0].mxu0
        %3672 = vdwg.mxu0
        %3673 = vmatprep.subr.mxu0 0.0
        %3674 = vmatpush1.msra.mxu0 %v3566
        %3675 = vmatprep.subr.mxu0 0.0
        %3676 = vmatpush1.msra.mxu0 %v3567
        %3677 = vmatprep.subr.mxu0 0.0
        %3678 = vmatpush1.msra.mxu0 %v3568
        %3679 = vmatprep.subr.mxu0 0.0
        %3680 = vmatpush1.msra.mxu0 %v3569
        %3681 = vmatprep.subr.mxu0 0.0
        %3682 = vmatpush1.msra.mxu0 %v3570
        %3683 = vmatprep.subr.mxu0 0.0
        %3684 = vmatpush1.msra.mxu0 %v3571
        %3685 = vmatprep.subr.mxu0 0.0
        %3686 = vmatpush1.msra.mxu0 %v3572
        %3687 = vmatprep.subr.mxu0 0.0
        %3688 = vmatpush1.msra.mxu0 %v3573
        %3689 = vmatprep.subr.mxu0 0.0
        %3690 = vmatpush1.msra.mxu0 %v3574
        %3691 = vmatprep.subr.mxu0 0.0
        %3692 = vmatpush1.msra.mxu0 %v3575
        %3693 = vmatprep.subr.mxu0 0.0
        %3694 = vmatpush1.msra.mxu0 %v3576
        %3695 = vmatprep.subr.mxu0 0.0
        %3696 = vmatpush1.msra.mxu0 %v3577
        %3697 = vmatprep.subr.mxu0 0.0
        %3698 = vmatpush1.msra.mxu0 %v3578
        %3699 = vmatprep.subr.mxu0 0.0
        %3700 = vmatpush1.msra.mxu0 %v3579
        %3701 = vmatprep.subr.mxu0 0.0
        %3702 = vmatpush1.msra.mxu0 %v3580
        %3703 = vmatprep.subr.mxu0 0.0
        %3704 = vmatpush1.msra.mxu0 %v3581
        %3705 = vmatprep.subr.mxu0 0.0
        %3706 = vmatpush1.msra.mxu0 %v3582
        %3707 = vmatprep.subr.mxu0 0.0
        %3708 = vmatpush1.msra.mxu0 %v3583
        %3709 = vmatprep.subr.mxu0 0.0
        %3710 = vmatpush1.msra.mxu0 %v3584
        %3711 = vmatprep.subr.mxu0 0.0
        %3712 = vmatpush1.msra.mxu0 %v3585
        %3713 = vmatprep.subr.mxu0 0.0
        %3714 = vmatpush1.msra.mxu0 %v3586
        %3715 = vmatprep.subr.mxu0 0.0
        %3716 = vmatpush1.msra.mxu0 %v3587
        %3717 = vmatprep.subr.mxu0 0.0
        %3718 = vmatpush1.msra.mxu0 %v3588
        %3719 = vmatprep.subr.mxu0 0.0
        %3720 = vmatpush1.msra.mxu0 %v3589
        %3721 = vmatprep.subr.mxu0 0.0
        %3722 = vmatpush1.msra.mxu0 %v3590
        %3723 = vmatprep.subr.mxu0 0.0
        %3724 = vmatpush1.msra.mxu0 %v3591
        %3725 = vmatprep.subr.mxu0 0.0
        %3726 = vmatpush1.msra.mxu0 %v3592
        %3727 = vmatprep.subr.mxu0 0.0
        %3728 = vmatpush1.msra.mxu0 %v3593
        %3729 = vmatprep.subr.mxu0 0.0
        %3730 = vmatpush1.msra.mxu0 %v3594
        %3731 = vmatprep.subr.mxu0 0.0
        %3732 = vmatpush1.msra.mxu0 %v3595
        %3733 = vmatprep.subr.mxu0 0.0
        %3734 = vmatpush1.msra.mxu0 %v3596
        %3735 = vmatprep.subr.mxu0 0.0
        %3736 = vmatpush1.msra.mxu0 %v3597
        %3737 = vmatprep.mubr.f32.mxu0 %v3529
        %3738 = vmatmul.mubr.f32.gmra.mrb[0].mxu0 %v3528
        %v3739 = vpop.f32.mrb[0].mxu0
        %v3740 = vadd.f32 %v3665, %v3739
        %v3741 = vpop.f32.mrb[0].mxu0
        %3742 = vmatprep.mubr.f32.mxu0 %v3533
        %3743 = vmatmul.mubr.f32.gmra.mrb[0].mxu0 %v3532
        %v3744 = vpop.f32.mrb[0].mxu0
        %v3745 = vadd.f32 %v3670, %v3744
        %v3746 = vpop.f32.mrb[0].mxu0
        %3747 = vdwg.mxu0
        %v3748 = vadd.f32 %v3326, %v3740
        %v3749 = vadd.f32 %v3331, %v3745
        %v3750 = vld [vmem:[%s704 + $0x60] sm:$0xff]
        %v3751 = vld [vmem:[%s704 + $0x68] sm:$0xff]
        %v3752 = vld [vmem:[%s704 + $0x70] sm:$0xff]
        %v3753 = vld [vmem:[%s704 + $0x78] sm:$0xff]
        %v3754 = vld [vmem:[%s704 + $0xe0] sm:$0xff]
        %v3755 = vld [vmem:[%s704 + $0xe8] sm:$0xff]
        %v3756 = vld [vmem:[%s704 + $0xf0] sm:$0xff]
        %v3757 = vld [vmem:[%s704 + $0xf8] sm:$0xff]
        %v3758 = vld [vmem:[%s704 + $0x160] sm:$0xff]
        %v3759 = vld [vmem:[%s704 + $0x168] sm:$0xff]
        %v3760 = vld [vmem:[%s704 + $0x170] sm:$0xff]
        %v3761 = vld [vmem:[%s704 + $0x178] sm:$0xff]
        %v3762 = vld [vmem:[%s704 + $0x1e0] sm:$0xff]
        %v3763 = vld [vmem:[%s704 + $0x1e8] sm:$0xff]
        %v3764 = vld [vmem:[%s704 + $0x1f0] sm:$0xff]
        %v3765 = vld [vmem:[%s704 + $0x1f8] sm:$0xff]
        %v3766 = vld [vmem:[%s708 + $0xc] sm:$0xf]
        %v3768 = vlaneseq
        %v3769 = vshrl.u32 %v3768, 7
        %v3770 = vsub.s32 0, %v3769
        %v3771 = vrot.slane %v3766, %v3770
        %v3772 = vlaneseq
        %v3773 = vshrl.u32 %v3772, 7
        %v3774 = vsub.s32 1, %v3773
        %v3775 = vrot.slane %v3766, %v3774
        %v3776 = vlaneseq
        %v3777 = vshrl.u32 %v3776, 7
        %v3778 = vsub.s32 2, %v3777
        %v3779 = vrot.slane %v3766, %v3778
        %v3780 = vlaneseq
        %v3781 = vshrl.u32 %v3780, 7
        %v3782 = vsub.s32 3, %v3781
        %v3783 = vrot.slane %v3766, %v3782
        %3788 = vmatprep.subr.mxu0 %v3751
        %3789 = vmatpush1.msra.mxu0 %v3750
        %3790 = vmatprep.subr.mxu0 %v3755
        %3791 = vmatpush1.msra.mxu0 %v3754
        %3792 = vmatprep.subr.mxu0 %v3759
        %3793 = vmatpush1.msra.mxu0 %v3758
        %3794 = vmatprep.subr.mxu0 %v3763
        %3795 = vmatpush1.msra.mxu0 %v3762
        %3796 = vmatprep.subr.mxu0 0.0
        %3797 = vmatpush1.msra.mxu0 0.0
        %3798 = vmatprep.subr.mxu0 0.0
        %3799 = vmatpush1.msra.mxu0 0.0
        %3800 = vmatprep.subr.mxu0 0.0
        %3801 = vmatpush1.msra.mxu0 0.0
        %3802 = vmatprep.subr.mxu0 0.0
        %3803 = vmatpush1.msra.mxu0 0.0
        %3804 = vmatprep.subr.mxu0 0.0
        %3805 = vmatpush1.msra.mxu0 0.0
        %3806 = vmatprep.subr.mxu0 0.0
        %3807 = vmatpush1.msra.mxu0 0.0
        %3808 = vmatprep.subr.mxu0 0.0
        %3809 = vmatpush1.msra.mxu0 0.0
        %3810 = vmatprep.subr.mxu0 0.0
        %3811 = vmatpush1.msra.mxu0 0.0
        %3812 = vmatprep.subr.mxu0 0.0
        %3813 = vmatpush1.msra.mxu0 0.0
        %3814 = vmatprep.subr.mxu0 0.0
        %3815 = vmatpush1.msra.mxu0 0.0
        %3816 = vmatprep.subr.mxu0 0.0
        %3817 = vmatpush1.msra.mxu0 0.0
        %3818 = vmatprep.subr.mxu0 0.0
        %3819 = vmatpush1.msra.mxu0 0.0
        %3820 = vmatprep.subr.mxu0 0.0
        %3821 = vmatpush1.msra.mxu0 0.0
        %3822 = vmatprep.subr.mxu0 0.0
        %3823 = vmatpush1.msra.mxu0 0.0
        %3824 = vmatprep.subr.mxu0 0.0
        %3825 = vmatpush1.msra.mxu0 0.0
        %3826 = vmatprep.subr.mxu0 0.0
        %3827 = vmatpush1.msra.mxu0 0.0
        %3828 = vmatprep.subr.mxu0 0.0
        %3829 = vmatpush1.msra.mxu0 0.0
        %3830 = vmatprep.subr.mxu0 0.0
        %3831 = vmatpush1.msra.mxu0 0.0
        %3832 = vmatprep.subr.mxu0 0.0
        %3833 = vmatpush1.msra.mxu0 0.0
        %3834 = vmatprep.subr.mxu0 0.0
        %3835 = vmatpush1.msra.mxu0 0.0
        %3836 = vmatprep.subr.mxu0 0.0
        %3837 = vmatpush1.msra.mxu0 0.0
        %3838 = vmatprep.subr.mxu0 0.0
        %3839 = vmatpush1.msra.mxu0 0.0
        %3840 = vmatprep.subr.mxu0 0.0
        %3841 = vmatpush1.msra.mxu0 0.0
        %3842 = vmatprep.subr.mxu0 0.0
        %3843 = vmatpush1.msra.mxu0 0.0
        %3844 = vmatprep.subr.mxu0 0.0
        %3845 = vmatpush1.msra.mxu0 0.0
        %3846 = vmatprep.subr.mxu0 0.0
        %3847 = vmatpush1.msra.mxu0 0.0
        %3848 = vmatprep.subr.mxu0 0.0
        %3849 = vmatpush1.msra.mxu0 0.0
        %3850 = vmatprep.subr.mxu0 0.0
        %3851 = vmatpush1.msra.mxu0 0.0
        %3852 = vmatprep.mubr.f32.mxu0 0.0
        %3853 = vmatmul.mubr.f32.gmra.mrb[0].mxu0 %v2539
        %v3854 = vpop.f32.mrb[0].mxu0
        %v3855 = vadd.f32 %v3771, %v3854
        %v3856 = vpop.f32.mrb[0].mxu0
        %v3857 = vadd.f32 %v3775, %v3856
        %3858 = vmatprep.mubr.f32.mxu0 0.0
        %3859 = vmatmul.mubr.f32.gmra.mrb[0].mxu0 %v2542
        %v3860 = vpop.f32.mrb[0].mxu0
        %v3861 = vadd.f32 %v3771, %v3860
        %v3862 = vpop.f32.mrb[0].mxu0
        %v3863 = vadd.f32 %v3775, %v3862
        %3864 = vdwg.mxu0
        %3865 = vmatprep.subr.mxu0 %v3753
        %3866 = vmatpush1.msra.mxu0 %v3752
        %3867 = vmatprep.subr.mxu0 %v3757
        %3868 = vmatpush1.msra.mxu0 %v3756
        %3869 = vmatprep.subr.mxu0 %v3761
        %3870 = vmatpush1.msra.mxu0 %v3760
        %3871 = vmatprep.subr.mxu0 %v3765
        %3872 = vmatpush1.msra.mxu0 %v3764
        %3873 = vmatprep.subr.mxu0 0.0
        %3874 = vmatpush1.msra.mxu0 0.0
        %3875 = vmatprep.subr.mxu0 0.0
        %3876 = vmatpush1.msra.mxu0 0.0
        %3877 = vmatprep.subr.mxu0 0.0
        %3878 = vmatpush1.msra.mxu0 0.0
        %3879 = vmatprep.subr.mxu0 0.0
        %3880 = vmatpush1.msra.mxu0 0.0
        %3881 = vmatprep.subr.mxu0 0.0
        %3882 = vmatpush1.msra.mxu0 0.0
        %3883 = vmatprep.subr.mxu0 0.0
        %3884 = vmatpush1.msra.mxu0 0.0
        %3885 = vmatprep.subr.mxu0 0.0
        %3886 = vmatpush1.msra.mxu0 0.0
        %3887 = vmatprep.subr.mxu0 0.0
        %3888 = vmatpush1.msra.mxu0 0.0
        %3889 = vmatprep.subr.mxu0 0.0
        %3890 = vmatpush1.msra.mxu0 0.0
        %3891 = vmatprep.subr.mxu0 0.0
        %3892 = vmatpush1.msra.mxu0 0.0
        %3893 = vmatprep.subr.mxu0 0.0
        %3894 = vmatpush1.msra.mxu0 0.0
        %3895 = vmatprep.subr.mxu0 0.0
        %3896 = vmatpush1.msra.mxu0 0.0
        %3897 = vmatprep.subr.mxu0 0.0
        %3898 = vmatpush1.msra.mxu0 0.0
        %3899 = vmatprep.subr.mxu0 0.0
        %3900 = vmatpush1.msra.mxu0 0.0
        %3901 = vmatprep.subr.mxu0 0.0
        %3902 = vmatpush1.msra.mxu0 0.0
        %3903 = vmatprep.subr.mxu0 0.0
        %3904 = vmatpush1.msra.mxu0 0.0
        %3905 = vmatprep.subr.mxu0 0.0
        %3906 = vmatpush1.msra.mxu0 0.0
        %3907 = vmatprep.subr.mxu0 0.0
        %3908 = vmatpush1.msra.mxu0 0.0
        %3909 = vmatprep.subr.mxu0 0.0
        %3910 = vmatpush1.msra.mxu0 0.0
        %3911 = vmatprep.subr.mxu0 0.0
        %3912 = vmatpush1.msra.mxu0 0.0
        %3913 = vmatprep.subr.mxu0 0.0
        %3914 = vmatpush1.msra.mxu0 0.0
        %3915 = vmatprep.subr.mxu0 0.0
        %3916 = vmatpush1.msra.mxu0 0.0
        %3917 = vmatprep.subr.mxu0 0.0
        %3918 = vmatpush1.msra.mxu0 0.0
        %3919 = vmatprep.subr.mxu0 0.0
        %3920 = vmatpush1.msra.mxu0 0.0
        %3921 = vmatprep.subr.mxu0 0.0
        %3922 = vmatpush1.msra.mxu0 0.0
        %3923 = vmatprep.subr.mxu0 0.0
        %3924 = vmatpush1.msra.mxu0 0.0
        %3925 = vmatprep.subr.mxu0 0.0
        %3926 = vmatpush1.msra.mxu0 0.0
        %3927 = vmatprep.subr.mxu0 0.0
        %3928 = vmatpush1.msra.mxu0 0.0
        %3929 = vmatprep.mubr.f32.mxu0 0.0
        %3930 = vmatmul.mubr.f32.gmra.mrb[0].mxu0 %v2539
        %v3931 = vpop.f32.mrb[0].mxu0
        %v3932 = vadd.f32 %v3779, %v3931
        %v3933 = vpop.f32.mrb[0].mxu0
        %v3934 = vadd.f32 %v3783, %v3933
        %3935 = vmatprep.mubr.f32.mxu0 0.0
        %3936 = vmatmul.mubr.f32.gmra.mrb[0].mxu0 %v2542
        %v3937 = vpop.f32.mrb[0].mxu0
        %v3938 = vadd.f32 %v3779, %v3937
        %v3939 = vpop.f32.mrb[0].mxu0
        %v3940 = vadd.f32 %v3783, %v3939
        %3941 = vdwg.mxu0
        %v3942 = vmax.f32 %v3855, 0.0
        %v3943 = vmax.f32 %v3857, 0.0
        %v3944 = vmax.f32 %v3932, 0.0
        %v3945 = vmax.f32 %v3934, 0.0
        %v3946 = vmax.f32 %v3861, 0.0
        %v3947 = vmax.f32 %v3863, 0.0
        %v3948 = vmax.f32 %v3938, 0.0
        %v3949 = vmax.f32 %v3940, 0.0
        %v3950 = vld [vmem:[%s713 + $0x600] sm:$0xff]
        %v3951 = vld [vmem:[%s713 + $0x608] sm:$0xff]
        %v3952 = vld [vmem:[%s713 + $0x610] sm:$0xff]
        %v3953 = vld [vmem:[%s713 + $0x618] sm:$0xff]
        %v3954 = vld [vmem:[%s713 + $0x620] sm:$0xff]
        %v3955 = vld [vmem:[%s713 + $0x628] sm:$0xff]
        %v3956 = vld [vmem:[%s713 + $0x630] sm:$0xff]
        %v3957 = vld [vmem:[%s713 + $0x638] sm:$0xff]
        %v3958 = vld [vmem:[%s713 + $0x640] sm:$0xff]
        %v3959 = vld [vmem:[%s713 + $0x648] sm:$0xff]
        %v3960 = vld [vmem:[%s713 + $0x650] sm:$0xff]
        %v3961 = vld [vmem:[%s713 + $0x658] sm:$0xff]
        %v3962 = vld [vmem:[%s713 + $0x660] sm:$0xff]
        %v3963 = vld [vmem:[%s713 + $0x668] sm:$0xff]
        %v3964 = vld [vmem:[%s713 + $0x670] sm:$0xff]
        %v3965 = vld [vmem:[%s713 + $0x678] sm:$0xff]
        %v3966 = vld [vmem:[%s713 + $0x680] sm:$0xff]
        %v3967 = vld [vmem:[%s713 + $0x688] sm:$0xff]
        %v3968 = vld [vmem:[%s713 + $0x690] sm:$0xff]
        %v3969 = vld [vmem:[%s713 + $0x698] sm:$0xff]
        %v3970 = vld [vmem:[%s713 + $0x6a0] sm:$0xff]
        %v3971 = vld [vmem:[%s713 + $0x6a8] sm:$0xff]
        %v3972 = vld [vmem:[%s713 + $0x6b0] sm:$0xff]
        %v3973 = vld [vmem:[%s713 + $0x6b8] sm:$0xff]
        %v3974 = vld [vmem:[%s713 + $0x6c0] sm:$0xff]
        %v3975 = vld [vmem:[%s713 + $0x6c8] sm:$0xff]
        %v3976 = vld [vmem:[%s713 + $0x6d0] sm:$0xff]
        %v3977 = vld [vmem:[%s713 + $0x6d8] sm:$0xff]
        %v3978 = vld [vmem:[%s713 + $0x6e0] sm:$0xff]
        %v3979 = vld [vmem:[%s713 + $0x6e8] sm:$0xff]
        %v3980 = vld [vmem:[%s713 + $0x6f0] sm:$0xff]
        %v3981 = vld [vmem:[%s713 + $0x6f8] sm:$0xff]
        %v3982 = vld [vmem:[%s713 + $0x700] sm:$0xff]
        %v3983 = vld [vmem:[%s713 + $0x708] sm:$0xff]
        %v3984 = vld [vmem:[%s713 + $0x710] sm:$0xff]
        %v3985 = vld [vmem:[%s713 + $0x718] sm:$0xff]
        %v3986 = vld [vmem:[%s713 + $0x720] sm:$0xff]
        %v3987 = vld [vmem:[%s713 + $0x728] sm:$0xff]
        %v3988 = vld [vmem:[%s713 + $0x730] sm:$0xff]
        %v3989 = vld [vmem:[%s713 + $0x738] sm:$0xff]
        %v3990 = vld [vmem:[%s713 + $0x740] sm:$0xff]
        %v3991 = vld [vmem:[%s713 + $0x748] sm:$0xff]
        %v3992 = vld [vmem:[%s713 + $0x750] sm:$0xff]
        %v3993 = vld [vmem:[%s713 + $0x758] sm:$0xff]
        %v3994 = vld [vmem:[%s713 + $0x760] sm:$0xff]
        %v3995 = vld [vmem:[%s713 + $0x768] sm:$0xff]
        %v3996 = vld [vmem:[%s713 + $0x770] sm:$0xff]
        %v3997 = vld [vmem:[%s713 + $0x778] sm:$0xff]
        %v3998 = vld [vmem:[%s713 + $0x780] sm:$0xff]
        %v3999 = vld [vmem:[%s713 + $0x788] sm:$0xff]
        %v4000 = vld [vmem:[%s713 + $0x790] sm:$0xff]
        %v4001 = vld [vmem:[%s713 + $0x798] sm:$0xff]
        %v4002 = vld [vmem:[%s713 + $0x7a0] sm:$0xff]
        %v4003 = vld [vmem:[%s713 + $0x7a8] sm:$0xff]
        %v4004 = vld [vmem:[%s713 + $0x7b0] sm:$0xff]
        %v4005 = vld [vmem:[%s713 + $0x7b8] sm:$0xff]
        %v4006 = vld [vmem:[%s713 + $0x7c0] sm:$0xff]
        %v4007 = vld [vmem:[%s713 + $0x7c8] sm:$0xff]
        %v4008 = vld [vmem:[%s713 + $0x7d0] sm:$0xff]
        %v4009 = vld [vmem:[%s713 + $0x7d8] sm:$0xff]
        %v4010 = vld [vmem:[%s713 + $0x7e0] sm:$0xff]
        %v4011 = vld [vmem:[%s713 + $0x7e8] sm:$0xff]
        %v4012 = vld [vmem:[%s713 + $0x7f0] sm:$0xff]
        %v4013 = vld [vmem:[%s713 + $0x7f8] sm:$0xff]
        %4014 = vmatprep.subr.mxu0 0.0
        %4015 = vmatpush1.msra.mxu0 %v3950
        %4016 = vmatprep.subr.mxu0 0.0
        %4017 = vmatpush1.msra.mxu0 %v3951
        %4018 = vmatprep.subr.mxu0 0.0
        %4019 = vmatpush1.msra.mxu0 %v3952
        %4020 = vmatprep.subr.mxu0 0.0
        %4021 = vmatpush1.msra.mxu0 %v3953
        %4022 = vmatprep.subr.mxu0 0.0
        %4023 = vmatpush1.msra.mxu0 %v3954
        %4024 = vmatprep.subr.mxu0 0.0
        %4025 = vmatpush1.msra.mxu0 %v3955
        %4026 = vmatprep.subr.mxu0 0.0
        %4027 = vmatpush1.msra.mxu0 %v3956
        %4028 = vmatprep.subr.mxu0 0.0
        %4029 = vmatpush1.msra.mxu0 %v3957
        %4030 = vmatprep.subr.mxu0 0.0
        %4031 = vmatpush1.msra.mxu0 %v3958
        %4032 = vmatprep.subr.mxu0 0.0
        %4033 = vmatpush1.msra.mxu0 %v3959
        %4034 = vmatprep.subr.mxu0 0.0
        %4035 = vmatpush1.msra.mxu0 %v3960
        %4036 = vmatprep.subr.mxu0 0.0
        %4037 = vmatpush1.msra.mxu0 %v3961
        %4038 = vmatprep.subr.mxu0 0.0
        %4039 = vmatpush1.msra.mxu0 %v3962
        %4040 = vmatprep.subr.mxu0 0.0
        %4041 = vmatpush1.msra.mxu0 %v3963
        %4042 = vmatprep.subr.mxu0 0.0
        %4043 = vmatpush1.msra.mxu0 %v3964
        %4044 = vmatprep.subr.mxu0 0.0
        %4045 = vmatpush1.msra.mxu0 %v3965
        %4046 = vmatprep.subr.mxu0 0.0
        %4047 = vmatpush1.msra.mxu0 %v3966
        %4048 = vmatprep.subr.mxu0 0.0
        %4049 = vmatpush1.msra.mxu0 %v3967
        %4050 = vmatprep.subr.mxu0 0.0
        %4051 = vmatpush1.msra.mxu0 %v3968
        %4052 = vmatprep.subr.mxu0 0.0
        %4053 = vmatpush1.msra.mxu0 %v3969
        %4054 = vmatprep.subr.mxu0 0.0
        %4055 = vmatpush1.msra.mxu0 %v3970
        %4056 = vmatprep.subr.mxu0 0.0
        %4057 = vmatpush1.msra.mxu0 %v3971
        %4058 = vmatprep.subr.mxu0 0.0
        %4059 = vmatpush1.msra.mxu0 %v3972
        %4060 = vmatprep.subr.mxu0 0.0
        %4061 = vmatpush1.msra.mxu0 %v3973
        %4062 = vmatprep.subr.mxu0 0.0
        %4063 = vmatpush1.msra.mxu0 %v3974
        %4064 = vmatprep.subr.mxu0 0.0
        %4065 = vmatpush1.msra.mxu0 %v3975
        %4066 = vmatprep.subr.mxu0 0.0
        %4067 = vmatpush1.msra.mxu0 %v3976
        %4068 = vmatprep.subr.mxu0 0.0
        %4069 = vmatpush1.msra.mxu0 %v3977
        %4070 = vmatprep.subr.mxu0 0.0
        %4071 = vmatpush1.msra.mxu0 %v3978
        %4072 = vmatprep.subr.mxu0 0.0
        %4073 = vmatpush1.msra.mxu0 %v3979
        %4074 = vmatprep.subr.mxu0 0.0
        %4075 = vmatpush1.msra.mxu0 %v3980
        %4076 = vmatprep.subr.mxu0 0.0
        %4077 = vmatpush1.msra.mxu0 %v3981
        %4078 = vmatprep.mubr.f32.mxu0 %v3943
        %4079 = vmatmul.mubr.f32.gmra.mrb[0].mxu0 %v3942
        %v4080 = vpop.f32.mrb[0].mxu0
        %v4081 = vadd.f32 0.0, %v4080
        %v4082 = vpop.f32.mrb[0].mxu0
        %4083 = vmatprep.mubr.f32.mxu0 %v3947
        %4084 = vmatmul.mubr.f32.gmra.mrb[0].mxu0 %v3946
        %v4085 = vpop.f32.mrb[0].mxu0
        %v4086 = vadd.f32 0.0, %v4085
        %v4087 = vpop.f32.mrb[0].mxu0
        %4088 = vdwg.mxu0
        %4089 = vmatprep.subr.mxu0 0.0
        %4090 = vmatpush1.msra.mxu0 %v3982
        %4091 = vmatprep.subr.mxu0 0.0
        %4092 = vmatpush1.msra.mxu0 %v3983
        %4093 = vmatprep.subr.mxu0 0.0
        %4094 = vmatpush1.msra.mxu0 %v3984
        %4095 = vmatprep.subr.mxu0 0.0
        %4096 = vmatpush1.msra.mxu0 %v3985
        %4097 = vmatprep.subr.mxu0 0.0
        %4098 = vmatpush1.msra.mxu0 %v3986
        %4099 = vmatprep.subr.mxu0 0.0
        %4100 = vmatpush1.msra.mxu0 %v3987
        %4101 = vmatprep.subr.mxu0 0.0
        %4102 = vmatpush1.msra.mxu0 %v3988
        %4103 = vmatprep.subr.mxu0 0.0
        %4104 = vmatpush1.msra.mxu0 %v3989
        %4105 = vmatprep.subr.mxu0 0.0
        %4106 = vmatpush1.msra.mxu0 %v3990
        %4107 = vmatprep.subr.mxu0 0.0
        %4108 = vmatpush1.msra.mxu0 %v3991
        %4109 = vmatprep.subr.mxu0 0.0
        %4110 = vmatpush1.msra.mxu0 %v3992
        %4111 = vmatprep.subr.mxu0 0.0
        %4112 = vmatpush1.msra.mxu0 %v3993
        %4113 = vmatprep.subr.mxu0 0.0
        %4114 = vmatpush1.msra.mxu0 %v3994
        %4115 = vmatprep.subr.mxu0 0.0
        %4116 = vmatpush1.msra.mxu0 %v3995
        %4117 = vmatprep.subr.mxu0 0.0
        %4118 = vmatpush1.msra.mxu0 %v3996
        %4119 = vmatprep.subr.mxu0 0.0
        %4120 = vmatpush1.msra.mxu0 %v3997
        %4121 = vmatprep.subr.mxu0 0.0
        %4122 = vmatpush1.msra.mxu0 %v3998
        %4123 = vmatprep.subr.mxu0 0.0
        %4124 = vmatpush1.msra.mxu0 %v3999
        %4125 = vmatprep.subr.mxu0 0.0
        %4126 = vmatpush1.msra.mxu0 %v4000
        %4127 = vmatprep.subr.mxu0 0.0
        %4128 = vmatpush1.msra.mxu0 %v4001
        %4129 = vmatprep.subr.mxu0 0.0
        %4130 = vmatpush1.msra.mxu0 %v4002
        %4131 = vmatprep.subr.mxu0 0.0
        %4132 = vmatpush1.msra.mxu0 %v4003
        %4133 = vmatprep.subr.mxu0 0.0
        %4134 = vmatpush1.msra.mxu0 %v4004
        %4135 = vmatprep.subr.mxu0 0.0
        %4136 = vmatpush1.msra.mxu0 %v4005
        %4137 = vmatprep.subr.mxu0 0.0
        %4138 = vmatpush1.msra.mxu0 %v4006
        %4139 = vmatprep.subr.mxu0 0.0
        %4140 = vmatpush1.msra.mxu0 %v4007
        %4141 = vmatprep.subr.mxu0 0.0
        %4142 = vmatpush1.msra.mxu0 %v4008
        %4143 = vmatprep.subr.mxu0 0.0
        %4144 = vmatpush1.msra.mxu0 %v4009
        %4145 = vmatprep.subr.mxu0 0.0
        %4146 = vmatpush1.msra.mxu0 %v4010
        %4147 = vmatprep.subr.mxu0 0.0
        %4148 = vmatpush1.msra.mxu0 %v4011
        %4149 = vmatprep.subr.mxu0 0.0
        %4150 = vmatpush1.msra.mxu0 %v4012
        %4151 = vmatprep.subr.mxu0 0.0
        %4152 = vmatpush1.msra.mxu0 %v4013
        %4153 = vmatprep.mubr.f32.mxu0 %v3945
        %4154 = vmatmul.mubr.f32.gmra.mrb[0].mxu0 %v3944
        %v4155 = vpop.f32.mrb[0].mxu0
        %v4156 = vadd.f32 %v4081, %v4155
        %v4157 = vpop.f32.mrb[0].mxu0
        %4158 = vmatprep.mubr.f32.mxu0 %v3949
        %4159 = vmatmul.mubr.f32.gmra.mrb[0].mxu0 %v3948
        %v4160 = vpop.f32.mrb[0].mxu0
        %v4161 = vadd.f32 %v4086, %v4160
        %v4162 = vpop.f32.mrb[0].mxu0
        %4163 = vdwg.mxu0
        %v4164 = vadd.f32 %v3748, %v4156
        %v4165 = vadd.f32 %v3749, %v4161
        %v4166 = vadd.f32 %v2440, %v4164
        %v4167 = vadd.f32 %v2441, %v4165
        %v4168 = vld [vmem:[%s716] sm:$0x1]
        %v4170 = vlaneseq
        %v4171 = vshrl.u32 %v4170, 7
        %v4172 = vsub.s32 0, %v4171
        %v4173 = vrot.slane %v4168, %v4172
        %v4175 = vadd.f32 %v4166, %v4173
        %v4176 = vadd.f32 %v4167, %v4173
        %4177 = vst.msk [vmem:[#allocation2] sm:$0xff] %vm845, %v4175
        %4178 = vst.msk [vmem:[#allocation2 + $0x8] sm:$0xff] %vm845, %v4176
        %p4179 = scmp.eq.s32.totalorder %s36, 1
        // Predicated region
        $region93: #{tpu_custom_call.1} parent=87 // pred_check
          %p4180 = pneg %p4179
        $region94: #{tpu_custom_call.1} parent=87 // pred_check_branch
          %4182 = sbr.rel (%p4180) target = $region96
        $region95: #{tpu_custom_call.1} parent=87 // pred_region
          %v4183 = vld [vmem:[%s16] sm:$0x1]
          %v4184 = vld [vmem:[%s17] sm:$0x1]
          %v4185 = vsel %vm845, %v4175, 0.0
          %4186 = vadd.xlane.f32.xlu0 %v4185
          %v4187 = vpop.xlane.xlu0 %4186
          %v4188 = vsel %vm845, %v4176, 0.0
          %4189 = vadd.xlane.f32.xlu0 %v4188
          %v4190 = vpop.xlane.xlu0 %4189
          %v4191 = vmul.f32 %v4187, %v852
          %v4192 = vmul.f32 %v4190, %v852
          %v4193 = vsub.f32 %v4175, %v4191
          %v4194 = vsub.f32 %v4176, %v4192
          %v4195 = vmul.f32 %v4193, %v4193
          %v4196 = vmul.f32 %v4194, %v4194
          %v4197 = vsel %vm845, %v4195, 0.0
          %4198 = vadd.xlane.f32.xlu0 %v4197
          %v4199 = vpop.xlane.xlu0 %4198
          %v4200 = vsel %vm845, %v4196, 0.0
          %4201 = vadd.xlane.f32.xlu0 %v4200
          %v4202 = vpop.xlane.xlu0 %4201
          %v4203 = vmul.f32 %v4199, 0.032258064
          %v4204 = vmul.f32 %v4202, 0.032258064
          %v4206 = vlaneseq
          %v4207 = vshrl.u32 %v4206, 7
          %v4208 = vsub.s32 0, %v4207
          %v4209 = vrot.slane %v4183, %v4208
          %v4211 = vmul.f32 %v4209, %v4193
          %v4212 = vmul.f32 %v4209, %v4194
          %v4213 = vrsqrt.pop %v4203
          %v4214 = vmul.f32 %v4203, %v4213
          %vm4215 = vcmp.eq.f32.partialorder %v4203, inf
          %v4216 = vsel %vm4215, %v4203, %v4214
          %vm4217 = vcmp.eq.f32.partialorder %v4203, 0.0
          %v4218 = vand.u32 %v4203, 2147483648
          %v4219 = vsel %vm4217, %v4218, %v4216
          %v4220 = vrsqrt.pop %v4204
          %v4221 = vmul.f32 %v4204, %v4220
          %vm4222 = vcmp.eq.f32.partialorder %v4204, inf
          %v4223 = vsel %vm4222, %v4204, %v4221
          %vm4224 = vcmp.eq.f32.partialorder %v4204, 0.0
          %v4225 = vand.u32 %v4204, 2147483648
          %v4226 = vsel %vm4224, %v4225, %v4223
          %v4227 = vadd.f32 %v4219, 1e-06
          %v4228 = vadd.f32 %v4226, 1e-06
          %v4229 = vrcp.pop %v4227
          %v4230 = vmul.f32 %v4211, %v4229
          %v4231 = vrcp.pop %v4228
          %v4232 = vmul.f32 %v4212, %v4231
          %v4234 = vlaneseq
          %v4235 = vshrl.u32 %v4234, 7
          %v4236 = vsub.s32 0, %v4235
          %v4237 = vrot.slane %v4184, %v4236
          %v4239 = vadd.f32 %v4230, %v4237
          %v4240 = vadd.f32 %v4232, %v4237
          %4241 = vst.msk [vmem:[#allocation6] sm:$0xff] %vm845, %v4239
          %4242 = vst.msk [vmem:[#allocation6 + $0x8] sm:$0xff] %vm845, %v4240
        $region96: #{tpu_custom_call.1} parent=87 // pred_fallthru
          _
        // Predicated region
        $region97: #{tpu_custom_call.1} parent=87 // pred_check
          %p4243 = pneg %p466
        $region98: #{tpu_custom_call.1} parent=87 // pred_check_branch
          %4245 = sbr.rel (%p4243) target = $region100
        $region99: #{tpu_custom_call.1} parent=87 // pred_region
          %s4247 = ssub.s32 256, 256
          %4248 = vsyncadd [#allocation7], %s4247
          %s4249 = sshll.u32 [#allocation6], 4
          %s4250 = int_to_ptr.vmem [resolvable:$true] %s4249
          %4255 = dma.vmem_to_hbm [thread:$0]  %s4250, 256, %s18, [#allocation7], 128, 128, 8
        $region100: #{tpu_custom_call.1} parent=87 // pred_fallthru
          _
        // Predicated region
        $region101: #{tpu_custom_call.1} parent=87 // pred_check
          %p4256 = pneg %p466
        $region102: #{tpu_custom_call.1} parent=87 // pred_check_branch
          %4258 = sbr.rel (%p4256) target = $region104
        $region103: #{tpu_custom_call.1} parent=87 // pred_region
          %4259 = dma.done [#allocation7], 256
        $region104: #{tpu_custom_call.1} parent=87 // pred_fallthru
          _
      $region88: #{tpu_custom_call.1} parent=5 // pred_fallthru
        _
      %p4260 = scmp.le.s32.totalorder 2, %s31
      // Predicated region
      $region105: #{tpu_custom_call.1} parent=5 // pred_check
        %p4261 = pneg %p4260
      $region106: #{tpu_custom_call.1} parent=5 // pred_check_branch
        %4263 = sbr.rel (%p4261) target = $region108
      $region107: #{tpu_custom_call.1} parent=5 // pred_region
        %s4264 = ssub.s32 %s31, 2
      $region108: #{tpu_custom_call.1} parent=5 // pred_fallthru
        _
    $region6: #{tpu_custom_call.1} parent=1 // loop_footer
      %s35 = sadd.s32 1, %s31
    $region7: #{tpu_custom_call.1} parent=1 // loop_footer_branch
      %30 = sbr.rel target = $region3
    $region8: #{tpu_custom_call.1} parent=1 // loop_exit
      _
    %4265 = vsyncpa [#allocation7], 1
    %s4266 = scalar_lea.sflag [#allocation7], 1
    %4267 = vsyncpa %s4266, 1

</llo_original>
